<compile_context>
chip_gen: v6e
topology: v6e:2x2x1
jax: 0.10.0
libtpu: 0.0.40
codegen_flags: <defaults>
</compile_context>

<pallas_src>
import jax
import jax.numpy as jnp
from jax.experimental import pallas as pl
from jax.experimental.pallas import tpu as pltpu

NUM_CLASSES = 3
NUM_ANCHORS = 4
FEAT_W = 8          # feature-map width the dw weights are pre-replicated for (sublane width)


# ----------------------------------------------------------------------------
# Fused Pallas kernel: encoder stem + BottleneckLSTM + SSD heads
# ----------------------------------------------------------------------------
def _mobile_vod_kernel(
    patches_ref, hid_ref, cell_ref,
    conv1_w_ref, conv1_b_ref,
    dw1_w_ref, dw1_b_ref,
    pw1_w_ref, pw1_b_ref,
    lstm_W_w_ref, lstm_W_b_ref,
    wy_x_ref, wy_h_ref, wy_b_ref,
    wi_w_ref,
    wb_ref,
    head_dw_w_ref, head_dw_b_ref,
    head_pw_w_ref, head_pw_b_ref,
    heads_ref, hout_ref, cout_ref,
    pad_ref,
):
    B, HP, W, CMAX = pad_ref.shape
    H = HP - 2
    M = B * H * W

    # Zero only the two H-halo rows once; they are never written again, so they stay zero for
    # every depthwise conv below.  NOTE (documented fragility): interior channels above the
    # width C of the most recent dw_store hold stale data; every dw_compute below only reads
    # the channel range it just stored, so this is safe — do not read beyond that range.
    zero_row = jnp.zeros((B, 1, W, CMAX), jnp.float32)
    pad_ref[:, 0:1, :, :] = zero_row
    pad_ref[:, HP - 1:HP, :, :] = zero_row

    def matmul(x, w_ref, b_ref=None, relu=False):
        y = jnp.dot(x, w_ref[...], preferred_element_type=jnp.float32)
        if b_ref is not None:
            y = y + b_ref[...]
        if relu:
            y = jnp.maximum(y, 0.0)
        return y

    def dw_store(act4d, c_off):
        # Sublane-aligned interior store (rows 1..H, full W, channel range c_off:c_off+C).
        C = act4d.shape[-1]
        pad_ref[:, 1:1 + H, :, c_off:c_off + C] = act4d

    def dw_compute(C, w_ref, b_ref=None, relu=False):
        # 3x3 depthwise, stride 1, zero padding; reads channels 0:C of the shared scratch.
        # Per dy: one aligned band read; dx taps via sublane roll (XLU) + halo mask.
        col = jax.lax.broadcasted_iota(jnp.int32, (1, 1, W, C), 2)
        mask_l = col > 0          # zeroes the wrapped column of the dx=0 tap (left halo)
        mask_r = col < W - 1      # zeroes the wrapped column of the dx=2 tap (right halo)
        if b_ref is not None:
            acc = b_ref[...].reshape(1, 1, W, C)      # pre-replicated bias seeds the accumulator
        else:
            acc = jnp.zeros((1, 1, W, C), jnp.float32)
        for dy in range(3):
            band = pad_ref[:, dy:dy + H, :, 0:C]      # [B, H, W, C], sublane offset 0
            for dx in range(3):
                k = dy * 3 + dx
                wk = w_ref[k].reshape(1, 1, W, C)     # pre-replicated tap weight, no broadcast op
                if dx == 1:
                    tap = band
                else:
                    tap = pltpu.roll(band, shift=(1 - dx) % W, axis=2)
                    tap = jnp.where(mask_l if dx == 0 else mask_r, tap, 0.0)
                acc = acc + tap * wk
        out = acc
        if relu:
            out = jnp.maximum(out, 0.0)
        return out

    def depthwise3x3(act2d, w_ref, b_ref=None, relu=False):
        C = act2d.shape[-1]
        dw_store(act2d.reshape(B, H, W, C), 0)
        return dw_compute(C, w_ref, b_ref, relu).reshape(M, C)

    # ---- pred_encoder: MobileNetV1-style stem (conv_bn + one dw-separable block) ----
    feat = matmul(patches_ref[...], conv1_w_ref, conv1_b_ref, relu=True)       # [M, 16]
    feat = depthwise3x3(feat, dw1_w_ref, dw1_b_ref, relu=True)                 # [M, 16]
    feat = matmul(feat, pw1_w_ref, pw1_b_ref, relu=True)                       # [M, 32]

    # ---- pred_decoder: BottleneckLSTM cell ----
    ch = hid_ref.shape[-1]
    h_prev = hid_ref[...].reshape(M, ch)                                       # [M, 16]
    c_prev = cell_ref[...].reshape(M, ch)                                      # [M, 16]

    xw = depthwise3x3(feat, lstm_W_w_ref, lstm_W_b_ref, relu=False)            # [M, 32]
    # bottleneck 1x1 on cat(xw, h): weight pre-split so no in-kernel lane concat is needed
    bott = (jnp.dot(xw, wy_x_ref[...], preferred_element_type=jnp.float32)
            + jnp.dot(h_prev, wy_h_ref[...], preferred_element_type=jnp.float32)
            + wy_b_ref[...])                                                   # [M, 16]
    bgate = depthwise3x3(bott, wi_w_ref, None, relu=False)                     # [M, 16]

    # one fused [16, 64] gate matmul, columns ordered [i|f|o|c] in prepare_params
    gates = jnp.dot(bgate, wb_ref[...], preferred_element_type=jnp.float32)    # [M, 64]
    s_ifo = jax.nn.sigmoid(gates[:, 0:3 * ch])                                 # one 48-lane sigmoid
    g_c = jnp.maximum(gates[:, 3 * ch:4 * ch], 0.0)                            # one 16-lane ReLU
    ci = s_ifo[:, 0:ch]
    cf = s_ifo[:, ch:2 * ch]
    co = s_ifo[:, 2 * ch:3 * ch]
    c_new = cf * c_prev + ci * g_c                     # BottleneckLSTM uses ReLU, not tanh
    h_new = co * jnp.maximum(c_new, 0.0)               # [M, 16]

    # ---- pred_decoder: SSD separable headers (cls + reg fused on the channel axis) ----
    # No value-level concat: write h_new into the scratch twice (channels 0:16 and 16:32).
    h4d = h_new.reshape(B, H, W, ch)
    dw_store(h4d, 0)
    dw_store(h4d, ch)
    head_ft = dw_compute(2 * ch, head_dw_w_ref, head_dw_b_ref, relu=True).reshape(M, 2 * ch)
    heads_ref[...] = matmul(head_ft, head_pw_w_ref, head_pw_b_ref)             # [M, 128] lane-dense

    hout_ref[...] = h4d
    cout_ref[...] = c_new.reshape(B, H, W, ch)


# ----------------------------------------------------------------------------
# Wrapper glue (one tiny XLA prologue for im2col, one pallas_call, cheap splits)
# ----------------------------------------------------------------------------
def im2col_3x3_s2(x):
    """3x3 / stride 2 / pad 1 patch extraction: [B,H,W,C] -> [B,H/2,W/2,9*C]."""
    B, H, W, C = x.shape
    Ho, Wo = H // 2, W // 2
    xp = jnp.pad(x, ((0, 0), (1, 1), (1, 1), (0, 0)))
    cols = [xp[:, dy:dy + 2 * Ho:2, dx:dx + 2 * Wo:2, :]
            for dy in range(3) for dx in range(3)]
    return jnp.concatenate(cols, axis=-1)


def mobile_vod_forward(fused_params, x, hidden, cell):
    p = fused_params
    B, Hf, Wf, _ = hidden.shape
    assert Wf == FEAT_W, "dw weights were pre-replicated for feature width FEAT_W"
    M = B * Hf * Wf

    # TODO(synk): the stride-2 im2col for the stem conv stays in XLA (a single tiny fused
    # prologue on the ~3KB input); everything downstream runs inside one fused kernel.
    patches = im2col_3x3_s2(x).reshape(M, -1)                                  # [128, 27]

    cmax = max(p['dw1_w'].shape[-1], p['lstm_W_w'].shape[-1],
               p['wi_w'].shape[-1], p['head_dw_w'].shape[-1])
    n_lane = p['head_pw_w'].shape[-1]                                          # 128 (lane-dense)

    # NOTE: grid-less single-core call; at B=2 / M=128 the per-core step overhead outweighs any
    # megacore split (v7x), so no parallel grid axis is added at this size.
    heads, h_new, c_new = pl.pallas_call(
        _mobile_vod_kernel,
        out_shape=(
            jax.ShapeDtypeStruct((M, n_lane), jnp.float32),
            jax.ShapeDtypeStruct(hidden.shape, jnp.float32),
            jax.ShapeDtypeStruct(cell.shape, jnp.float32),
        ),
        scratch_shapes=[pltpu.VMEM((B, Hf + 2, Wf, cmax), jnp.float32)],
        input_output_aliases={1: 1, 2: 2},   # hidden -> h_new, cell -> c_new (in-place step)
    )(patches, hidden, cell,
      p['conv1_w'], p['conv1_b'],
      p['dw1_w'], p['dw1_b'],
      p['pw1_w'], p['pw1_b'],
      p['lstm_W_w'], p['lstm_W_b'],
      p['wy_x'], p['wy_h'], p['wy_b'],
      p['wi_w'],
      p['wb'],
      p['head_dw_w'], p['head_dw_b'],
      p['head_pw_w'], p['head_pw_b'])

    n_cls = NUM_ANCHORS * NUM_CLASSES
    n_head = n_cls + NUM_ANCHORS * 4
    heads3 = heads[:, :n_head].reshape(B, Hf * Wf, n_head)
    confidences = heads3[:, :, :n_cls].reshape(B, -1, NUM_CLASSES)             # [B, 256, 3]
    locations = heads3[:, :, n_cls:].reshape(B, -1, 4)                         # [B, 256, 4]
    return confidences, locations, h_new, c_new


# ----------------------------------------------------------------------------
# Parameters: deterministic init (raw layout) + one-time repack for the fused kernel
# ----------------------------------------------------------------------------
def init_params(key):
    def nrm(k, shape, scale=0.1):
        return scale * jax.random.normal(k, shape, jnp.float32)

    ks = jax.random.split(key, 20)
    p = {}
    p['conv1_w'] = nrm(ks[0], (27, 16))          # im2col-folded [3,3,3,16]
    p['conv1_b'] = nrm(ks[1], (16,))
    p['dw1_w'] = nrm(ks[2], (3, 3, 16))
    p['dw1_b'] = nrm(ks[3], (16,))
    p['pw1_w'] = nrm(ks[4], (16, 32))
    p['pw1_b'] = nrm(ks[5], (32,))
    p['lstm_W_w'] = nrm(ks[6], (3, 3, 32))       # depthwise on encoder features
    p['lstm_W_b'] = nrm(ks[7], (32,))
    p['lstm_Wy_w'] = nrm(ks[8], (48, 16))        # bottleneck 1x1 on cat(x, h)
    p['lstm_Wy_b'] = nrm(ks[9], (16,))
    p['lstm_Wi_w'] = nrm(ks[10], (3, 3, 16))     # depthwise, no bias
    p['lstm_Wb_w'] = nrm(ks[11], (16, 64))       # fused Wbi|Wbf|Wbc|Wbo, no bias
    p['cls_dw_w'] = nrm(ks[12], (3, 3, 16))
    p['cls_dw_b'] = nrm(ks[13], (16,))
    p['cls_pw_w'] = nrm(ks[14], (16, NUM_ANCHORS * NUM_CLASSES))
    p['cls_pw_b'] = nrm(ks[15], (NUM_ANCHORS * NUM_CLASSES,))
    p['reg_dw_w'] = nrm(ks[16], (3, 3, 16))
    p['reg_dw_b'] = nrm(ks[17], (16,))
    p['reg_pw_w'] = nrm(ks[18], (16, NUM_ANCHORS * 4))
    p['reg_pw_b'] = nrm(ks[19], (NUM_ANCHORS * 4,))
    return p


def _tile_dw_w(w33c, feat_w):
    """[3,3,C] -> [9, feat_w, C]: tap-major, pre-replicated across the sublane (W) axis."""
    C = w33c.shape[-1]
    return jnp.tile(w33c.reshape(9, 1, C), (1, feat_w, 1))


def _tile_dw_b(b, feat_w):
    """[C] -> [feat_w, C]: pre-replicated bias row."""
    return jnp.tile(b.reshape(1, -1), (feat_w, 1))


def prepare_params(p, feat_w=FEAT_W):
    """Repack raw parameters into the fused-kernel layout (done once, outside jit)."""
    fp = {}
    fp['conv1_w'] = p['conv1_w']
    fp['conv1_b'] = p['conv1_b'].reshape(1, -1)
    fp['dw1_w'] = _tile_dw_w(p['dw1_w'], feat_w)
    fp['dw1_b'] = _tile_dw_b(p['dw1_b'], feat_w)
    fp['pw1_w'] = p['pw1_w']
    fp['pw1_b'] = p['pw1_b'].reshape(1, -1)
    c_enc = p['lstm_W_w'].shape[-1]
    fp['lstm_W_w'] = _tile_dw_w(p['lstm_W_w'], feat_w)
    fp['lstm_W_b'] = _tile_dw_b(p['lstm_W_b'], feat_w)
    # split the bottleneck weight so cat(xw, h) @ Wy == xw @ Wy_x + h @ Wy_h
    fp['wy_x'] = p['lstm_Wy_w'][:c_enc]
    fp['wy_h'] = p['lstm_Wy_w'][c_enc:]
    fp['wy_b'] = p['lstm_Wy_b'].reshape(1, -1)
    fp['wi_w'] = _tile_dw_w(p['lstm_Wi_w'], feat_w)
    # single fused gate weight, columns reordered from [i|f|c|o] to [i|f|o|c] so the kernel can
    # apply one wide sigmoid (0:48) and one ReLU (48:64)
    wb = p['lstm_Wb_w']
    ch = wb.shape[1] // 4
    fp['wb'] = jnp.concatenate(
        [wb[:, 0:ch], wb[:, ch:2 * ch], wb[:, 3 * ch:4 * ch], wb[:, 2 * ch:3 * ch]], axis=1)
    # cls + reg heads fused on the channel axis: shared depthwise, block-diagonal pointwise
    fp['head_dw_w'] = _tile_dw_w(
        jnp.concatenate([p['cls_dw_w'], p['reg_dw_w']], axis=-1), feat_w)
    fp['head_dw_b'] = _tile_dw_b(
        jnp.concatenate([p['cls_dw_b'], p['reg_dw_b']]), feat_w)
    ch16 = p['cls_pw_w'].shape[0]
    n_cls = p['cls_pw_w'].shape[1]
    n_reg = p['reg_pw_w'].shape[1]
    # lane-dense (128-wide) block-diagonal pointwise head weight; wrapper slices [:, :28]
    w_head = jnp.zeros((2 * ch16, 128), jnp.float32)
    w_head = w_head.at[:ch16, :n_cls].set(p['cls_pw_w'])
    w_head = w_head.at[ch16:, n_cls:n_cls + n_reg].set(p['reg_pw_w'])
    fp['head_pw_w'] = w_head
    b_head = jnp.zeros((1, 128), jnp.float32)
    b_head = b_head.at[0, :n_cls + n_reg].set(
        jnp.concatenate([p['cls_pw_b'], p['reg_pw_b']]))
    fp['head_pw_b'] = b_head
    return fp


if __name__ == "__main__":
    key = jax.random.PRNGKey(0)
    kx, kh, kc, kp = jax.random.split(key, 4)
    # MobileVOD inputs are NHWC (the PyTorch wrapper permutes them to NCHW internally).
    x = jax.random.normal(kx, (2, 16, 16, 3), jnp.float32)
    hidden = jax.random.normal(kh, (2, 8, 8, 16), jnp.float32)
    cell = jax.random.normal(kc, (2, 8, 8, 16), jnp.float32)

    params = init_params(kp)
    fused_params = prepare_params(params)        # one-time weight repack, outside jit

    fwd = jax.jit(mobile_vod_forward)
    conf, loc, h_out, c_out = fwd(fused_params, x, hidden, cell)
    jax.block_until_ready((conf, loc, h_out, c_out))

    assert conf.shape == (2, 8 * 8 * NUM_ANCHORS, NUM_CLASSES)
    assert loc.shape == (2, 8 * 8 * NUM_ANCHORS, 4)
    assert h_out.shape == (2, 8, 8, 16) and c_out.shape == (2, 8, 8, 16)
    assert bool(jnp.all(jnp.isfinite(conf))) and bool(jnp.all(jnp.isfinite(loc)))
    assert bool(jnp.all(jnp.isfinite(h_out))) and bool(jnp.all(jnp.isfinite(c_out)))
    print("KERNEL_OK")
</pallas_src>

<mosaic_0001>
module attributes {stable_mosaic.version = 11 : i64} {
  func.func @_mobile_vod_kernel(%arg0: memref<128x27xf32, #tpu.memory_space<vmem>>, %arg1: memref<2x8x8x16xf32, #tpu.memory_space<vmem>>, %arg2: memref<2x8x8x16xf32, #tpu.memory_space<vmem>>, %arg3: memref<27x16xf32, #tpu.memory_space<vmem>>, %arg4: memref<1x16xf32, #tpu.memory_space<vmem>>, %arg5: memref<9x8x16xf32, #tpu.memory_space<vmem>>, %arg6: memref<8x16xf32, #tpu.memory_space<vmem>>, %arg7: memref<16x32xf32, #tpu.memory_space<vmem>>, %arg8: memref<1x32xf32, #tpu.memory_space<vmem>>, %arg9: memref<9x8x32xf32, #tpu.memory_space<vmem>>, %arg10: memref<8x32xf32, #tpu.memory_space<vmem>>, %arg11: memref<32x16xf32, #tpu.memory_space<vmem>>, %arg12: memref<16x16xf32, #tpu.memory_space<vmem>>, %arg13: memref<1x16xf32, #tpu.memory_space<vmem>>, %arg14: memref<9x8x16xf32, #tpu.memory_space<vmem>>, %arg15: memref<16x64xf32, #tpu.memory_space<vmem>>, %arg16: memref<9x8x32xf32, #tpu.memory_space<vmem>>, %arg17: memref<8x32xf32, #tpu.memory_space<vmem>>, %arg18: memref<32x128xf32, #tpu.memory_space<vmem>>, %arg19: memref<1x128xf32, #tpu.memory_space<vmem>>, %arg20: memref<128x128xf32, #tpu.memory_space<vmem>>, %arg21: memref<2x8x8x16xf32, #tpu.memory_space<vmem>>, %arg22: memref<2x8x8x16xf32, #tpu.memory_space<vmem>>, %arg23: memref<2x10x8x32xf32, #tpu.memory_space<vmem>>) attributes {dimension_semantics = [], scalar_prefetch = 0 : i64, scratch_operands = 1 : i64, tpu.core_type = #tpu.core_type<tc>} {
    %cst = arith.constant 0.000000e+00 : f32
    %0 = vector.broadcast %cst : f32 to vector<2x1x8x32xf32>
    %c0 = arith.constant 0 : index
    %c0_0 = arith.constant 0 : index
    %c0_1 = arith.constant 0 : index
    %c0_2 = arith.constant 0 : index
    %1 = vector.load %arg23[%c0, %c0_0, %c0_1, %c0_2] : memref<2x10x8x32xf32, #tpu.memory_space<vmem>>, vector<2x1x8x32xf32>
    tpu.vector_store %arg23[%c0, %c0_0, %c0_1, %c0_2], %0 {strides = array<i32>} : memref<2x10x8x32xf32, #tpu.memory_space<vmem>>, vector<2x1x8x32xf32>,
    %c0_3 = arith.constant 0 : index
    %c9 = arith.constant 9 : index
    %c0_4 = arith.constant 0 : index
    %c0_5 = arith.constant 0 : index
    %2 = vector.load %arg23[%c0_3, %c9, %c0_4, %c0_5] : memref<2x10x8x32xf32, #tpu.memory_space<vmem>>, vector<2x1x8x32xf32>
    tpu.vector_store %arg23[%c0_3, %c9, %c0_4, %c0_5], %0 {strides = array<i32>} : memref<2x10x8x32xf32, #tpu.memory_space<vmem>>, vector<2x1x8x32xf32>,
    %c0_6 = arith.constant 0 : index
    %c0_7 = arith.constant 0 : index
    %3 = vector.load %arg0[%c0_6, %c0_7] : memref<128x27xf32, #tpu.memory_space<vmem>>, vector<128x27xf32>
    %c0_8 = arith.constant 0 : index
    %c0_9 = arith.constant 0 : index
    %4 = vector.load %arg3[%c0_8, %c0_9] : memref<27x16xf32, #tpu.memory_space<vmem>>, vector<27x16xf32>
    %cst_10 = arith.constant dense<0.000000e+00> : vector<128x16xf32>
    %5 = tpu.matmul %3, %4, %cst_10 {dimension_numbers = #tpu.dot_dimension_numbers<[1], [0], [0], [1], [0, 0, 1, 1], [], []>} : vector<128x27xf32>, vector<27x16xf32>, vector<128x16xf32> -> vector<128x16xf32>
    %c0_11 = arith.constant 0 : index
    %c0_12 = arith.constant 0 : index
    %6 = vector.load %arg4[%c0_11, %c0_12] : memref<1x16xf32, #tpu.memory_space<vmem>>, vector<1x16xf32>
    %7 = vector.broadcast %6 : vector<1x16xf32> to vector<128x16xf32>
    %8 = arith.addf %5, %7 : vector<128x16xf32>
    %cst_13 = arith.constant 0.000000e+00 : f32
    %9 = vector.broadcast %cst_13 : f32 to vector<128x16xf32>
    %10 = arith.maximumf %8, %9 : vector<128x16xf32>
    %11 = vector.shape_cast %10 : vector<128x16xf32> to vector<2x8x8x16xf32>
    %c0_14 = arith.constant 0 : index
    %c1 = arith.constant 1 : index
    %c0_15 = arith.constant 0 : index
    %c0_16 = arith.constant 0 : index
    %12 = vector.load %arg23[%c0_14, %c1, %c0_15, %c0_16] : memref<2x10x8x32xf32, #tpu.memory_space<vmem>>, vector<2x8x8x16xf32>
    tpu.vector_store %arg23[%c0_14, %c1, %c0_15, %c0_16], %11 {strides = array<i32>} : memref<2x10x8x32xf32, #tpu.memory_space<vmem>>, vector<2x8x8x16xf32>,
    %13 = tpu.iota {dimensions = array<i32: 2>} : vector<1x1x8x16xi32>
    %c0_i32 = arith.constant 0 : i32
    %14 = vector.broadcast %c0_i32 : i32 to vector<1x1x8x16xi32>
    %15 = arith.cmpi sgt, %13, %14 : vector<1x1x8x16xi32>
    %c7_i32 = arith.constant 7 : i32
    %16 = vector.broadcast %c7_i32 : i32 to vector<1x1x8x16xi32>
    %17 = arith.cmpi slt, %13, %16 : vector<1x1x8x16xi32>
    %c0_17 = arith.constant 0 : index
    %c0_18 = arith.constant 0 : index
    %18 = vector.load %arg6[%c0_17, %c0_18] : memref<8x16xf32, #tpu.memory_space<vmem>>, vector<8x16xf32>
    %19 = vector.shape_cast %18 : vector<8x16xf32> to vector<1x1x8x16xf32>
    %c0_19 = arith.constant 0 : index
    %c0_20 = arith.constant 0 : index
    %c0_21 = arith.constant 0 : index
    %c0_22 = arith.constant 0 : index
    %20 = vector.load %arg23[%c0_19, %c0_20, %c0_21, %c0_22] : memref<2x10x8x32xf32, #tpu.memory_space<vmem>>, vector<2x8x8x16xf32>
    %c0_23 = arith.constant 0 : index
    %c0_24 = arith.constant 0 : index
    %c0_25 = arith.constant 0 : index
    %21 = vector.load %arg5[%c0_23, %c0_24, %c0_25] : memref<9x8x16xf32, #tpu.memory_space<vmem>>, vector<1x8x16xf32>
    %22 = vector.shape_cast %21 : vector<1x8x16xf32> to vector<8x16xf32>
    %23 = vector.shape_cast %22 : vector<8x16xf32> to vector<1x1x8x16xf32>
    %c1_i32 = arith.constant 1 : i32
    %24 = tpu.dynamic_rotate %20 by %c1_i32 dim 2 : vector<2x8x8x16xf32>, i32 -> vector<2x8x8x16xf32>
    %cst_26 = arith.constant 0.000000e+00 : f32
    %25 = vector.shape_cast %15 : vector<1x1x8x16xi1> to vector<1x1x8x16xi1>
    %26 = vector.broadcast %25 : vector<1x1x8x16xi1> to vector<2x8x8x16xi1>
    %27 = vector.broadcast %cst_26 : f32 to vector<2x8x8x16xf32>
    %28 = arith.select %26, %24, %27 : vector<2x8x8x16xi1>, vector<2x8x8x16xf32>
    %29 = vector.broadcast %23 : vector<1x1x8x16xf32> to vector<2x8x8x16xf32>
    %30 = arith.mulf %28, %29 : vector<2x8x8x16xf32>
    %31 = vector.broadcast %19 : vector<1x1x8x16xf32> to vector<2x8x8x16xf32>
    %32 = arith.addf %31, %30 : vector<2x8x8x16xf32>
    %c1_27 = arith.constant 1 : index
    %c0_28 = arith.constant 0 : index
    %c0_29 = arith.constant 0 : index
    %33 = vector.load %arg5[%c1_27, %c0_28, %c0_29] : memref<9x8x16xf32, #tpu.memory_space<vmem>>, vector<1x8x16xf32>
    %34 = vector.shape_cast %33 : vector<1x8x16xf32> to vector<8x16xf32>
    %35 = vector.shape_cast %34 : vector<8x16xf32> to vector<1x1x8x16xf32>
    %36 = vector.broadcast %35 : vector<1x1x8x16xf32> to vector<2x8x8x16xf32>
    %37 = arith.mulf %20, %36 : vector<2x8x8x16xf32>
    %38 = arith.addf %32, %37 : vector<2x8x8x16xf32>
    %c2 = arith.constant 2 : index
    %c0_30 = arith.constant 0 : index
    %c0_31 = arith.constant 0 : index
    %39 = vector.load %arg5[%c2, %c0_30, %c0_31] : memref<9x8x16xf32, #tpu.memory_space<vmem>>, vector<1x8x16xf32>
    %40 = vector.shape_cast %39 : vector<1x8x16xf32> to vector<8x16xf32>
    %41 = vector.shape_cast %40 : vector<8x16xf32> to vector<1x1x8x16xf32>
    %c7_i32_32 = arith.constant 7 : i32
    %42 = tpu.dynamic_rotate %20 by %c7_i32_32 dim 2 : vector<2x8x8x16xf32>, i32 -> vector<2x8x8x16xf32>
    %cst_33 = arith.constant 0.000000e+00 : f32
    %43 = vector.shape_cast %17 : vector<1x1x8x16xi1> to vector<1x1x8x16xi1>
    %44 = vector.broadcast %43 : vector<1x1x8x16xi1> to vector<2x8x8x16xi1>
    %45 = vector.broadcast %cst_33 : f32 to vector<2x8x8x16xf32>
    %46 = arith.select %44, %42, %45 : vector<2x8x8x16xi1>, vector<2x8x8x16xf32>
    %47 = vector.broadcast %41 : vector<1x1x8x16xf32> to vector<2x8x8x16xf32>
    %48 = arith.mulf %46, %47 : vector<2x8x8x16xf32>
    %49 = arith.addf %38, %48 : vector<2x8x8x16xf32>
    %c0_34 = arith.constant 0 : index
    %c1_35 = arith.constant 1 : index
    %c0_36 = arith.constant 0 : index
    %c0_37 = arith.constant 0 : index
    %50 = vector.load %arg23[%c0_34, %c1_35, %c0_36, %c0_37] : memref<2x10x8x32xf32, #tpu.memory_space<vmem>>, vector<2x8x8x16xf32>
    %c3 = arith.constant 3 : index
    %c0_38 = arith.constant 0 : index
    %c0_39 = arith.constant 0 : index
    %51 = vector.load %arg5[%c3, %c0_38, %c0_39] : memref<9x8x16xf32, #tpu.memory_space<vmem>>, vector<1x8x16xf32>
    %52 = vector.shape_cast %51 : vector<1x8x16xf32> to vector<8x16xf32>
    %53 = vector.shape_cast %52 : vector<8x16xf32> to vector<1x1x8x16xf32>
    %c1_i32_40 = arith.constant 1 : i32
    %54 = tpu.dynamic_rotate %50 by %c1_i32_40 dim 2 : vector<2x8x8x16xf32>, i32 -> vector<2x8x8x16xf32>
    %cst_41 = arith.constant 0.000000e+00 : f32
    %55 = vector.shape_cast %15 : vector<1x1x8x16xi1> to vector<1x1x8x16xi1>
    %56 = vector.broadcast %55 : vector<1x1x8x16xi1> to vector<2x8x8x16xi1>
    %57 = vector.broadcast %cst_41 : f32 to vector<2x8x8x16xf32>
    %58 = arith.select %56, %54, %57 : vector<2x8x8x16xi1>, vector<2x8x8x16xf32>
    %59 = vector.broadcast %53 : vector<1x1x8x16xf32> to vector<2x8x8x16xf32>
    %60 = arith.mulf %58, %59 : vector<2x8x8x16xf32>
    %61 = arith.addf %49, %60 : vector<2x8x8x16xf32>
    %c4 = arith.constant 4 : index
    %c0_42 = arith.constant 0 : index
    %c0_43 = arith.constant 0 : index
    %62 = vector.load %arg5[%c4, %c0_42, %c0_43] : memref<9x8x16xf32, #tpu.memory_space<vmem>>, vector<1x8x16xf32>
    %63 = vector.shape_cast %62 : vector<1x8x16xf32> to vector<8x16xf32>
    %64 = vector.shape_cast %63 : vector<8x16xf32> to vector<1x1x8x16xf32>
    %65 = vector.broadcast %64 : vector<1x1x8x16xf32> to vector<2x8x8x16xf32>
    %66 = arith.mulf %50, %65 : vector<2x8x8x16xf32>
    %67 = arith.addf %61, %66 : vector<2x8x8x16xf32>
    %c5 = arith.constant 5 : index
    %c0_44 = arith.constant 0 : index
    %c0_45 = arith.constant 0 : index
    %68 = vector.load %arg5[%c5, %c0_44, %c0_45] : memref<9x8x16xf32, #tpu.memory_space<vmem>>, vector<1x8x16xf32>
    %69 = vector.shape_cast %68 : vector<1x8x16xf32> to vector<8x16xf32>
    %70 = vector.shape_cast %69 : vector<8x16xf32> to vector<1x1x8x16xf32>
    %c7_i32_46 = arith.constant 7 : i32
    %71 = tpu.dynamic_rotate %50 by %c7_i32_46 dim 2 : vector<2x8x8x16xf32>, i32 -> vector<2x8x8x16xf32>
    %cst_47 = arith.constant 0.000000e+00 : f32
    %72 = vector.shape_cast %17 : vector<1x1x8x16xi1> to vector<1x1x8x16xi1>
    %73 = vector.broadcast %72 : vector<1x1x8x16xi1> to vector<2x8x8x16xi1>
    %74 = vector.broadcast %cst_47 : f32 to vector<2x8x8x16xf32>
    %75 = arith.select %73, %71, %74 : vector<2x8x8x16xi1>, vector<2x8x8x16xf32>
    %76 = vector.broadcast %70 : vector<1x1x8x16xf32> to vector<2x8x8x16xf32>
    %77 = arith.mulf %75, %76 : vector<2x8x8x16xf32>
    %78 = arith.addf %67, %77 : vector<2x8x8x16xf32>
    %c0_48 = arith.constant 0 : index
    %c2_49 = arith.constant 2 : index
    %c0_50 = arith.constant 0 : index
    %c0_51 = arith.constant 0 : index
    %79 = vector.load %arg23[%c0_48, %c2_49, %c0_50, %c0_51] : memref<2x10x8x32xf32, #tpu.memory_space<vmem>>, vector<2x8x8x16xf32>
    %c6 = arith.constant 6 : index
    %c0_52 = arith.constant 0 : index
    %c0_53 = arith.constant 0 : index
    %80 = vector.load %arg5[%c6, %c0_52, %c0_53] : memref<9x8x16xf32, #tpu.memory_space<vmem>>, vector<1x8x16xf32>
    %81 = vector.shape_cast %80 : vector<1x8x16xf32> to vector<8x16xf32>
    %82 = vector.shape_cast %81 : vector<8x16xf32> to vector<1x1x8x16xf32>
    %c1_i32_54 = arith.constant 1 : i32
    %83 = tpu.dynamic_rotate %79 by %c1_i32_54 dim 2 : vector<2x8x8x16xf32>, i32 -> vector<2x8x8x16xf32>
    %cst_55 = arith.constant 0.000000e+00 : f32
    %84 = vector.shape_cast %15 : vector<1x1x8x16xi1> to vector<1x1x8x16xi1>
    %85 = vector.broadcast %84 : vector<1x1x8x16xi1> to vector<2x8x8x16xi1>
    %86 = vector.broadcast %cst_55 : f32 to vector<2x8x8x16xf32>
    %87 = arith.select %85, %83, %86 : vector<2x8x8x16xi1>, vector<2x8x8x16xf32>
    %88 = vector.broadcast %82 : vector<1x1x8x16xf32> to vector<2x8x8x16xf32>
    %89 = arith.mulf %87, %88 : vector<2x8x8x16xf32>
    %90 = arith.addf %78, %89 : vector<2x8x8x16xf32>
    %c7 = arith.constant 7 : index
    %c0_56 = arith.constant 0 : index
    %c0_57 = arith.constant 0 : index
    %91 = vector.load %arg5[%c7, %c0_56, %c0_57] : memref<9x8x16xf32, #tpu.memory_space<vmem>>, vector<1x8x16xf32>
    %92 = vector.shape_cast %91 : vector<1x8x16xf32> to vector<8x16xf32>
    %93 = vector.shape_cast %92 : vector<8x16xf32> to vector<1x1x8x16xf32>
    %94 = vector.broadcast %93 : vector<1x1x8x16xf32> to vector<2x8x8x16xf32>
    %95 = arith.mulf %79, %94 : vector<2x8x8x16xf32>
    %96 = arith.addf %90, %95 : vector<2x8x8x16xf32>
    %c8 = arith.constant 8 : index
    %c0_58 = arith.constant 0 : index
    %c0_59 = arith.constant 0 : index
    %97 = vector.load %arg5[%c8, %c0_58, %c0_59] : memref<9x8x16xf32, #tpu.memory_space<vmem>>, vector<1x8x16xf32>
    %98 = vector.shape_cast %97 : vector<1x8x16xf32> to vector<8x16xf32>
    %99 = vector.shape_cast %98 : vector<8x16xf32> to vector<1x1x8x16xf32>
    %c7_i32_60 = arith.constant 7 : i32
    %100 = tpu.dynamic_rotate %79 by %c7_i32_60 dim 2 : vector<2x8x8x16xf32>, i32 -> vector<2x8x8x16xf32>
    %cst_61 = arith.constant 0.000000e+00 : f32
    %101 = vector.shape_cast %17 : vector<1x1x8x16xi1> to vector<1x1x8x16xi1>
    %102 = vector.broadcast %101 : vector<1x1x8x16xi1> to vector<2x8x8x16xi1>
    %103 = vector.broadcast %cst_61 : f32 to vector<2x8x8x16xf32>
    %104 = arith.select %102, %100, %103 : vector<2x8x8x16xi1>, vector<2x8x8x16xf32>
    %105 = vector.broadcast %99 : vector<1x1x8x16xf32> to vector<2x8x8x16xf32>
    %106 = arith.mulf %104, %105 : vector<2x8x8x16xf32>
    %107 = arith.addf %96, %106 : vector<2x8x8x16xf32>
    %cst_62 = arith.constant 0.000000e+00 : f32
    %108 = vector.broadcast %cst_62 : f32 to vector<2x8x8x16xf32>
    %109 = arith.maximumf %107, %108 : vector<2x8x8x16xf32>
    %110 = vector.shape_cast %109 : vector<2x8x8x16xf32> to vector<128x16xf32>
    %c0_63 = arith.constant 0 : index
    %c0_64 = arith.constant 0 : index
    %111 = vector.load %arg7[%c0_63, %c0_64] : memref<16x32xf32, #tpu.memory_space<vmem>>, vector<16x32xf32>
    %cst_65 = arith.constant dense<0.000000e+00> : vector<128x32xf32>
    %112 = tpu.matmul %110, %111, %cst_65 {dimension_numbers = #tpu.dot_dimension_numbers<[1], [0], [0], [1], [0, 0, 1, 1], [], []>} : vector<128x16xf32>, vector<16x32xf32>, vector<128x32xf32> -> vector<128x32xf32>
    %c0_66 = arith.constant 0 : index
    %c0_67 = arith.constant 0 : index
    %113 = vector.load %arg8[%c0_66, %c0_67] : memref<1x32xf32, #tpu.memory_space<vmem>>, vector<1x32xf32>
    %114 = vector.broadcast %113 : vector<1x32xf32> to vector<128x32xf32>
    %115 = arith.addf %112, %114 : vector<128x32xf32>
    %cst_68 = arith.constant 0.000000e+00 : f32
    %116 = vector.broadcast %cst_68 : f32 to vector<128x32xf32>
    %117 = arith.maximumf %115, %116 : vector<128x32xf32>
    %c0_69 = arith.constant 0 : index
    %c0_70 = arith.constant 0 : index
    %c0_71 = arith.constant 0 : index
    %c0_72 = arith.constant 0 : index
    %118 = vector.load %arg1[%c0_69, %c0_70, %c0_71, %c0_72] : memref<2x8x8x16xf32, #tpu.memory_space<vmem>>, vector<2x8x8x16xf32>
    %119 = vector.shape_cast %118 : vector<2x8x8x16xf32> to vector<128x16xf32>
    %c0_73 = arith.constant 0 : index
    %c0_74 = arith.constant 0 : index
    %c0_75 = arith.constant 0 : index
    %c0_76 = arith.constant 0 : index
    %120 = vector.load %arg2[%c0_73, %c0_74, %c0_75, %c0_76] : memref<2x8x8x16xf32, #tpu.memory_space<vmem>>, vector<2x8x8x16xf32>
    %121 = vector.shape_cast %120 : vector<2x8x8x16xf32> to vector<128x16xf32>
    %122 = vector.shape_cast %117 : vector<128x32xf32> to vector<2x8x8x32xf32>
    %c0_77 = arith.constant 0 : index
    %c1_78 = arith.constant 1 : index
    %c0_79 = arith.constant 0 : index
    %c0_80 = arith.constant 0 : index
    %123 = vector.load %arg23[%c0_77, %c1_78, %c0_79, %c0_80] : memref<2x10x8x32xf32, #tpu.memory_space<vmem>>, vector<2x8x8x32xf32>
    tpu.vector_store %arg23[%c0_77, %c1_78, %c0_79, %c0_80], %122 {strides = array<i32>} : memref<2x10x8x32xf32, #tpu.memory_space<vmem>>, vector<2x8x8x32xf32>,
    %124 = tpu.iota {dimensions = array<i32: 2>} : vector<1x1x8x32xi32>
    %c0_i32_81 = arith.constant 0 : i32
    %125 = vector.broadcast %c0_i32_81 : i32 to vector<1x1x8x32xi32>
    %126 = arith.cmpi sgt, %124, %125 : vector<1x1x8x32xi32>
    %c7_i32_82 = arith.constant 7 : i32
    %127 = vector.broadcast %c7_i32_82 : i32 to vector<1x1x8x32xi32>
    %128 = arith.cmpi slt, %124, %127 : vector<1x1x8x32xi32>
    %c0_83 = arith.constant 0 : index
    %c0_84 = arith.constant 0 : index
    %129 = vector.load %arg10[%c0_83, %c0_84] : memref<8x32xf32, #tpu.memory_space<vmem>>, vector<8x32xf32>
    %130 = vector.shape_cast %129 : vector<8x32xf32> to vector<1x1x8x32xf32>
    %c0_85 = arith.constant 0 : index
    %c0_86 = arith.constant 0 : index
    %c0_87 = arith.constant 0 : index
    %c0_88 = arith.constant 0 : index
    %131 = vector.load %arg23[%c0_85, %c0_86, %c0_87, %c0_88] : memref<2x10x8x32xf32, #tpu.memory_space<vmem>>, vector<2x8x8x32xf32>
    %c0_89 = arith.constant 0 : index
    %c0_90 = arith.constant 0 : index
    %c0_91 = arith.constant 0 : index
    %132 = vector.load %arg9[%c0_89, %c0_90, %c0_91] : memref<9x8x32xf32, #tpu.memory_space<vmem>>, vector<1x8x32xf32>
    %133 = vector.shape_cast %132 : vector<1x8x32xf32> to vector<8x32xf32>
    %134 = vector.shape_cast %133 : vector<8x32xf32> to vector<1x1x8x32xf32>
    %c1_i32_92 = arith.constant 1 : i32
    %135 = tpu.dynamic_rotate %131 by %c1_i32_92 dim 2 : vector<2x8x8x32xf32>, i32 -> vector<2x8x8x32xf32>
    %cst_93 = arith.constant 0.000000e+00 : f32
    %136 = vector.shape_cast %126 : vector<1x1x8x32xi1> to vector<1x1x8x32xi1>
    %137 = vector.broadcast %136 : vector<1x1x8x32xi1> to vector<2x8x8x32xi1>
    %138 = vector.broadcast %cst_93 : f32 to vector<2x8x8x32xf32>
    %139 = arith.select %137, %135, %138 : vector<2x8x8x32xi1>, vector<2x8x8x32xf32>
    %140 = vector.broadcast %134 : vector<1x1x8x32xf32> to vector<2x8x8x32xf32>
    %141 = arith.mulf %139, %140 : vector<2x8x8x32xf32>
    %142 = vector.broadcast %130 : vector<1x1x8x32xf32> to vector<2x8x8x32xf32>
    %143 = arith.addf %142, %141 : vector<2x8x8x32xf32>
    %c1_94 = arith.constant 1 : index
    %c0_95 = arith.constant 0 : index
    %c0_96 = arith.constant 0 : index
    %144 = vector.load %arg9[%c1_94, %c0_95, %c0_96] : memref<9x8x32xf32, #tpu.memory_space<vmem>>, vector<1x8x32xf32>
    %145 = vector.shape_cast %144 : vector<1x8x32xf32> to vector<8x32xf32>
    %146 = vector.shape_cast %145 : vector<8x32xf32> to vector<1x1x8x32xf32>
    %147 = vector.broadcast %146 : vector<1x1x8x32xf32> to vector<2x8x8x32xf32>
    %148 = arith.mulf %131, %147 : vector<2x8x8x32xf32>
    %149 = arith.addf %143, %148 : vector<2x8x8x32xf32>
    %c2_97 = arith.constant 2 : index
    %c0_98 = arith.constant 0 : index
    %c0_99 = arith.constant 0 : index
    %150 = vector.load %arg9[%c2_97, %c0_98, %c0_99] : memref<9x8x32xf32, #tpu.memory_space<vmem>>, vector<1x8x32xf32>
    %151 = vector.shape_cast %150 : vector<1x8x32xf32> to vector<8x32xf32>
    %152 = vector.shape_cast %151 : vector<8x32xf32> to vector<1x1x8x32xf32>
    %c7_i32_100 = arith.constant 7 : i32
    %153 = tpu.dynamic_rotate %131 by %c7_i32_100 dim 2 : vector<2x8x8x32xf32>, i32 -> vector<2x8x8x32xf32>
    %cst_101 = arith.constant 0.000000e+00 : f32
    %154 = vector.shape_cast %128 : vector<1x1x8x32xi1> to vector<1x1x8x32xi1>
    %155 = vector.broadcast %154 : vector<1x1x8x32xi1> to vector<2x8x8x32xi1>
    %156 = vector.broadcast %cst_101 : f32 to vector<2x8x8x32xf32>
    %157 = arith.select %155, %153, %156 : vector<2x8x8x32xi1>, vector<2x8x8x32xf32>
    %158 = vector.broadcast %152 : vector<1x1x8x32xf32> to vector<2x8x8x32xf32>
    %159 = arith.mulf %157, %158 : vector<2x8x8x32xf32>
    %160 = arith.addf %149, %159 : vector<2x8x8x32xf32>
    %c0_102 = arith.constant 0 : index
    %c1_103 = arith.constant 1 : index
    %c0_104 = arith.constant 0 : index
    %c0_105 = arith.constant 0 : index
    %161 = vector.load %arg23[%c0_102, %c1_103, %c0_104, %c0_105] : memref<2x10x8x32xf32, #tpu.memory_space<vmem>>, vector<2x8x8x32xf32>
    %c3_106 = arith.constant 3 : index
    %c0_107 = arith.constant 0 : index
    %c0_108 = arith.constant 0 : index
    %162 = vector.load %arg9[%c3_106, %c0_107, %c0_108] : memref<9x8x32xf32, #tpu.memory_space<vmem>>, vector<1x8x32xf32>
    %163 = vector.shape_cast %162 : vector<1x8x32xf32> to vector<8x32xf32>
    %164 = vector.shape_cast %163 : vector<8x32xf32> to vector<1x1x8x32xf32>
    %c1_i32_109 = arith.constant 1 : i32
    %165 = tpu.dynamic_rotate %161 by %c1_i32_109 dim 2 : vector<2x8x8x32xf32>, i32 -> vector<2x8x8x32xf32>
    %cst_110 = arith.constant 0.000000e+00 : f32
    %166 = vector.shape_cast %126 : vector<1x1x8x32xi1> to vector<1x1x8x32xi1>
    %167 = vector.broadcast %166 : vector<1x1x8x32xi1> to vector<2x8x8x32xi1>
    %168 = vector.broadcast %cst_110 : f32 to vector<2x8x8x32xf32>
    %169 = arith.select %167, %165, %168 : vector<2x8x8x32xi1>, vector<2x8x8x32xf32>
    %170 = vector.broadcast %164 : vector<1x1x8x32xf32> to vector<2x8x8x32xf32>
    %171 = arith.mulf %169, %170 : vector<2x8x8x32xf32>
    %172 = arith.addf %160, %171 : vector<2x8x8x32xf32>
    %c4_111 = arith.constant 4 : index
    %c0_112 = arith.constant 0 : index
    %c0_113 = arith.constant 0 : index
    %173 = vector.load %arg9[%c4_111, %c0_112, %c0_113] : memref<9x8x32xf32, #tpu.memory_space<vmem>>, vector<1x8x32xf32>
    %174 = vector.shape_cast %173 : vector<1x8x32xf32> to vector<8x32xf32>
    %175 = vector.shape_cast %174 : vector<8x32xf32> to vector<1x1x8x32xf32>
    %176 = vector.broadcast %175 : vector<1x1x8x32xf32> to vector<2x8x8x32xf32>
    %177 = arith.mulf %161, %176 : vector<2x8x8x32xf32>
    %178 = arith.addf %172, %177 : vector<2x8x8x32xf32>
    %c5_114 = arith.constant 5 : index
    %c0_115 = arith.constant 0 : index
    %c0_116 = arith.constant 0 : index
    %179 = vector.load %arg9[%c5_114, %c0_115, %c0_116] : memref<9x8x32xf32, #tpu.memory_space<vmem>>, vector<1x8x32xf32>
    %180 = vector.shape_cast %179 : vector<1x8x32xf32> to vector<8x32xf32>
    %181 = vector.shape_cast %180 : vector<8x32xf32> to vector<1x1x8x32xf32>
    %c7_i32_117 = arith.constant 7 : i32
    %182 = tpu.dynamic_rotate %161 by %c7_i32_117 dim 2 : vector<2x8x8x32xf32>, i32 -> vector<2x8x8x32xf32>
    %cst_118 = arith.constant 0.000000e+00 : f32
    %183 = vector.shape_cast %128 : vector<1x1x8x32xi1> to vector<1x1x8x32xi1>
    %184 = vector.broadcast %183 : vector<1x1x8x32xi1> to vector<2x8x8x32xi1>
    %185 = vector.broadcast %cst_118 : f32 to vector<2x8x8x32xf32>
    %186 = arith.select %184, %182, %185 : vector<2x8x8x32xi1>, vector<2x8x8x32xf32>
    %187 = vector.broadcast %181 : vector<1x1x8x32xf32> to vector<2x8x8x32xf32>
    %188 = arith.mulf %186, %187 : vector<2x8x8x32xf32>
    %189 = arith.addf %178, %188 : vector<2x8x8x32xf32>
    %c0_119 = arith.constant 0 : index
    %c2_120 = arith.constant 2 : index
    %c0_121 = arith.constant 0 : index
    %c0_122 = arith.constant 0 : index
    %190 = vector.load %arg23[%c0_119, %c2_120, %c0_121, %c0_122] : memref<2x10x8x32xf32, #tpu.memory_space<vmem>>, vector<2x8x8x32xf32>
    %c6_123 = arith.constant 6 : index
    %c0_124 = arith.constant 0 : index
    %c0_125 = arith.constant 0 : index
    %191 = vector.load %arg9[%c6_123, %c0_124, %c0_125] : memref<9x8x32xf32, #tpu.memory_space<vmem>>, vector<1x8x32xf32>
    %192 = vector.shape_cast %191 : vector<1x8x32xf32> to vector<8x32xf32>
    %193 = vector.shape_cast %192 : vector<8x32xf32> to vector<1x1x8x32xf32>
    %c1_i32_126 = arith.constant 1 : i32
    %194 = tpu.dynamic_rotate %190 by %c1_i32_126 dim 2 : vector<2x8x8x32xf32>, i32 -> vector<2x8x8x32xf32>
    %cst_127 = arith.constant 0.000000e+00 : f32
    %195 = vector.shape_cast %126 : vector<1x1x8x32xi1> to vector<1x1x8x32xi1>
    %196 = vector.broadcast %195 : vector<1x1x8x32xi1> to vector<2x8x8x32xi1>
    %197 = vector.broadcast %cst_127 : f32 to vector<2x8x8x32xf32>
    %198 = arith.select %196, %194, %197 : vector<2x8x8x32xi1>, vector<2x8x8x32xf32>
    %199 = vector.broadcast %193 : vector<1x1x8x32xf32> to vector<2x8x8x32xf32>
    %200 = arith.mulf %198, %199 : vector<2x8x8x32xf32>
    %201 = arith.addf %189, %200 : vector<2x8x8x32xf32>
    %c7_128 = arith.constant 7 : index
    %c0_129 = arith.constant 0 : index
    %c0_130 = arith.constant 0 : index
    %202 = vector.load %arg9[%c7_128, %c0_129, %c0_130] : memref<9x8x32xf32, #tpu.memory_space<vmem>>, vector<1x8x32xf32>
    %203 = vector.shape_cast %202 : vector<1x8x32xf32> to vector<8x32xf32>
    %204 = vector.shape_cast %203 : vector<8x32xf32> to vector<1x1x8x32xf32>
    %205 = vector.broadcast %204 : vector<1x1x8x32xf32> to vector<2x8x8x32xf32>
    %206 = arith.mulf %190, %205 : vector<2x8x8x32xf32>
    %207 = arith.addf %201, %206 : vector<2x8x8x32xf32>
    %c8_131 = arith.constant 8 : index
    %c0_132 = arith.constant 0 : index
    %c0_133 = arith.constant 0 : index
    %208 = vector.load %arg9[%c8_131, %c0_132, %c0_133] : memref<9x8x32xf32, #tpu.memory_space<vmem>>, vector<1x8x32xf32>
    %209 = vector.shape_cast %208 : vector<1x8x32xf32> to vector<8x32xf32>
    %210 = vector.shape_cast %209 : vector<8x32xf32> to vector<1x1x8x32xf32>
    %c7_i32_134 = arith.constant 7 : i32
    %211 = tpu.dynamic_rotate %190 by %c7_i32_134 dim 2 : vector<2x8x8x32xf32>, i32 -> vector<2x8x8x32xf32>
    %cst_135 = arith.constant 0.000000e+00 : f32
    %212 = vector.shape_cast %128 : vector<1x1x8x32xi1> to vector<1x1x8x32xi1>
    %213 = vector.broadcast %212 : vector<1x1x8x32xi1> to vector<2x8x8x32xi1>
    %214 = vector.broadcast %cst_135 : f32 to vector<2x8x8x32xf32>
    %215 = arith.select %213, %211, %214 : vector<2x8x8x32xi1>, vector<2x8x8x32xf32>
    %216 = vector.broadcast %210 : vector<1x1x8x32xf32> to vector<2x8x8x32xf32>
    %217 = arith.mulf %215, %216 : vector<2x8x8x32xf32>
    %218 = arith.addf %207, %217 : vector<2x8x8x32xf32>
    %219 = vector.shape_cast %218 : vector<2x8x8x32xf32> to vector<128x32xf32>
    %c0_136 = arith.constant 0 : index
    %c0_137 = arith.constant 0 : index
    %220 = vector.load %arg11[%c0_136, %c0_137] : memref<32x16xf32, #tpu.memory_space<vmem>>, vector<32x16xf32>
    %cst_138 = arith.constant dense<0.000000e+00> : vector<128x16xf32>
    %221 = tpu.matmul %219, %220, %cst_138 {dimension_numbers = #tpu.dot_dimension_numbers<[1], [0], [0], [1], [0, 0, 1, 1], [], []>} : vector<128x32xf32>, vector<32x16xf32>, vector<128x16xf32> -> vector<128x16xf32>
    %c0_139 = arith.constant 0 : index
    %c0_140 = arith.constant 0 : index
    %222 = vector.load %arg12[%c0_139, %c0_140] : memref<16x16xf32, #tpu.memory_space<vmem>>, vector<16x16xf32>
    %cst_141 = arith.constant dense<0.000000e+00> : vector<128x16xf32>
    %223 = tpu.matmul %119, %222, %cst_141 {dimension_numbers = #tpu.dot_dimension_numbers<[1], [0], [0], [1], [0, 0, 1, 1], [], []>} : vector<128x16xf32>, vector<16x16xf32>, vector<128x16xf32> -> vector<128x16xf32>
    %224 = arith.addf %221, %223 : vector<128x16xf32>
    %c0_142 = arith.constant 0 : index
    %c0_143 = arith.constant 0 : index
    %225 = vector.load %arg13[%c0_142, %c0_143] : memref<1x16xf32, #tpu.memory_space<vmem>>, vector<1x16xf32>
    %226 = vector.broadcast %225 : vector<1x16xf32> to vector<128x16xf32>
    %227 = arith.addf %224, %226 : vector<128x16xf32>
    %228 = vector.shape_cast %227 : vector<128x16xf32> to vector<2x8x8x16xf32>
    %c0_144 = arith.constant 0 : index
    %c1_145 = arith.constant 1 : index
    %c0_146 = arith.constant 0 : index
    %c0_147 = arith.constant 0 : index
    %229 = vector.load %arg23[%c0_144, %c1_145, %c0_146, %c0_147] : memref<2x10x8x32xf32, #tpu.memory_space<vmem>>, vector<2x8x8x16xf32>
    tpu.vector_store %arg23[%c0_144, %c1_145, %c0_146, %c0_147], %228 {strides = array<i32>} : memref<2x10x8x32xf32, #tpu.memory_space<vmem>>, vector<2x8x8x16xf32>,
    %230 = tpu.iota {dimensions = array<i32: 2>} : vector<1x1x8x16xi32>
    %c0_i32_148 = arith.constant 0 : i32
    %231 = vector.broadcast %c0_i32_148 : i32 to vector<1x1x8x16xi32>
    %232 = arith.cmpi sgt, %230, %231 : vector<1x1x8x16xi32>
    %c7_i32_149 = arith.constant 7 : i32
    %233 = vector.broadcast %c7_i32_149 : i32 to vector<1x1x8x16xi32>
    %234 = arith.cmpi slt, %230, %233 : vector<1x1x8x16xi32>
    %cst_150 = arith.constant 0.000000e+00 : f32
    %235 = vector.broadcast %cst_150 : f32 to vector<1x1x8x16xf32>
    %c0_151 = arith.constant 0 : index
    %c0_152 = arith.constant 0 : index
    %c0_153 = arith.constant 0 : index
    %c0_154 = arith.constant 0 : index
    %236 = vector.load %arg23[%c0_151, %c0_152, %c0_153, %c0_154] : memref<2x10x8x32xf32, #tpu.memory_space<vmem>>, vector<2x8x8x16xf32>
    %c0_155 = arith.constant 0 : index
    %c0_156 = arith.constant 0 : index
    %c0_157 = arith.constant 0 : index
    %237 = vector.load %arg14[%c0_155, %c0_156, %c0_157] : memref<9x8x16xf32, #tpu.memory_space<vmem>>, vector<1x8x16xf32>
    %238 = vector.shape_cast %237 : vector<1x8x16xf32> to vector<8x16xf32>
    %239 = vector.shape_cast %238 : vector<8x16xf32> to vector<1x1x8x16xf32>
    %c1_i32_158 = arith.constant 1 : i32
    %240 = tpu.dynamic_rotate %236 by %c1_i32_158 dim 2 : vector<2x8x8x16xf32>, i32 -> vector<2x8x8x16xf32>
    %cst_159 = arith.constant 0.000000e+00 : f32
    %241 = vector.shape_cast %232 : vector<1x1x8x16xi1> to vector<1x1x8x16xi1>
    %242 = vector.broadcast %241 : vector<1x1x8x16xi1> to vector<2x8x8x16xi1>
    %243 = vector.broadcast %cst_159 : f32 to vector<2x8x8x16xf32>
    %244 = arith.select %242, %240, %243 : vector<2x8x8x16xi1>, vector<2x8x8x16xf32>
    %245 = vector.broadcast %239 : vector<1x1x8x16xf32> to vector<2x8x8x16xf32>
    %246 = arith.mulf %244, %245 : vector<2x8x8x16xf32>
    %247 = vector.broadcast %235 : vector<1x1x8x16xf32> to vector<2x8x8x16xf32>
    %248 = arith.addf %247, %246 : vector<2x8x8x16xf32>
    %c1_160 = arith.constant 1 : index
    %c0_161 = arith.constant 0 : index
    %c0_162 = arith.constant 0 : index
    %249 = vector.load %arg14[%c1_160, %c0_161, %c0_162] : memref<9x8x16xf32, #tpu.memory_space<vmem>>, vector<1x8x16xf32>
    %250 = vector.shape_cast %249 : vector<1x8x16xf32> to vector<8x16xf32>
    %251 = vector.shape_cast %250 : vector<8x16xf32> to vector<1x1x8x16xf32>
    %252 = vector.broadcast %251 : vector<1x1x8x16xf32> to vector<2x8x8x16xf32>
    %253 = arith.mulf %236, %252 : vector<2x8x8x16xf32>
    %254 = arith.addf %248, %253 : vector<2x8x8x16xf32>
    %c2_163 = arith.constant 2 : index
    %c0_164 = arith.constant 0 : index
    %c0_165 = arith.constant 0 : index
    %255 = vector.load %arg14[%c2_163, %c0_164, %c0_165] : memref<9x8x16xf32, #tpu.memory_space<vmem>>, vector<1x8x16xf32>
    %256 = vector.shape_cast %255 : vector<1x8x16xf32> to vector<8x16xf32>
    %257 = vector.shape_cast %256 : vector<8x16xf32> to vector<1x1x8x16xf32>
    %c7_i32_166 = arith.constant 7 : i32
    %258 = tpu.dynamic_rotate %236 by %c7_i32_166 dim 2 : vector<2x8x8x16xf32>, i32 -> vector<2x8x8x16xf32>
    %cst_167 = arith.constant 0.000000e+00 : f32
    %259 = vector.shape_cast %234 : vector<1x1x8x16xi1> to vector<1x1x8x16xi1>
    %260 = vector.broadcast %259 : vector<1x1x8x16xi1> to vector<2x8x8x16xi1>
    %261 = vector.broadcast %cst_167 : f32 to vector<2x8x8x16xf32>
    %262 = arith.select %260, %258, %261 : vector<2x8x8x16xi1>, vector<2x8x8x16xf32>
    %263 = vector.broadcast %257 : vector<1x1x8x16xf32> to vector<2x8x8x16xf32>
    %264 = arith.mulf %262, %263 : vector<2x8x8x16xf32>
    %265 = arith.addf %254, %264 : vector<2x8x8x16xf32>
    %c0_168 = arith.constant 0 : index
    %c1_169 = arith.constant 1 : index
    %c0_170 = arith.constant 0 : index
    %c0_171 = arith.constant 0 : index
    %266 = vector.load %arg23[%c0_168, %c1_169, %c0_170, %c0_171] : memref<2x10x8x32xf32, #tpu.memory_space<vmem>>, vector<2x8x8x16xf32>
    %c3_172 = arith.constant 3 : index
    %c0_173 = arith.constant 0 : index
    %c0_174 = arith.constant 0 : index
    %267 = vector.load %arg14[%c3_172, %c0_173, %c0_174] : memref<9x8x16xf32, #tpu.memory_space<vmem>>, vector<1x8x16xf32>
    %268 = vector.shape_cast %267 : vector<1x8x16xf32> to vector<8x16xf32>
    %269 = vector.shape_cast %268 : vector<8x16xf32> to vector<1x1x8x16xf32>
    %c1_i32_175 = arith.constant 1 : i32
    %270 = tpu.dynamic_rotate %266 by %c1_i32_175 dim 2 : vector<2x8x8x16xf32>, i32 -> vector<2x8x8x16xf32>
    %cst_176 = arith.constant 0.000000e+00 : f32
    %271 = vector.shape_cast %232 : vector<1x1x8x16xi1> to vector<1x1x8x16xi1>
    %272 = vector.broadcast %271 : vector<1x1x8x16xi1> to vector<2x8x8x16xi1>
    %273 = vector.broadcast %cst_176 : f32 to vector<2x8x8x16xf32>
    %274 = arith.select %272, %270, %273 : vector<2x8x8x16xi1>, vector<2x8x8x16xf32>
    %275 = vector.broadcast %269 : vector<1x1x8x16xf32> to vector<2x8x8x16xf32>
    %276 = arith.mulf %274, %275 : vector<2x8x8x16xf32>
    %277 = arith.addf %265, %276 : vector<2x8x8x16xf32>
    %c4_177 = arith.constant 4 : index
    %c0_178 = arith.constant 0 : index
    %c0_179 = arith.constant 0 : index
    %278 = vector.load %arg14[%c4_177, %c0_178, %c0_179] : memref<9x8x16xf32, #tpu.memory_space<vmem>>, vector<1x8x16xf32>
    %279 = vector.shape_cast %278 : vector<1x8x16xf32> to vector<8x16xf32>
    %280 = vector.shape_cast %279 : vector<8x16xf32> to vector<1x1x8x16xf32>
    %281 = vector.broadcast %280 : vector<1x1x8x16xf32> to vector<2x8x8x16xf32>
    %282 = arith.mulf %266, %281 : vector<2x8x8x16xf32>
    %283 = arith.addf %277, %282 : vector<2x8x8x16xf32>
    %c5_180 = arith.constant 5 : index
    %c0_181 = arith.constant 0 : index
    %c0_182 = arith.constant 0 : index
    %284 = vector.load %arg14[%c5_180, %c0_181, %c0_182] : memref<9x8x16xf32, #tpu.memory_space<vmem>>, vector<1x8x16xf32>
    %285 = vector.shape_cast %284 : vector<1x8x16xf32> to vector<8x16xf32>
    %286 = vector.shape_cast %285 : vector<8x16xf32> to vector<1x1x8x16xf32>
    %c7_i32_183 = arith.constant 7 : i32
    %287 = tpu.dynamic_rotate %266 by %c7_i32_183 dim 2 : vector<2x8x8x16xf32>, i32 -> vector<2x8x8x16xf32>
    %cst_184 = arith.constant 0.000000e+00 : f32
    %288 = vector.shape_cast %234 : vector<1x1x8x16xi1> to vector<1x1x8x16xi1>
    %289 = vector.broadcast %288 : vector<1x1x8x16xi1> to vector<2x8x8x16xi1>
    %290 = vector.broadcast %cst_184 : f32 to vector<2x8x8x16xf32>
    %291 = arith.select %289, %287, %290 : vector<2x8x8x16xi1>, vector<2x8x8x16xf32>
    %292 = vector.broadcast %286 : vector<1x1x8x16xf32> to vector<2x8x8x16xf32>
    %293 = arith.mulf %291, %292 : vector<2x8x8x16xf32>
    %294 = arith.addf %283, %293 : vector<2x8x8x16xf32>
    %c0_185 = arith.constant 0 : index
    %c2_186 = arith.constant 2 : index
    %c0_187 = arith.constant 0 : index
    %c0_188 = arith.constant 0 : index
    %295 = vector.load %arg23[%c0_185, %c2_186, %c0_187, %c0_188] : memref<2x10x8x32xf32, #tpu.memory_space<vmem>>, vector<2x8x8x16xf32>
    %c6_189 = arith.constant 6 : index
    %c0_190 = arith.constant 0 : index
    %c0_191 = arith.constant 0 : index
    %296 = vector.load %arg14[%c6_189, %c0_190, %c0_191] : memref<9x8x16xf32, #tpu.memory_space<vmem>>, vector<1x8x16xf32>
    %297 = vector.shape_cast %296 : vector<1x8x16xf32> to vector<8x16xf32>
    %298 = vector.shape_cast %297 : vector<8x16xf32> to vector<1x1x8x16xf32>
    %c1_i32_192 = arith.constant 1 : i32
    %299 = tpu.dynamic_rotate %295 by %c1_i32_192 dim 2 : vector<2x8x8x16xf32>, i32 -> vector<2x8x8x16xf32>
    %cst_193 = arith.constant 0.000000e+00 : f32
    %300 = vector.shape_cast %232 : vector<1x1x8x16xi1> to vector<1x1x8x16xi1>
    %301 = vector.broadcast %300 : vector<1x1x8x16xi1> to vector<2x8x8x16xi1>
    %302 = vector.broadcast %cst_193 : f32 to vector<2x8x8x16xf32>
    %303 = arith.select %301, %299, %302 : vector<2x8x8x16xi1>, vector<2x8x8x16xf32>
    %304 = vector.broadcast %298 : vector<1x1x8x16xf32> to vector<2x8x8x16xf32>
    %305 = arith.mulf %303, %304 : vector<2x8x8x16xf32>
    %306 = arith.addf %294, %305 : vector<2x8x8x16xf32>
    %c7_194 = arith.constant 7 : index
    %c0_195 = arith.constant 0 : index
    %c0_196 = arith.constant 0 : index
    %307 = vector.load %arg14[%c7_194, %c0_195, %c0_196] : memref<9x8x16xf32, #tpu.memory_space<vmem>>, vector<1x8x16xf32>
    %308 = vector.shape_cast %307 : vector<1x8x16xf32> to vector<8x16xf32>
    %309 = vector.shape_cast %308 : vector<8x16xf32> to vector<1x1x8x16xf32>
    %310 = vector.broadcast %309 : vector<1x1x8x16xf32> to vector<2x8x8x16xf32>
    %311 = arith.mulf %295, %310 : vector<2x8x8x16xf32>
    %312 = arith.addf %306, %311 : vector<2x8x8x16xf32>
    %c8_197 = arith.constant 8 : index
    %c0_198 = arith.constant 0 : index
    %c0_199 = arith.constant 0 : index
    %313 = vector.load %arg14[%c8_197, %c0_198, %c0_199] : memref<9x8x16xf32, #tpu.memory_space<vmem>>, vector<1x8x16xf32>
    %314 = vector.shape_cast %313 : vector<1x8x16xf32> to vector<8x16xf32>
    %315 = vector.shape_cast %314 : vector<8x16xf32> to vector<1x1x8x16xf32>
    %c7_i32_200 = arith.constant 7 : i32
    %316 = tpu.dynamic_rotate %295 by %c7_i32_200 dim 2 : vector<2x8x8x16xf32>, i32 -> vector<2x8x8x16xf32>
    %cst_201 = arith.constant 0.000000e+00 : f32
    %317 = vector.shape_cast %234 : vector<1x1x8x16xi1> to vector<1x1x8x16xi1>
    %318 = vector.broadcast %317 : vector<1x1x8x16xi1> to vector<2x8x8x16xi1>
    %319 = vector.broadcast %cst_201 : f32 to vector<2x8x8x16xf32>
    %320 = arith.select %318, %316, %319 : vector<2x8x8x16xi1>, vector<2x8x8x16xf32>
    %321 = vector.broadcast %315 : vector<1x1x8x16xf32> to vector<2x8x8x16xf32>
    %322 = arith.mulf %320, %321 : vector<2x8x8x16xf32>
    %323 = arith.addf %312, %322 : vector<2x8x8x16xf32>
    %324 = vector.shape_cast %323 : vector<2x8x8x16xf32> to vector<128x16xf32>
    %c0_202 = arith.constant 0 : index
    %c0_203 = arith.constant 0 : index
    %325 = vector.load %arg15[%c0_202, %c0_203] : memref<16x64xf32, #tpu.memory_space<vmem>>, vector<16x64xf32>
    %cst_204 = arith.constant dense<0.000000e+00> : vector<128x64xf32>
    %326 = tpu.matmul %324, %325, %cst_204 {dimension_numbers = #tpu.dot_dimension_numbers<[1], [0], [0], [1], [0, 0, 1, 1], [], []>} : vector<128x16xf32>, vector<16x64xf32>, vector<128x64xf32> -> vector<128x64xf32>
    %327 = vector.extract_strided_slice %326 {offsets = [0, 0], sizes = [128, 48], strides = [1, 1]} : vector<128x64xf32> to vector<128x48xf32>
    %328 = arith.negf %327 : vector<128x48xf32>
    %329 = math.exp %328 : vector<128x48xf32>
    %cst_205 = arith.constant 1.000000e+00 : f32
    %330 = vector.broadcast %cst_205 : f32 to vector<128x48xf32>
    %331 = arith.addf %330, %329 : vector<128x48xf32>
    %332 = arith.divf %330, %331 : vector<128x48xf32>
    %333 = vector.extract_strided_slice %326 {offsets = [0, 48], sizes = [128, 16], strides = [1, 1]} : vector<128x64xf32> to vector<128x16xf32>
    %cst_206 = arith.constant 0.000000e+00 : f32
    %334 = vector.broadcast %cst_206 : f32 to vector<128x16xf32>
    %335 = arith.maximumf %333, %334 : vector<128x16xf32>
    %336 = vector.extract_strided_slice %332 {offsets = [0, 0], sizes = [128, 16], strides = [1, 1]} : vector<128x48xf32> to vector<128x16xf32>
    %337 = vector.extract_strided_slice %332 {offsets = [0, 16], sizes = [128, 16], strides = [1, 1]} : vector<128x48xf32> to vector<128x16xf32>
    %338 = vector.extract_strided_slice %332 {offsets = [0, 32], sizes = [128, 16], strides = [1, 1]} : vector<128x48xf32> to vector<128x16xf32>
    %339 = arith.mulf %337, %121 : vector<128x16xf32>
    %340 = arith.mulf %336, %335 : vector<128x16xf32>
    %341 = arith.addf %339, %340 : vector<128x16xf32>
    %cst_207 = arith.constant 0.000000e+00 : f32
    %342 = vector.broadcast %cst_207 : f32 to vector<128x16xf32>
    %343 = arith.maximumf %341, %342 : vector<128x16xf32>
    %344 = arith.mulf %338, %343 : vector<128x16xf32>
    %345 = vector.shape_cast %344 : vector<128x16xf32> to vector<2x8x8x16xf32>
    %c0_208 = arith.constant 0 : index
    %c1_209 = arith.constant 1 : index
    %c0_210 = arith.constant 0 : index
    %c0_211 = arith.constant 0 : index
    %346 = vector.load %arg23[%c0_208, %c1_209, %c0_210, %c0_211] : memref<2x10x8x32xf32, #tpu.memory_space<vmem>>, vector<2x8x8x16xf32>
    tpu.vector_store %arg23[%c0_208, %c1_209, %c0_210, %c0_211], %345 {strides = array<i32>} : memref<2x10x8x32xf32, #tpu.memory_space<vmem>>, vector<2x8x8x16xf32>,
    %c0_212 = arith.constant 0 : index
    %c1_213 = arith.constant 1 : index
    %c0_214 = arith.constant 0 : index
    %c16 = arith.constant 16 : index
    %347 = vector.load %arg23[%c0_212, %c1_213, %c0_214, %c16] : memref<2x10x8x32xf32, #tpu.memory_space<vmem>>, vector<2x8x8x16xf32>
    tpu.vector_store %arg23[%c0_212, %c1_213, %c0_214, %c16], %345 {strides = array<i32>} : memref<2x10x8x32xf32, #tpu.memory_space<vmem>>, vector<2x8x8x16xf32>,
    %348 = tpu.iota {dimensions = array<i32: 2>} : vector<1x1x8x32xi32>
    %c0_i32_215 = arith.constant 0 : i32
    %349 = vector.broadcast %c0_i32_215 : i32 to vector<1x1x8x32xi32>
    %350 = arith.cmpi sgt, %348, %349 : vector<1x1x8x32xi32>
    %c7_i32_216 = arith.constant 7 : i32
    %351 = vector.broadcast %c7_i32_216 : i32 to vector<1x1x8x32xi32>
    %352 = arith.cmpi slt, %348, %351 : vector<1x1x8x32xi32>
    %c0_217 = arith.constant 0 : index
    %c0_218 = arith.constant 0 : index
    %353 = vector.load %arg17[%c0_217, %c0_218] : memref<8x32xf32, #tpu.memory_space<vmem>>, vector<8x32xf32>
    %354 = vector.shape_cast %353 : vector<8x32xf32> to vector<1x1x8x32xf32>
    %c0_219 = arith.constant 0 : index
    %c0_220 = arith.constant 0 : index
    %c0_221 = arith.constant 0 : index
    %c0_222 = arith.constant 0 : index
    %355 = vector.load %arg23[%c0_219, %c0_220, %c0_221, %c0_222] : memref<2x10x8x32xf32, #tpu.memory_space<vmem>>, vector<2x8x8x32xf32>
    %c0_223 = arith.constant 0 : index
    %c0_224 = arith.constant 0 : index
    %c0_225 = arith.constant 0 : index
    %356 = vector.load %arg16[%c0_223, %c0_224, %c0_225] : memref<9x8x32xf32, #tpu.memory_space<vmem>>, vector<1x8x32xf32>
    %357 = vector.shape_cast %356 : vector<1x8x32xf32> to vector<8x32xf32>
    %358 = vector.shape_cast %357 : vector<8x32xf32> to vector<1x1x8x32xf32>
    %c1_i32_226 = arith.constant 1 : i32
    %359 = tpu.dynamic_rotate %355 by %c1_i32_226 dim 2 : vector<2x8x8x32xf32>, i32 -> vector<2x8x8x32xf32>
    %cst_227 = arith.constant 0.000000e+00 : f32
    %360 = vector.shape_cast %350 : vector<1x1x8x32xi1> to vector<1x1x8x32xi1>
    %361 = vector.broadcast %360 : vector<1x1x8x32xi1> to vector<2x8x8x32xi1>
    %362 = vector.broadcast %cst_227 : f32 to vector<2x8x8x32xf32>
    %363 = arith.select %361, %359, %362 : vector<2x8x8x32xi1>, vector<2x8x8x32xf32>
    %364 = vector.broadcast %358 : vector<1x1x8x32xf32> to vector<2x8x8x32xf32>
    %365 = arith.mulf %363, %364 : vector<2x8x8x32xf32>
    %366 = vector.broadcast %354 : vector<1x1x8x32xf32> to vector<2x8x8x32xf32>
    %367 = arith.addf %366, %365 : vector<2x8x8x32xf32>
    %c1_228 = arith.constant 1 : index
    %c0_229 = arith.constant 0 : index
    %c0_230 = arith.constant 0 : index
    %368 = vector.load %arg16[%c1_228, %c0_229, %c0_230] : memref<9x8x32xf32, #tpu.memory_space<vmem>>, vector<1x8x32xf32>
    %369 = vector.shape_cast %368 : vector<1x8x32xf32> to vector<8x32xf32>
    %370 = vector.shape_cast %369 : vector<8x32xf32> to vector<1x1x8x32xf32>
    %371 = vector.broadcast %370 : vector<1x1x8x32xf32> to vector<2x8x8x32xf32>
    %372 = arith.mulf %355, %371 : vector<2x8x8x32xf32>
    %373 = arith.addf %367, %372 : vector<2x8x8x32xf32>
    %c2_231 = arith.constant 2 : index
    %c0_232 = arith.constant 0 : index
    %c0_233 = arith.constant 0 : index
    %374 = vector.load %arg16[%c2_231, %c0_232, %c0_233] : memref<9x8x32xf32, #tpu.memory_space<vmem>>, vector<1x8x32xf32>
    %375 = vector.shape_cast %374 : vector<1x8x32xf32> to vector<8x32xf32>
    %376 = vector.shape_cast %375 : vector<8x32xf32> to vector<1x1x8x32xf32>
    %c7_i32_234 = arith.constant 7 : i32
    %377 = tpu.dynamic_rotate %355 by %c7_i32_234 dim 2 : vector<2x8x8x32xf32>, i32 -> vector<2x8x8x32xf32>
    %cst_235 = arith.constant 0.000000e+00 : f32
    %378 = vector.shape_cast %352 : vector<1x1x8x32xi1> to vector<1x1x8x32xi1>
    %379 = vector.broadcast %378 : vector<1x1x8x32xi1> to vector<2x8x8x32xi1>
    %380 = vector.broadcast %cst_235 : f32 to vector<2x8x8x32xf32>
    %381 = arith.select %379, %377, %380 : vector<2x8x8x32xi1>, vector<2x8x8x32xf32>
    %382 = vector.broadcast %376 : vector<1x1x8x32xf32> to vector<2x8x8x32xf32>
    %383 = arith.mulf %381, %382 : vector<2x8x8x32xf32>
    %384 = arith.addf %373, %383 : vector<2x8x8x32xf32>
    %c0_236 = arith.constant 0 : index
    %c1_237 = arith.constant 1 : index
    %c0_238 = arith.constant 0 : index
    %c0_239 = arith.constant 0 : index
    %385 = vector.load %arg23[%c0_236, %c1_237, %c0_238, %c0_239] : memref<2x10x8x32xf32, #tpu.memory_space<vmem>>, vector<2x8x8x32xf32>
    %c3_240 = arith.constant 3 : index
    %c0_241 = arith.constant 0 : index
    %c0_242 = arith.constant 0 : index
    %386 = vector.load %arg16[%c3_240, %c0_241, %c0_242] : memref<9x8x32xf32, #tpu.memory_space<vmem>>, vector<1x8x32xf32>
    %387 = vector.shape_cast %386 : vector<1x8x32xf32> to vector<8x32xf32>
    %388 = vector.shape_cast %387 : vector<8x32xf32> to vector<1x1x8x32xf32>
    %c1_i32_243 = arith.constant 1 : i32
    %389 = tpu.dynamic_rotate %385 by %c1_i32_243 dim 2 : vector<2x8x8x32xf32>, i32 -> vector<2x8x8x32xf32>
    %cst_244 = arith.constant 0.000000e+00 : f32
    %390 = vector.shape_cast %350 : vector<1x1x8x32xi1> to vector<1x1x8x32xi1>
    %391 = vector.broadcast %390 : vector<1x1x8x32xi1> to vector<2x8x8x32xi1>
    %392 = vector.broadcast %cst_244 : f32 to vector<2x8x8x32xf32>
    %393 = arith.select %391, %389, %392 : vector<2x8x8x32xi1>, vector<2x8x8x32xf32>
    %394 = vector.broadcast %388 : vector<1x1x8x32xf32> to vector<2x8x8x32xf32>
    %395 = arith.mulf %393, %394 : vector<2x8x8x32xf32>
    %396 = arith.addf %384, %395 : vector<2x8x8x32xf32>
    %c4_245 = arith.constant 4 : index
    %c0_246 = arith.constant 0 : index
    %c0_247 = arith.constant 0 : index
    %397 = vector.load %arg16[%c4_245, %c0_246, %c0_247] : memref<9x8x32xf32, #tpu.memory_space<vmem>>, vector<1x8x32xf32>
    %398 = vector.shape_cast %397 : vector<1x8x32xf32> to vector<8x32xf32>
    %399 = vector.shape_cast %398 : vector<8x32xf32> to vector<1x1x8x32xf32>
    %400 = vector.broadcast %399 : vector<1x1x8x32xf32> to vector<2x8x8x32xf32>
    %401 = arith.mulf %385, %400 : vector<2x8x8x32xf32>
    %402 = arith.addf %396, %401 : vector<2x8x8x32xf32>
    %c5_248 = arith.constant 5 : index
    %c0_249 = arith.constant 0 : index
    %c0_250 = arith.constant 0 : index
    %403 = vector.load %arg16[%c5_248, %c0_249, %c0_250] : memref<9x8x32xf32, #tpu.memory_space<vmem>>, vector<1x8x32xf32>
    %404 = vector.shape_cast %403 : vector<1x8x32xf32> to vector<8x32xf32>
    %405 = vector.shape_cast %404 : vector<8x32xf32> to vector<1x1x8x32xf32>
    %c7_i32_251 = arith.constant 7 : i32
    %406 = tpu.dynamic_rotate %385 by %c7_i32_251 dim 2 : vector<2x8x8x32xf32>, i32 -> vector<2x8x8x32xf32>
    %cst_252 = arith.constant 0.000000e+00 : f32
    %407 = vector.shape_cast %352 : vector<1x1x8x32xi1> to vector<1x1x8x32xi1>
    %408 = vector.broadcast %407 : vector<1x1x8x32xi1> to vector<2x8x8x32xi1>
    %409 = vector.broadcast %cst_252 : f32 to vector<2x8x8x32xf32>
    %410 = arith.select %408, %406, %409 : vector<2x8x8x32xi1>, vector<2x8x8x32xf32>
    %411 = vector.broadcast %405 : vector<1x1x8x32xf32> to vector<2x8x8x32xf32>
    %412 = arith.mulf %410, %411 : vector<2x8x8x32xf32>
    %413 = arith.addf %402, %412 : vector<2x8x8x32xf32>
    %c0_253 = arith.constant 0 : index
    %c2_254 = arith.constant 2 : index
    %c0_255 = arith.constant 0 : index
    %c0_256 = arith.constant 0 : index
    %414 = vector.load %arg23[%c0_253, %c2_254, %c0_255, %c0_256] : memref<2x10x8x32xf32, #tpu.memory_space<vmem>>, vector<2x8x8x32xf32>
    %c6_257 = arith.constant 6 : index
    %c0_258 = arith.constant 0 : index
    %c0_259 = arith.constant 0 : index
    %415 = vector.load %arg16[%c6_257, %c0_258, %c0_259] : memref<9x8x32xf32, #tpu.memory_space<vmem>>, vector<1x8x32xf32>
    %416 = vector.shape_cast %415 : vector<1x8x32xf32> to vector<8x32xf32>
    %417 = vector.shape_cast %416 : vector<8x32xf32> to vector<1x1x8x32xf32>
    %c1_i32_260 = arith.constant 1 : i32
    %418 = tpu.dynamic_rotate %414 by %c1_i32_260 dim 2 : vector<2x8x8x32xf32>, i32 -> vector<2x8x8x32xf32>
    %cst_261 = arith.constant 0.000000e+00 : f32
    %419 = vector.shape_cast %350 : vector<1x1x8x32xi1> to vector<1x1x8x32xi1>
    %420 = vector.broadcast %419 : vector<1x1x8x32xi1> to vector<2x8x8x32xi1>
    %421 = vector.broadcast %cst_261 : f32 to vector<2x8x8x32xf32>
    %422 = arith.select %420, %418, %421 : vector<2x8x8x32xi1>, vector<2x8x8x32xf32>
    %423 = vector.broadcast %417 : vector<1x1x8x32xf32> to vector<2x8x8x32xf32>
    %424 = arith.mulf %422, %423 : vector<2x8x8x32xf32>
    %425 = arith.addf %413, %424 : vector<2x8x8x32xf32>
    %c7_262 = arith.constant 7 : index
    %c0_263 = arith.constant 0 : index
    %c0_264 = arith.constant 0 : index
    %426 = vector.load %arg16[%c7_262, %c0_263, %c0_264] : memref<9x8x32xf32, #tpu.memory_space<vmem>>, vector<1x8x32xf32>
    %427 = vector.shape_cast %426 : vector<1x8x32xf32> to vector<8x32xf32>
    %428 = vector.shape_cast %427 : vector<8x32xf32> to vector<1x1x8x32xf32>
    %429 = vector.broadcast %428 : vector<1x1x8x32xf32> to vector<2x8x8x32xf32>
    %430 = arith.mulf %414, %429 : vector<2x8x8x32xf32>
    %431 = arith.addf %425, %430 : vector<2x8x8x32xf32>
    %c8_265 = arith.constant 8 : index
    %c0_266 = arith.constant 0 : index
    %c0_267 = arith.constant 0 : index
    %432 = vector.load %arg16[%c8_265, %c0_266, %c0_267] : memref<9x8x32xf32, #tpu.memory_space<vmem>>, vector<1x8x32xf32>
    %433 = vector.shape_cast %432 : vector<1x8x32xf32> to vector<8x32xf32>
    %434 = vector.shape_cast %433 : vector<8x32xf32> to vector<1x1x8x32xf32>
    %c7_i32_268 = arith.constant 7 : i32
    %435 = tpu.dynamic_rotate %414 by %c7_i32_268 dim 2 : vector<2x8x8x32xf32>, i32 -> vector<2x8x8x32xf32>
    %cst_269 = arith.constant 0.000000e+00 : f32
    %436 = vector.shape_cast %352 : vector<1x1x8x32xi1> to vector<1x1x8x32xi1>
    %437 = vector.broadcast %436 : vector<1x1x8x32xi1> to vector<2x8x8x32xi1>
    %438 = vector.broadcast %cst_269 : f32 to vector<2x8x8x32xf32>
    %439 = arith.select %437, %435, %438 : vector<2x8x8x32xi1>, vector<2x8x8x32xf32>
    %440 = vector.broadcast %434 : vector<1x1x8x32xf32> to vector<2x8x8x32xf32>
    %441 = arith.mulf %439, %440 : vector<2x8x8x32xf32>
    %442 = arith.addf %431, %441 : vector<2x8x8x32xf32>
    %cst_270 = arith.constant 0.000000e+00 : f32
    %443 = vector.broadcast %cst_270 : f32 to vector<2x8x8x32xf32>
    %444 = arith.maximumf %442, %443 : vector<2x8x8x32xf32>
    %445 = vector.shape_cast %444 : vector<2x8x8x32xf32> to vector<128x32xf32>
    %c0_271 = arith.constant 0 : index
    %c0_272 = arith.constant 0 : index
    %446 = vector.load %arg18[%c0_271, %c0_272] : memref<32x128xf32, #tpu.memory_space<vmem>>, vector<32x128xf32>
    %cst_273 = arith.constant dense<0.000000e+00> : vector<128x128xf32>
    %447 = tpu.matmul %445, %446, %cst_273 {dimension_numbers = #tpu.dot_dimension_numbers<[1], [0], [0], [1], [0, 0, 1, 1], [], []>} : vector<128x32xf32>, vector<32x128xf32>, vector<128x128xf32> -> vector<128x128xf32>
    %c0_274 = arith.constant 0 : index
    %c0_275 = arith.constant 0 : index
    %448 = vector.load %arg19[%c0_274, %c0_275] : memref<1x128xf32, #tpu.memory_space<vmem>>, vector<1x128xf32>
    %449 = vector.broadcast %448 : vector<1x128xf32> to vector<128x128xf32>
    %450 = arith.addf %447, %449 : vector<128x128xf32>
    %c0_276 = arith.constant 0 : index
    %c0_277 = arith.constant 0 : index
    %451 = vector.load %arg20[%c0_276, %c0_277] : memref<128x128xf32, #tpu.memory_space<vmem>>, vector<128x128xf32>
    tpu.vector_store %arg20[%c0_276, %c0_277], %450 {strides = array<i32>} : memref<128x128xf32, #tpu.memory_space<vmem>>, vector<128x128xf32>,
    %c0_278 = arith.constant 0 : index
    %c0_279 = arith.constant 0 : index
    %c0_280 = arith.constant 0 : index
    %c0_281 = arith.constant 0 : index
    %452 = vector.load %arg21[%c0_278, %c0_279, %c0_280, %c0_281] : memref<2x8x8x16xf32, #tpu.memory_space<vmem>>, vector<2x8x8x16xf32>
    tpu.vector_store %arg21[%c0_278, %c0_279, %c0_280, %c0_281], %345 {strides = array<i32>} : memref<2x8x8x16xf32, #tpu.memory_space<vmem>>, vector<2x8x8x16xf32>,
    %453 = vector.shape_cast %341 : vector<128x16xf32> to vector<2x8x8x16xf32>
    %c0_282 = arith.constant 0 : index
    %c0_283 = arith.constant 0 : index
    %c0_284 = arith.constant 0 : index
    %c0_285 = arith.constant 0 : index
    %454 = vector.load %arg22[%c0_282, %c0_283, %c0_284, %c0_285] : memref<2x8x8x16xf32, #tpu.memory_space<vmem>>, vector<2x8x8x16xf32>
    tpu.vector_store %arg22[%c0_282, %c0_283, %c0_284, %c0_285], %453 {strides = array<i32>} : memref<2x8x8x16xf32, #tpu.memory_space<vmem>>, vector<2x8x8x16xf32>,
    return
  }
}

</mosaic_0001>

<llo_original>
// kernel: mobile_vod_forward.1
$region0: #{mobile_vod_forward.1}
  #allocation0 [shape = 'u32[]', space=smem, size = 0x4, offset = 0x4, fixed_abs, tag = 'smem constant byte address 0x4 - core index']
  #allocation1 [shape = 'u32[144,128]{1,0:T(1,128)}', space=vmem, size = 0x12000, scoped, tag = 'internal scratch']
  #allocation2 [shape = 'f32[2,10,8,32]{3,2,1,0:T(8,128)}', space=vmem, size = 0x14000, scoped, tag = 'scratch operand']
  %s0 = inlined_call_operand.vmem [shape: f32[128,27], index: 0, kind: input, shape index: {}]
  %s1 = inlined_call_operand.vmem [shape: f32[2,8,8,16], index: 1, kind: input, shape index: {}, may-alias: {1,21}]
  %s2 = inlined_call_operand.vmem [shape: f32[2,8,8,16], index: 2, kind: input, shape index: {}, may-alias: {2,22}]
  %s3 = inlined_call_operand.vmem [shape: f32[27,16], index: 3, kind: input, shape index: {}]
  %s4 = inlined_call_operand.vmem [shape: f32[1,16], index: 4, kind: input, shape index: {}]
  %s5 = inlined_call_operand.vmem [shape: f32[9,8,16], index: 5, kind: input, shape index: {}]
  %s6 = inlined_call_operand.vmem [shape: f32[8,16], index: 6, kind: input, shape index: {}]
  %s7 = inlined_call_operand.vmem [shape: f32[16,32], index: 7, kind: input, shape index: {}]
  %s8 = inlined_call_operand.vmem [shape: f32[1,32], index: 8, kind: input, shape index: {}]
  %s9 = inlined_call_operand.vmem [shape: f32[9,8,32], index: 9, kind: input, shape index: {}]
  %s10 = inlined_call_operand.vmem [shape: f32[8,32], index: 10, kind: input, shape index: {}]
  %s11 = inlined_call_operand.vmem [shape: f32[32,16], index: 11, kind: input, shape index: {}]
  %s12 = inlined_call_operand.vmem [shape: f32[16,16], index: 12, kind: input, shape index: {}]
  %s13 = inlined_call_operand.vmem [shape: f32[1,16], index: 13, kind: input, shape index: {}]
  %s14 = inlined_call_operand.vmem [shape: f32[9,8,16], index: 14, kind: input, shape index: {}]
  %s15 = inlined_call_operand.vmem [shape: f32[16,64], index: 15, kind: input, shape index: {}]
  %s16 = inlined_call_operand.vmem [shape: f32[9,8,32], index: 16, kind: input, shape index: {}]
  %s17 = inlined_call_operand.vmem [shape: f32[8,32], index: 17, kind: input, shape index: {}]
  %s18 = inlined_call_operand.vmem [shape: f32[32,128], index: 18, kind: input, shape index: {}]
  %s19 = inlined_call_operand.vmem [shape: f32[1,128], index: 19, kind: input, shape index: {}]
  %s20 = inlined_call_operand.vmem [shape: f32[128,128], index: 20, kind: output, shape index: {0}]
  %s21 = inlined_call_operand.vmem [shape: f32[2,8,8,16], index: 21, kind: output, shape index: {1}, may-alias: {1,21}]
  %s22 = inlined_call_operand.vmem [shape: f32[2,8,8,16], index: 22, kind: output, shape index: {2}, may-alias: {2,22}]
  %23 = xla_tuple %s20, %s21, %s22
  %s24 = sld [smem:[#allocation0]]
  $region106: #{mobile_vod_forward.1} parent=0
    _
  %s26 = ssub.s32 1, %s24
  %s27 = scalar_select 0, %s26, %s24
  // Predicated region
  $region2: #{mobile_vod_forward.1} parent=0 // pred_check
    _
  $region3: #{mobile_vod_forward.1} parent=0 // pred_check_branch
    %29 = sbr.rel (0) target = $region5
  $region4: #{mobile_vod_forward.1} parent=0 // pred_region
    _
  $region5: #{mobile_vod_forward.1} parent=0 // pred_fallthru
    _
  // Predicated region
  $region6: #{mobile_vod_forward.1} parent=0 // pred_check
    _
  $region7: #{mobile_vod_forward.1} parent=0 // pred_check_branch
    %31 = sbr.rel (0) target = $region9
  $region8: #{mobile_vod_forward.1} parent=0 // pred_region
    _
  $region9: #{mobile_vod_forward.1} parent=0 // pred_fallthru
    _
  // Predicated region
  $region10: #{mobile_vod_forward.1} parent=0 // pred_check
    _
  $region11: #{mobile_vod_forward.1} parent=0 // pred_check_branch
    %33 = sbr.rel (0) target = $region13
  $region12: #{mobile_vod_forward.1} parent=0 // pred_region
    _
  $region13: #{mobile_vod_forward.1} parent=0 // pred_fallthru
    _
  // Predicated region
  $region14: #{mobile_vod_forward.1} parent=0 // pred_check
    _
  $region15: #{mobile_vod_forward.1} parent=0 // pred_check_branch
    %35 = sbr.rel (0) target = $region17
  $region16: #{mobile_vod_forward.1} parent=0 // pred_region
    _
  $region17: #{mobile_vod_forward.1} parent=0 // pred_fallthru
    _
  // Predicated region
  $region18: #{mobile_vod_forward.1} parent=0 // pred_check
    _
  $region19: #{mobile_vod_forward.1} parent=0 // pred_check_branch
    %37 = sbr.rel (0) target = $region21
  $region20: #{mobile_vod_forward.1} parent=0 // pred_region
    _
  $region21: #{mobile_vod_forward.1} parent=0 // pred_fallthru
    _
  // Predicated region
  $region22: #{mobile_vod_forward.1} parent=0 // pred_check
    _
  $region23: #{mobile_vod_forward.1} parent=0 // pred_check_branch
    %39 = sbr.rel (0) target = $region25
  $region24: #{mobile_vod_forward.1} parent=0 // pred_region
    _
  $region25: #{mobile_vod_forward.1} parent=0 // pred_fallthru
    _
  // Predicated region
  $region26: #{mobile_vod_forward.1} parent=0 // pred_check
    _
  $region27: #{mobile_vod_forward.1} parent=0 // pred_check_branch
    %41 = sbr.rel (0) target = $region29
  $region28: #{mobile_vod_forward.1} parent=0 // pred_region
    _
  $region29: #{mobile_vod_forward.1} parent=0 // pred_fallthru
    _
  // Predicated region
  $region30: #{mobile_vod_forward.1} parent=0 // pred_check
    _
  $region31: #{mobile_vod_forward.1} parent=0 // pred_check_branch
    %43 = sbr.rel (0) target = $region33
  $region32: #{mobile_vod_forward.1} parent=0 // pred_region
    _
  $region33: #{mobile_vod_forward.1} parent=0 // pred_fallthru
    _
  // Predicated region
  $region34: #{mobile_vod_forward.1} parent=0 // pred_check
    _
  $region35: #{mobile_vod_forward.1} parent=0 // pred_check_branch
    %45 = sbr.rel (0) target = $region37
  $region36: #{mobile_vod_forward.1} parent=0 // pred_region
    _
  $region37: #{mobile_vod_forward.1} parent=0 // pred_fallthru
    _
  // Predicated region
  $region38: #{mobile_vod_forward.1} parent=0 // pred_check
    _
  $region39: #{mobile_vod_forward.1} parent=0 // pred_check_branch
    %47 = sbr.rel (0) target = $region41
  $region40: #{mobile_vod_forward.1} parent=0 // pred_region
    _
  $region41: #{mobile_vod_forward.1} parent=0 // pred_fallthru
    _
  // Predicated region
  $region42: #{mobile_vod_forward.1} parent=0 // pred_check
    _
  $region43: #{mobile_vod_forward.1} parent=0 // pred_check_branch
    %49 = sbr.rel (0) target = $region45
  $region44: #{mobile_vod_forward.1} parent=0 // pred_region
    _
  $region45: #{mobile_vod_forward.1} parent=0 // pred_fallthru
    _
  // Predicated region
  $region46: #{mobile_vod_forward.1} parent=0 // pred_check
    _
  $region47: #{mobile_vod_forward.1} parent=0 // pred_check_branch
    %51 = sbr.rel (0) target = $region49
  $region48: #{mobile_vod_forward.1} parent=0 // pred_region
    _
  $region49: #{mobile_vod_forward.1} parent=0 // pred_fallthru
    _
  // Predicated region
  $region50: #{mobile_vod_forward.1} parent=0 // pred_check
    _
  $region51: #{mobile_vod_forward.1} parent=0 // pred_check_branch
    %53 = sbr.rel (0) target = $region53
  $region52: #{mobile_vod_forward.1} parent=0 // pred_region
    _
  $region53: #{mobile_vod_forward.1} parent=0 // pred_fallthru
    _
  // Predicated region
  $region54: #{mobile_vod_forward.1} parent=0 // pred_check
    _
  $region55: #{mobile_vod_forward.1} parent=0 // pred_check_branch
    %55 = sbr.rel (0) target = $region57
  $region56: #{mobile_vod_forward.1} parent=0 // pred_region
    _
  $region57: #{mobile_vod_forward.1} parent=0 // pred_fallthru
    _
  // Predicated region
  $region58: #{mobile_vod_forward.1} parent=0 // pred_check
    _
  $region59: #{mobile_vod_forward.1} parent=0 // pred_check_branch
    %57 = sbr.rel (0) target = $region61
  $region60: #{mobile_vod_forward.1} parent=0 // pred_region
    _
  $region61: #{mobile_vod_forward.1} parent=0 // pred_fallthru
    _
  // Predicated region
  $region62: #{mobile_vod_forward.1} parent=0 // pred_check
    _
  $region63: #{mobile_vod_forward.1} parent=0 // pred_check_branch
    %59 = sbr.rel (0) target = $region65
  $region64: #{mobile_vod_forward.1} parent=0 // pred_region
    _
  $region65: #{mobile_vod_forward.1} parent=0 // pred_fallthru
    _
  // Predicated region
  $region66: #{mobile_vod_forward.1} parent=0 // pred_check
    _
  $region67: #{mobile_vod_forward.1} parent=0 // pred_check_branch
    %61 = sbr.rel (0) target = $region69
  $region68: #{mobile_vod_forward.1} parent=0 // pred_region
    _
  $region69: #{mobile_vod_forward.1} parent=0 // pred_fallthru
    _
  // Predicated region
  $region70: #{mobile_vod_forward.1} parent=0 // pred_check
    _
  $region71: #{mobile_vod_forward.1} parent=0 // pred_check_branch
    %63 = sbr.rel (0) target = $region73
  $region72: #{mobile_vod_forward.1} parent=0 // pred_region
    _
  $region73: #{mobile_vod_forward.1} parent=0 // pred_fallthru
    _
  // Predicated region
  $region74: #{mobile_vod_forward.1} parent=0 // pred_check
    _
  $region75: #{mobile_vod_forward.1} parent=0 // pred_check_branch
    %65 = sbr.rel (0) target = $region77
  $region76: #{mobile_vod_forward.1} parent=0 // pred_region
    _
  $region77: #{mobile_vod_forward.1} parent=0 // pred_fallthru
    _
  // Predicated region
  $region78: #{mobile_vod_forward.1} parent=0 // pred_check
    _
  $region79: #{mobile_vod_forward.1} parent=0 // pred_check_branch
    %67 = sbr.rel (0) target = $region81
  $region80: #{mobile_vod_forward.1} parent=0 // pred_region
    _
  $region81: #{mobile_vod_forward.1} parent=0 // pred_fallthru
    _
  %vm68 = vcmask 261120
  %69 = vst.msk [vmem:[#allocation2] sm:$0xff] %vm68, 0.0
  %70 = vst.msk [vmem:[#allocation2 + $0x50] sm:$0xff] %vm68, 0.0
  %s71 = scalar_lea.vmem [#allocation2], 72
  %72 = vst.msk [vmem:[%s71] sm:$0xff] %vm68, 0.0
  %73 = vst.msk [vmem:[%s71 + $0x50] sm:$0xff] %vm68, 0.0
  %v74 = vld [vmem:[%s0] sm:$0xff]
  %v75 = vld [vmem:[%s0 + $0x8] sm:$0xff]
  %v76 = vld [vmem:[%s0 + $0x10] sm:$0xff]
  %v77 = vld [vmem:[%s0 + $0x18] sm:$0xff]
  %v78 = vld [vmem:[%s0 + $0x20] sm:$0xff]
  %v79 = vld [vmem:[%s0 + $0x28] sm:$0xff]
  %v80 = vld [vmem:[%s0 + $0x30] sm:$0xff]
  %v81 = vld [vmem:[%s0 + $0x38] sm:$0xff]
  %v82 = vld [vmem:[%s0 + $0x40] sm:$0xff]
  %v83 = vld [vmem:[%s0 + $0x48] sm:$0xff]
  %v84 = vld [vmem:[%s0 + $0x50] sm:$0xff]
  %v85 = vld [vmem:[%s0 + $0x58] sm:$0xff]
  %v86 = vld [vmem:[%s0 + $0x60] sm:$0xff]
  %v87 = vld [vmem:[%s0 + $0x68] sm:$0xff]
  %v88 = vld [vmem:[%s0 + $0x70] sm:$0xff]
  %v89 = vld [vmem:[%s0 + $0x78] sm:$0xff]
  %v90 = vld [vmem:[%s3] sm:$0xff]
  %v91 = vld [vmem:[%s3 + $0x8] sm:$0xff]
  %v92 = vld [vmem:[%s3 + $0x10] sm:$0xff]
  %v93 = vld [vmem:[%s3 + $0x18] sm:$0x7]
  %v94 = vld [vmem:[%s4] sm:$0x1]
  %v96 = vlaneseq
  %v97 = vshrl.u32 %v96, 7
  %v98 = vsub.s32 0, %v97
  %v99 = vrot.slane %v94, %v98
  %vm101 = vcmask 220160
  %v103 = vsel %vm101, %v74, 0
  %v106 = vsel %vm101, %v75, 0
  %v109 = vsel %vm101, %v76, 0
  %v112 = vsel %vm101, %v77, 0
  %v115 = vsel %vm101, %v78, 0
  %v118 = vsel %vm101, %v79, 0
  %v121 = vsel %vm101, %v80, 0
  %v124 = vsel %vm101, %v81, 0
  %v127 = vsel %vm101, %v82, 0
  %v130 = vsel %vm101, %v83, 0
  %v133 = vsel %vm101, %v84, 0
  %v136 = vsel %vm101, %v85, 0
  %v139 = vsel %vm101, %v86, 0
  %v142 = vsel %vm101, %v87, 0
  %v145 = vsel %vm101, %v88, 0
  %v148 = vsel %vm101, %v89, 0
  %vm150 = vcmask 1042432
  %v152 = vsel %vm150, %v93, 0
  %154 = vmatprep.subr.mxu0 0.0
  %155 = vmatpush1.msra.mxu0 0.0
  %156 = vmatprep.subr.mxu0 0.0
  %157 = vmatpush1.msra.mxu0 0.0
  %158 = vmatprep.subr.mxu0 0.0
  %159 = vmatpush1.msra.mxu0 0.0
  %160 = vmatprep.subr.mxu0 0.0
  %161 = vmatpush1.msra.mxu0 0.0
  %162 = vmatprep.subr.mxu0 0.0
  %163 = vmatpush1.msra.mxu0 0.0
  %164 = vmatprep.subr.mxu0 0.0
  %165 = vmatpush1.msra.mxu0 0.0
  %166 = vmatprep.subr.mxu0 0.0
  %167 = vmatpush1.msra.mxu0 0.0
  %168 = vmatprep.subr.mxu0 0.0
  %169 = vmatpush1.msra.mxu0 0.0
  %170 = vmatprep.subr.mxu0 0.0
  %171 = vmatpush1.msra.mxu0 0.0
  %172 = vmatprep.subr.mxu0 0.0
  %173 = vmatpush1.msra.mxu0 0.0
  %174 = vmatprep.subr.mxu0 0.0
  %175 = vmatpush1.msra.mxu0 0.0
  %176 = vmatprep.subr.mxu0 0.0
  %177 = vmatpush1.msra.mxu0 0.0
  %178 = vmatprep.subr.mxu0 0.0
  %179 = vmatpush1.msra.mxu0 %v152
  %180 = vmatprep.subr.mxu0 0.0
  %181 = vmatpush1.msra.mxu0 %v92
  %182 = vmatprep.subr.mxu0 0.0
  %183 = vmatpush1.msra.mxu0 %v91
  %184 = vmatprep.subr.mxu0 0.0
  %185 = vmatpush1.msra.mxu0 %v90
  %186 = vmatprep.subr.mxu0 0.0
  %187 = vmatpush2.msra.mxu0 0.0
  %188 = vmatprep.subr.mxu0 0.0
  %189 = vmatpush2.msra.mxu0 0.0
  %190 = vmatprep.subr.mxu0 0.0
  %191 = vmatpush2.msra.mxu0 0.0
  %192 = vmatprep.subr.mxu0 0.0
  %193 = vmatpush2.msra.mxu0 0.0
  %194 = vmatprep.subr.mxu0 0.0
  %195 = vmatpush2.msra.mxu0 0.0
  %196 = vmatprep.subr.mxu0 0.0
  %197 = vmatpush2.msra.mxu0 0.0
  %198 = vmatprep.subr.mxu0 0.0
  %199 = vmatpush2.msra.mxu0 0.0
  %200 = vmatprep.subr.mxu0 0.0
  %201 = vmatpush2.msra.mxu0 0.0
  %202 = vmatprep.subr.mxu0 0.0
  %203 = vmatpush2.msra.mxu0 0.0
  %204 = vmatprep.subr.mxu0 0.0
  %205 = vmatpush2.msra.mxu0 0.0
  %206 = vmatprep.subr.mxu0 0.0
  %207 = vmatpush2.msra.mxu0 0.0
  %208 = vmatprep.subr.mxu0 0.0
  %209 = vmatpush2.msra.mxu0 0.0
  %210 = vmatprep.subr.mxu0 0.0
  %211 = vmatpush2.msra.mxu0 0.0
  %212 = vmatprep.subr.mxu0 0.0
  %213 = vmatpush2.msra.mxu0 0.0
  %214 = vmatprep.subr.mxu0 0.0
  %215 = vmatpush2.msra.mxu0 0.0
  %216 = vmatprep.subr.mxu0 0.0
  %217 = vmatpush2.msra.mxu0 0.0
  %218 = vmatprep.mubr.f32.mxu0 0.0
  %219 = vmatmul.mubr.f32.gmra.mxu0 %v103
  %v220 = vpop.f32.mrf.mxu0
  %v221 = vadd.f32 %v99, %v220
  %v222 = vpop.f32.mrf.mxu0
  %223 = vmatprep.mubr.f32.mxu0 0.0
  %224 = vmatmul.mubr.f32.gmra.mxu0 %v106
  %v225 = vpop.f32.mrf.mxu0
  %v226 = vadd.f32 %v99, %v225
  %v227 = vpop.f32.mrf.mxu0
  %228 = vmatprep.mubr.f32.mxu0 0.0
  %229 = vmatmul.mubr.f32.gmra.mxu0 %v109
  %v230 = vpop.f32.mrf.mxu0
  %v231 = vadd.f32 %v99, %v230
  %v232 = vpop.f32.mrf.mxu0
  %233 = vmatprep.mubr.f32.mxu0 0.0
  %234 = vmatmul.mubr.f32.gmra.mxu0 %v112
  %v235 = vpop.f32.mrf.mxu0
  %v236 = vadd.f32 %v99, %v235
  %v237 = vpop.f32.mrf.mxu0
  %238 = vmatprep.mubr.f32.mxu0 0.0
  %239 = vmatmul.mubr.f32.gmra.mxu0 %v115
  %v240 = vpop.f32.mrf.mxu0
  %v241 = vadd.f32 %v99, %v240
  %v242 = vpop.f32.mrf.mxu0
  %243 = vmatprep.mubr.f32.mxu0 0.0
  %244 = vmatmul.mubr.f32.gmra.mxu0 %v118
  %v245 = vpop.f32.mrf.mxu0
  %v246 = vadd.f32 %v99, %v245
  %v247 = vpop.f32.mrf.mxu0
  %248 = vmatprep.mubr.f32.mxu0 0.0
  %249 = vmatmul.mubr.f32.gmra.mxu0 %v121
  %v250 = vpop.f32.mrf.mxu0
  %v251 = vadd.f32 %v99, %v250
  %v252 = vpop.f32.mrf.mxu0
  %253 = vmatprep.mubr.f32.mxu0 0.0
  %254 = vmatmul.mubr.f32.gmra.mxu0 %v124
  %v255 = vpop.f32.mrf.mxu0
  %v256 = vadd.f32 %v99, %v255
  %v257 = vpop.f32.mrf.mxu0
  %258 = vmatprep.mubr.f32.mxu0 0.0
  %259 = vmatmul.mubr.f32.gmra.mxu0 %v127
  %v260 = vpop.f32.mrf.mxu0
  %v261 = vadd.f32 %v99, %v260
  %v262 = vpop.f32.mrf.mxu0
  %263 = vmatprep.mubr.f32.mxu0 0.0
  %264 = vmatmul.mubr.f32.gmra.mxu0 %v130
  %v265 = vpop.f32.mrf.mxu0
  %v266 = vadd.f32 %v99, %v265
  %v267 = vpop.f32.mrf.mxu0
  %268 = vmatprep.mubr.f32.mxu0 0.0
  %269 = vmatmul.mubr.f32.gmra.mxu0 %v133
  %v270 = vpop.f32.mrf.mxu0
  %v271 = vadd.f32 %v99, %v270
  %v272 = vpop.f32.mrf.mxu0
  %273 = vmatprep.mubr.f32.mxu0 0.0
  %274 = vmatmul.mubr.f32.gmra.mxu0 %v136
  %v275 = vpop.f32.mrf.mxu0
  %v276 = vadd.f32 %v99, %v275
  %v277 = vpop.f32.mrf.mxu0
  %278 = vmatprep.mubr.f32.mxu0 0.0
  %279 = vmatmul.mubr.f32.gmra.mxu0 %v139
  %v280 = vpop.f32.mrf.mxu0
  %v281 = vadd.f32 %v99, %v280
  %v282 = vpop.f32.mrf.mxu0
  %283 = vmatprep.mubr.f32.mxu0 0.0
  %284 = vmatmul.mubr.f32.gmra.mxu0 %v142
  %v285 = vpop.f32.mrf.mxu0
  %v286 = vadd.f32 %v99, %v285
  %v287 = vpop.f32.mrf.mxu0
  %288 = vmatprep.mubr.f32.mxu0 0.0
  %289 = vmatmul.mubr.f32.gmra.mxu0 %v145
  %v290 = vpop.f32.mrf.mxu0
  %v291 = vadd.f32 %v99, %v290
  %v292 = vpop.f32.mrf.mxu0
  %293 = vmatprep.mubr.f32.mxu0 0.0
  %294 = vmatmul.mubr.f32.gmra.mxu0 %v148
  %v295 = vpop.f32.mrf.mxu0
  %v296 = vadd.f32 %v99, %v295
  %v297 = vpop.f32.mrf.mxu0
  %298 = vdwg.mxu0
  %v299 = vmax.f32 %v221, 0.0
  %v300 = vmax.f32 %v226, 0.0
  %v301 = vmax.f32 %v231, 0.0
  %v302 = vmax.f32 %v236, 0.0
  %v303 = vmax.f32 %v241, 0.0
  %v304 = vmax.f32 %v246, 0.0
  %v305 = vmax.f32 %v251, 0.0
  %v306 = vmax.f32 %v256, 0.0
  %v307 = vmax.f32 %v261, 0.0
  %v308 = vmax.f32 %v266, 0.0
  %v309 = vmax.f32 %v271, 0.0
  %v310 = vmax.f32 %v276, 0.0
  %v311 = vmax.f32 %v281, 0.0
  %v312 = vmax.f32 %v286, 0.0
  %v313 = vmax.f32 %v291, 0.0
  %v314 = vmax.f32 %v296, 0.0
  %s315 = scalar_lea.vmem [#allocation2], 8
  %vm316 = vcmask 130048
  %317 = vst.msk [vmem:[%s315] sm:$0xff] %vm316, %v299
  %318 = vst.msk [vmem:[%s315 + $0x8] sm:$0xff] %vm316, %v300
  %319 = vst.msk [vmem:[%s315 + $0x10] sm:$0xff] %vm316, %v301
  %320 = vst.msk [vmem:[%s315 + $0x18] sm:$0xff] %vm316, %v302
  %321 = vst.msk [vmem:[%s315 + $0x20] sm:$0xff] %vm316, %v303
  %322 = vst.msk [vmem:[%s315 + $0x28] sm:$0xff] %vm316, %v304
  %323 = vst.msk [vmem:[%s315 + $0x30] sm:$0xff] %vm316, %v305
  %324 = vst.msk [vmem:[%s315 + $0x38] sm:$0xff] %vm316, %v306
  %325 = vst.msk [vmem:[%s315 + $0x50] sm:$0xff] %vm316, %v307
  %326 = vst.msk [vmem:[%s315 + $0x58] sm:$0xff] %vm316, %v308
  %327 = vst.msk [vmem:[%s315 + $0x60] sm:$0xff] %vm316, %v309
  %328 = vst.msk [vmem:[%s315 + $0x68] sm:$0xff] %vm316, %v310
  %329 = vst.msk [vmem:[%s315 + $0x70] sm:$0xff] %vm316, %v311
  %330 = vst.msk [vmem:[%s315 + $0x78] sm:$0xff] %vm316, %v312
  %331 = vst.msk [vmem:[%s315 + $0x80] sm:$0xff] %vm316, %v313
  %332 = vst.msk [vmem:[%s315 + $0x88] sm:$0xff] %vm316, %v314
  %v333 = vlaneseq
  %v334 = vshrl.u32 %v333, 7
  %vm335 = vcmp.gt.s32.totalorder %v334, 0
  %vm336 = vcmp.lt.s32.totalorder %v334, 7
  %v337 = vld [vmem:[%s6] sm:$0xff]
  %v338 = vld [vmem:[#allocation2] sm:$0xff]
  %v339 = vld [vmem:[#allocation2 + $0x8] sm:$0xff]
  %v340 = vld [vmem:[#allocation2 + $0x10] sm:$0xff]
  %v341 = vld [vmem:[#allocation2 + $0x18] sm:$0xff]
  %v342 = vld [vmem:[#allocation2 + $0x20] sm:$0xff]
  %v343 = vld [vmem:[#allocation2 + $0x28] sm:$0xff]
  %v344 = vld [vmem:[#allocation2 + $0x30] sm:$0xff]
  %v345 = vld [vmem:[#allocation2 + $0x38] sm:$0xff]
  %v346 = vld [vmem:[#allocation2 + $0x50] sm:$0xff]
  %v347 = vld [vmem:[#allocation2 + $0x58] sm:$0xff]
  %v348 = vld [vmem:[#allocation2 + $0x60] sm:$0xff]
  %v349 = vld [vmem:[#allocation2 + $0x68] sm:$0xff]
  %v350 = vld [vmem:[#allocation2 + $0x70] sm:$0xff]
  %v351 = vld [vmem:[#allocation2 + $0x78] sm:$0xff]
  %v352 = vld [vmem:[#allocation2 + $0x80] sm:$0xff]
  %v353 = vld [vmem:[#allocation2 + $0x88] sm:$0xff]
  %v354 = vld [vmem:[%s5] sm:$0xff]
  %v355 = vrot.slane %v338, 7
  %v356 = vrot.slane %v339, 7
  %v357 = vrot.slane %v340, 7
  %v358 = vrot.slane %v341, 7
  %v359 = vrot.slane %v342, 7
  %v360 = vrot.slane %v343, 7
  %v361 = vrot.slane %v344, 7
  %v362 = vrot.slane %v345, 7
  %v363 = vrot.slane %v346, 7
  %v364 = vrot.slane %v347, 7
  %v365 = vrot.slane %v348, 7
  %v366 = vrot.slane %v349, 7
  %v367 = vrot.slane %v350, 7
  %v368 = vrot.slane %v351, 7
  %v369 = vrot.slane %v352, 7
  %v370 = vrot.slane %v353, 7
  %v371 = vsel %vm335, 1, 0
  %vm372 = vcmp.eq.s32.totalorder %v371, 1
  %v373 = vsel %vm372, %v355, 0.0
  %v374 = vsel %vm372, %v356, 0.0
  %v375 = vsel %vm372, %v357, 0.0
  %v376 = vsel %vm372, %v358, 0.0
  %v377 = vsel %vm372, %v359, 0.0
  %v378 = vsel %vm372, %v360, 0.0
  %v379 = vsel %vm372, %v361, 0.0
  %v380 = vsel %vm372, %v362, 0.0
  %v381 = vsel %vm372, %v363, 0.0
  %v382 = vsel %vm372, %v364, 0.0
  %v383 = vsel %vm372, %v365, 0.0
  %v384 = vsel %vm372, %v366, 0.0
  %v385 = vsel %vm372, %v367, 0.0
  %v386 = vsel %vm372, %v368, 0.0
  %v387 = vsel %vm372, %v369, 0.0
  %v388 = vsel %vm372, %v370, 0.0
  %v389 = vmul.f32 %v373, %v354
  %v390 = vmul.f32 %v374, %v354
  %v391 = vmul.f32 %v375, %v354
  %v392 = vmul.f32 %v376, %v354
  %v393 = vmul.f32 %v377, %v354
  %v394 = vmul.f32 %v378, %v354
  %v395 = vmul.f32 %v379, %v354
  %v396 = vmul.f32 %v380, %v354
  %v397 = vmul.f32 %v381, %v354
  %v398 = vmul.f32 %v382, %v354
  %v399 = vmul.f32 %v383, %v354
  %v400 = vmul.f32 %v384, %v354
  %v401 = vmul.f32 %v385, %v354
  %v402 = vmul.f32 %v386, %v354
  %v403 = vmul.f32 %v387, %v354
  %v404 = vmul.f32 %v388, %v354
  %v405 = vadd.f32 %v337, %v389
  %v406 = vadd.f32 %v337, %v390
  %v407 = vadd.f32 %v337, %v391
  %v408 = vadd.f32 %v337, %v392
  %v409 = vadd.f32 %v337, %v393
  %v410 = vadd.f32 %v337, %v394
  %v411 = vadd.f32 %v337, %v395
  %v412 = vadd.f32 %v337, %v396
  %v413 = vadd.f32 %v337, %v397
  %v414 = vadd.f32 %v337, %v398
  %v415 = vadd.f32 %v337, %v399
  %v416 = vadd.f32 %v337, %v400
  %v417 = vadd.f32 %v337, %v401
  %v418 = vadd.f32 %v337, %v402
  %v419 = vadd.f32 %v337, %v403
  %v420 = vadd.f32 %v337, %v404
  %s421 = scalar_lea.vmem %s5, 8
  %v422 = vld [vmem:[%s421] sm:$0xff]
  %v423 = vmul.f32 %v338, %v422
  %v424 = vmul.f32 %v339, %v422
  %v425 = vmul.f32 %v340, %v422
  %v426 = vmul.f32 %v341, %v422
  %v427 = vmul.f32 %v342, %v422
  %v428 = vmul.f32 %v343, %v422
  %v429 = vmul.f32 %v344, %v422
  %v430 = vmul.f32 %v345, %v422
  %v431 = vmul.f32 %v346, %v422
  %v432 = vmul.f32 %v347, %v422
  %v433 = vmul.f32 %v348, %v422
  %v434 = vmul.f32 %v349, %v422
  %v435 = vmul.f32 %v350, %v422
  %v436 = vmul.f32 %v351, %v422
  %v437 = vmul.f32 %v352, %v422
  %v438 = vmul.f32 %v353, %v422
  %v439 = vadd.f32 %v405, %v423
  %v440 = vadd.f32 %v406, %v424
  %v441 = vadd.f32 %v407, %v425
  %v442 = vadd.f32 %v408, %v426
  %v443 = vadd.f32 %v409, %v427
  %v444 = vadd.f32 %v410, %v428
  %v445 = vadd.f32 %v411, %v429
  %v446 = vadd.f32 %v412, %v430
  %v447 = vadd.f32 %v413, %v431
  %v448 = vadd.f32 %v414, %v432
  %v449 = vadd.f32 %v415, %v433
  %v450 = vadd.f32 %v416, %v434
  %v451 = vadd.f32 %v417, %v435
  %v452 = vadd.f32 %v418, %v436
  %v453 = vadd.f32 %v419, %v437
  %v454 = vadd.f32 %v420, %v438
  %s455 = scalar_lea.vmem %s5, 16
  %v456 = vld [vmem:[%s455] sm:$0xff]
  %v457 = vrot.slane %v338, 1
  %v458 = vrot.slane %v339, 1
  %v459 = vrot.slane %v340, 1
  %v460 = vrot.slane %v341, 1
  %v461 = vrot.slane %v342, 1
  %v462 = vrot.slane %v343, 1
  %v463 = vrot.slane %v344, 1
  %v464 = vrot.slane %v345, 1
  %v465 = vrot.slane %v346, 1
  %v466 = vrot.slane %v347, 1
  %v467 = vrot.slane %v348, 1
  %v468 = vrot.slane %v349, 1
  %v469 = vrot.slane %v350, 1
  %v470 = vrot.slane %v351, 1
  %v471 = vrot.slane %v352, 1
  %v472 = vrot.slane %v353, 1
  %v473 = vsel %vm336, 1, 0
  %vm474 = vcmp.eq.s32.totalorder %v473, 1
  %v475 = vsel %vm474, %v457, 0.0
  %v476 = vsel %vm474, %v458, 0.0
  %v477 = vsel %vm474, %v459, 0.0
  %v478 = vsel %vm474, %v460, 0.0
  %v479 = vsel %vm474, %v461, 0.0
  %v480 = vsel %vm474, %v462, 0.0
  %v481 = vsel %vm474, %v463, 0.0
  %v482 = vsel %vm474, %v464, 0.0
  %v483 = vsel %vm474, %v465, 0.0
  %v484 = vsel %vm474, %v466, 0.0
  %v485 = vsel %vm474, %v467, 0.0
  %v486 = vsel %vm474, %v468, 0.0
  %v487 = vsel %vm474, %v469, 0.0
  %v488 = vsel %vm474, %v470, 0.0
  %v489 = vsel %vm474, %v471, 0.0
  %v490 = vsel %vm474, %v472, 0.0
  %v491 = vmul.f32 %v475, %v456
  %v492 = vmul.f32 %v476, %v456
  %v493 = vmul.f32 %v477, %v456
  %v494 = vmul.f32 %v478, %v456
  %v495 = vmul.f32 %v479, %v456
  %v496 = vmul.f32 %v480, %v456
  %v497 = vmul.f32 %v481, %v456
  %v498 = vmul.f32 %v482, %v456
  %v499 = vmul.f32 %v483, %v456
  %v500 = vmul.f32 %v484, %v456
  %v501 = vmul.f32 %v485, %v456
  %v502 = vmul.f32 %v486, %v456
  %v503 = vmul.f32 %v487, %v456
  %v504 = vmul.f32 %v488, %v456
  %v505 = vmul.f32 %v489, %v456
  %v506 = vmul.f32 %v490, %v456
  %v507 = vadd.f32 %v439, %v491
  %v508 = vadd.f32 %v440, %v492
  %v509 = vadd.f32 %v441, %v493
  %v510 = vadd.f32 %v442, %v494
  %v511 = vadd.f32 %v443, %v495
  %v512 = vadd.f32 %v444, %v496
  %v513 = vadd.f32 %v445, %v497
  %v514 = vadd.f32 %v446, %v498
  %v515 = vadd.f32 %v447, %v499
  %v516 = vadd.f32 %v448, %v500
  %v517 = vadd.f32 %v449, %v501
  %v518 = vadd.f32 %v450, %v502
  %v519 = vadd.f32 %v451, %v503
  %v520 = vadd.f32 %v452, %v504
  %v521 = vadd.f32 %v453, %v505
  %v522 = vadd.f32 %v454, %v506
  %v523 = vld [vmem:[%s315] sm:$0xff]
  %v524 = vld [vmem:[%s315 + $0x8] sm:$0xff]
  %v525 = vld [vmem:[%s315 + $0x10] sm:$0xff]
  %v526 = vld [vmem:[%s315 + $0x18] sm:$0xff]
  %v527 = vld [vmem:[%s315 + $0x20] sm:$0xff]
  %v528 = vld [vmem:[%s315 + $0x28] sm:$0xff]
  %v529 = vld [vmem:[%s315 + $0x30] sm:$0xff]
  %v530 = vld [vmem:[%s315 + $0x38] sm:$0xff]
  %v531 = vld [vmem:[%s315 + $0x50] sm:$0xff]
  %v532 = vld [vmem:[%s315 + $0x58] sm:$0xff]
  %v533 = vld [vmem:[%s315 + $0x60] sm:$0xff]
  %v534 = vld [vmem:[%s315 + $0x68] sm:$0xff]
  %v535 = vld [vmem:[%s315 + $0x70] sm:$0xff]
  %v536 = vld [vmem:[%s315 + $0x78] sm:$0xff]
  %v537 = vld [vmem:[%s315 + $0x80] sm:$0xff]
  %v538 = vld [vmem:[%s315 + $0x88] sm:$0xff]
  %s539 = scalar_lea.vmem %s5, 24
  %v540 = vld [vmem:[%s539] sm:$0xff]
  %v541 = vrot.slane %v523, 7
  %v542 = vrot.slane %v524, 7
  %v543 = vrot.slane %v525, 7
  %v544 = vrot.slane %v526, 7
  %v545 = vrot.slane %v527, 7
  %v546 = vrot.slane %v528, 7
  %v547 = vrot.slane %v529, 7
  %v548 = vrot.slane %v530, 7
  %v549 = vrot.slane %v531, 7
  %v550 = vrot.slane %v532, 7
  %v551 = vrot.slane %v533, 7
  %v552 = vrot.slane %v534, 7
  %v553 = vrot.slane %v535, 7
  %v554 = vrot.slane %v536, 7
  %v555 = vrot.slane %v537, 7
  %v556 = vrot.slane %v538, 7
  %v557 = vsel %vm372, %v541, 0.0
  %v558 = vsel %vm372, %v542, 0.0
  %v559 = vsel %vm372, %v543, 0.0
  %v560 = vsel %vm372, %v544, 0.0
  %v561 = vsel %vm372, %v545, 0.0
  %v562 = vsel %vm372, %v546, 0.0
  %v563 = vsel %vm372, %v547, 0.0
  %v564 = vsel %vm372, %v548, 0.0
  %v565 = vsel %vm372, %v549, 0.0
  %v566 = vsel %vm372, %v550, 0.0
  %v567 = vsel %vm372, %v551, 0.0
  %v568 = vsel %vm372, %v552, 0.0
  %v569 = vsel %vm372, %v553, 0.0
  %v570 = vsel %vm372, %v554, 0.0
  %v571 = vsel %vm372, %v555, 0.0
  %v572 = vsel %vm372, %v556, 0.0
  %v573 = vmul.f32 %v557, %v540
  %v574 = vmul.f32 %v558, %v540
  %v575 = vmul.f32 %v559, %v540
  %v576 = vmul.f32 %v560, %v540
  %v577 = vmul.f32 %v561, %v540
  %v578 = vmul.f32 %v562, %v540
  %v579 = vmul.f32 %v563, %v540
  %v580 = vmul.f32 %v564, %v540
  %v581 = vmul.f32 %v565, %v540
  %v582 = vmul.f32 %v566, %v540
  %v583 = vmul.f32 %v567, %v540
  %v584 = vmul.f32 %v568, %v540
  %v585 = vmul.f32 %v569, %v540
  %v586 = vmul.f32 %v570, %v540
  %v587 = vmul.f32 %v571, %v540
  %v588 = vmul.f32 %v572, %v540
  %v589 = vadd.f32 %v507, %v573
  %v590 = vadd.f32 %v508, %v574
  %v591 = vadd.f32 %v509, %v575
  %v592 = vadd.f32 %v510, %v576
  %v593 = vadd.f32 %v511, %v577
  %v594 = vadd.f32 %v512, %v578
  %v595 = vadd.f32 %v513, %v579
  %v596 = vadd.f32 %v514, %v580
  %v597 = vadd.f32 %v515, %v581
  %v598 = vadd.f32 %v516, %v582
  %v599 = vadd.f32 %v517, %v583
  %v600 = vadd.f32 %v518, %v584
  %v601 = vadd.f32 %v519, %v585
  %v602 = vadd.f32 %v520, %v586
  %v603 = vadd.f32 %v521, %v587
  %v604 = vadd.f32 %v522, %v588
  %s605 = scalar_lea.vmem %s5, 32
  %v606 = vld [vmem:[%s605] sm:$0xff]
  %v607 = vmul.f32 %v523, %v606
  %v608 = vmul.f32 %v524, %v606
  %v609 = vmul.f32 %v525, %v606
  %v610 = vmul.f32 %v526, %v606
  %v611 = vmul.f32 %v527, %v606
  %v612 = vmul.f32 %v528, %v606
  %v613 = vmul.f32 %v529, %v606
  %v614 = vmul.f32 %v530, %v606
  %v615 = vmul.f32 %v531, %v606
  %v616 = vmul.f32 %v532, %v606
  %v617 = vmul.f32 %v533, %v606
  %v618 = vmul.f32 %v534, %v606
  %v619 = vmul.f32 %v535, %v606
  %v620 = vmul.f32 %v536, %v606
  %v621 = vmul.f32 %v537, %v606
  %v622 = vmul.f32 %v538, %v606
  %v623 = vadd.f32 %v589, %v607
  %v624 = vadd.f32 %v590, %v608
  %v625 = vadd.f32 %v591, %v609
  %v626 = vadd.f32 %v592, %v610
  %v627 = vadd.f32 %v593, %v611
  %v628 = vadd.f32 %v594, %v612
  %v629 = vadd.f32 %v595, %v613
  %v630 = vadd.f32 %v596, %v614
  %v631 = vadd.f32 %v597, %v615
  %v632 = vadd.f32 %v598, %v616
  %v633 = vadd.f32 %v599, %v617
  %v634 = vadd.f32 %v600, %v618
  %v635 = vadd.f32 %v601, %v619
  %v636 = vadd.f32 %v602, %v620
  %v637 = vadd.f32 %v603, %v621
  %v638 = vadd.f32 %v604, %v622
  %s639 = scalar_lea.vmem %s5, 40
  %v640 = vld [vmem:[%s639] sm:$0xff]
  %v641 = vrot.slane %v523, 1
  %v642 = vrot.slane %v524, 1
  %v643 = vrot.slane %v525, 1
  %v644 = vrot.slane %v526, 1
  %v645 = vrot.slane %v527, 1
  %v646 = vrot.slane %v528, 1
  %v647 = vrot.slane %v529, 1
  %v648 = vrot.slane %v530, 1
  %v649 = vrot.slane %v531, 1
  %v650 = vrot.slane %v532, 1
  %v651 = vrot.slane %v533, 1
  %v652 = vrot.slane %v534, 1
  %v653 = vrot.slane %v535, 1
  %v654 = vrot.slane %v536, 1
  %v655 = vrot.slane %v537, 1
  %v656 = vrot.slane %v538, 1
  %v657 = vsel %vm474, %v641, 0.0
  %v658 = vsel %vm474, %v642, 0.0
  %v659 = vsel %vm474, %v643, 0.0
  %v660 = vsel %vm474, %v644, 0.0
  %v661 = vsel %vm474, %v645, 0.0
  %v662 = vsel %vm474, %v646, 0.0
  %v663 = vsel %vm474, %v647, 0.0
  %v664 = vsel %vm474, %v648, 0.0
  %v665 = vsel %vm474, %v649, 0.0
  %v666 = vsel %vm474, %v650, 0.0
  %v667 = vsel %vm474, %v651, 0.0
  %v668 = vsel %vm474, %v652, 0.0
  %v669 = vsel %vm474, %v653, 0.0
  %v670 = vsel %vm474, %v654, 0.0
  %v671 = vsel %vm474, %v655, 0.0
  %v672 = vsel %vm474, %v656, 0.0
  %v673 = vmul.f32 %v657, %v640
  %v674 = vmul.f32 %v658, %v640
  %v675 = vmul.f32 %v659, %v640
  %v676 = vmul.f32 %v660, %v640
  %v677 = vmul.f32 %v661, %v640
  %v678 = vmul.f32 %v662, %v640
  %v679 = vmul.f32 %v663, %v640
  %v680 = vmul.f32 %v664, %v640
  %v681 = vmul.f32 %v665, %v640
  %v682 = vmul.f32 %v666, %v640
  %v683 = vmul.f32 %v667, %v640
  %v684 = vmul.f32 %v668, %v640
  %v685 = vmul.f32 %v669, %v640
  %v686 = vmul.f32 %v670, %v640
  %v687 = vmul.f32 %v671, %v640
  %v688 = vmul.f32 %v672, %v640
  %v689 = vadd.f32 %v623, %v673
  %v690 = vadd.f32 %v624, %v674
  %v691 = vadd.f32 %v625, %v675
  %v692 = vadd.f32 %v626, %v676
  %v693 = vadd.f32 %v627, %v677
  %v694 = vadd.f32 %v628, %v678
  %v695 = vadd.f32 %v629, %v679
  %v696 = vadd.f32 %v630, %v680
  %v697 = vadd.f32 %v631, %v681
  %v698 = vadd.f32 %v632, %v682
  %v699 = vadd.f32 %v633, %v683
  %v700 = vadd.f32 %v634, %v684
  %v701 = vadd.f32 %v635, %v685
  %v702 = vadd.f32 %v636, %v686
  %v703 = vadd.f32 %v637, %v687
  %v704 = vadd.f32 %v638, %v688
  %s705 = scalar_lea.vmem [#allocation2], 16
  %v706 = vld [vmem:[%s705] sm:$0xff]
  %v707 = vld [vmem:[%s705 + $0x8] sm:$0xff]
  %v708 = vld [vmem:[%s705 + $0x10] sm:$0xff]
  %v709 = vld [vmem:[%s705 + $0x18] sm:$0xff]
  %v710 = vld [vmem:[%s705 + $0x20] sm:$0xff]
  %v711 = vld [vmem:[%s705 + $0x28] sm:$0xff]
  %v712 = vld [vmem:[%s705 + $0x30] sm:$0xff]
  %v713 = vld [vmem:[%s705 + $0x38] sm:$0xff]
  %v714 = vld [vmem:[%s705 + $0x50] sm:$0xff]
  %v715 = vld [vmem:[%s705 + $0x58] sm:$0xff]
  %v716 = vld [vmem:[%s705 + $0x60] sm:$0xff]
  %v717 = vld [vmem:[%s705 + $0x68] sm:$0xff]
  %v718 = vld [vmem:[%s705 + $0x70] sm:$0xff]
  %v719 = vld [vmem:[%s705 + $0x78] sm:$0xff]
  %v720 = vld [vmem:[%s705 + $0x80] sm:$0xff]
  %v721 = vld [vmem:[%s705 + $0x88] sm:$0xff]
  %s722 = scalar_lea.vmem %s5, 48
  %v723 = vld [vmem:[%s722] sm:$0xff]
  %v724 = vrot.slane %v706, 7
  %v725 = vrot.slane %v707, 7
  %v726 = vrot.slane %v708, 7
  %v727 = vrot.slane %v709, 7
  %v728 = vrot.slane %v710, 7
  %v729 = vrot.slane %v711, 7
  %v730 = vrot.slane %v712, 7
  %v731 = vrot.slane %v713, 7
  %v732 = vrot.slane %v714, 7
  %v733 = vrot.slane %v715, 7
  %v734 = vrot.slane %v716, 7
  %v735 = vrot.slane %v717, 7
  %v736 = vrot.slane %v718, 7
  %v737 = vrot.slane %v719, 7
  %v738 = vrot.slane %v720, 7
  %v739 = vrot.slane %v721, 7
  %v740 = vsel %vm372, %v724, 0.0
  %v741 = vsel %vm372, %v725, 0.0
  %v742 = vsel %vm372, %v726, 0.0
  %v743 = vsel %vm372, %v727, 0.0
  %v744 = vsel %vm372, %v728, 0.0
  %v745 = vsel %vm372, %v729, 0.0
  %v746 = vsel %vm372, %v730, 0.0
  %v747 = vsel %vm372, %v731, 0.0
  %v748 = vsel %vm372, %v732, 0.0
  %v749 = vsel %vm372, %v733, 0.0
  %v750 = vsel %vm372, %v734, 0.0
  %v751 = vsel %vm372, %v735, 0.0
  %v752 = vsel %vm372, %v736, 0.0
  %v753 = vsel %vm372, %v737, 0.0
  %v754 = vsel %vm372, %v738, 0.0
  %v755 = vsel %vm372, %v739, 0.0
  %v756 = vmul.f32 %v740, %v723
  %v757 = vmul.f32 %v741, %v723
  %v758 = vmul.f32 %v742, %v723
  %v759 = vmul.f32 %v743, %v723
  %v760 = vmul.f32 %v744, %v723
  %v761 = vmul.f32 %v745, %v723
  %v762 = vmul.f32 %v746, %v723
  %v763 = vmul.f32 %v747, %v723
  %v764 = vmul.f32 %v748, %v723
  %v765 = vmul.f32 %v749, %v723
  %v766 = vmul.f32 %v750, %v723
  %v767 = vmul.f32 %v751, %v723
  %v768 = vmul.f32 %v752, %v723
  %v769 = vmul.f32 %v753, %v723
  %v770 = vmul.f32 %v754, %v723
  %v771 = vmul.f32 %v755, %v723
  %v772 = vadd.f32 %v689, %v756
  %v773 = vadd.f32 %v690, %v757
  %v774 = vadd.f32 %v691, %v758
  %v775 = vadd.f32 %v692, %v759
  %v776 = vadd.f32 %v693, %v760
  %v777 = vadd.f32 %v694, %v761
  %v778 = vadd.f32 %v695, %v762
  %v779 = vadd.f32 %v696, %v763
  %v780 = vadd.f32 %v697, %v764
  %v781 = vadd.f32 %v698, %v765
  %v782 = vadd.f32 %v699, %v766
  %v783 = vadd.f32 %v700, %v767
  %v784 = vadd.f32 %v701, %v768
  %v785 = vadd.f32 %v702, %v769
  %v786 = vadd.f32 %v703, %v770
  %v787 = vadd.f32 %v704, %v771
  %s788 = scalar_lea.vmem %s5, 56
  %v789 = vld [vmem:[%s788] sm:$0xff]
  %v790 = vmul.f32 %v706, %v789
  %v791 = vmul.f32 %v707, %v789
  %v792 = vmul.f32 %v708, %v789
  %v793 = vmul.f32 %v709, %v789
  %v794 = vmul.f32 %v710, %v789
  %v795 = vmul.f32 %v711, %v789
  %v796 = vmul.f32 %v712, %v789
  %v797 = vmul.f32 %v713, %v789
  %v798 = vmul.f32 %v714, %v789
  %v799 = vmul.f32 %v715, %v789
  %v800 = vmul.f32 %v716, %v789
  %v801 = vmul.f32 %v717, %v789
  %v802 = vmul.f32 %v718, %v789
  %v803 = vmul.f32 %v719, %v789
  %v804 = vmul.f32 %v720, %v789
  %v805 = vmul.f32 %v721, %v789
  %v806 = vadd.f32 %v772, %v790
  %v807 = vadd.f32 %v773, %v791
  %v808 = vadd.f32 %v774, %v792
  %v809 = vadd.f32 %v775, %v793
  %v810 = vadd.f32 %v776, %v794
  %v811 = vadd.f32 %v777, %v795
  %v812 = vadd.f32 %v778, %v796
  %v813 = vadd.f32 %v779, %v797
  %v814 = vadd.f32 %v780, %v798
  %v815 = vadd.f32 %v781, %v799
  %v816 = vadd.f32 %v782, %v800
  %v817 = vadd.f32 %v783, %v801
  %v818 = vadd.f32 %v784, %v802
  %v819 = vadd.f32 %v785, %v803
  %v820 = vadd.f32 %v786, %v804
  %v821 = vadd.f32 %v787, %v805
  %s822 = scalar_lea.vmem %s5, 64
  %v823 = vld [vmem:[%s822] sm:$0xff]
  %v824 = vrot.slane %v706, 1
  %v825 = vrot.slane %v707, 1
  %v826 = vrot.slane %v708, 1
  %v827 = vrot.slane %v709, 1
  %v828 = vrot.slane %v710, 1
  %v829 = vrot.slane %v711, 1
  %v830 = vrot.slane %v712, 1
  %v831 = vrot.slane %v713, 1
  %v832 = vrot.slane %v714, 1
  %v833 = vrot.slane %v715, 1
  %v834 = vrot.slane %v716, 1
  %v835 = vrot.slane %v717, 1
  %v836 = vrot.slane %v718, 1
  %v837 = vrot.slane %v719, 1
  %v838 = vrot.slane %v720, 1
  %v839 = vrot.slane %v721, 1
  %v840 = vsel %vm474, %v824, 0.0
  %v841 = vsel %vm474, %v825, 0.0
  %v842 = vsel %vm474, %v826, 0.0
  %v843 = vsel %vm474, %v827, 0.0
  %v844 = vsel %vm474, %v828, 0.0
  %v845 = vsel %vm474, %v829, 0.0
  %v846 = vsel %vm474, %v830, 0.0
  %v847 = vsel %vm474, %v831, 0.0
  %v848 = vsel %vm474, %v832, 0.0
  %v849 = vsel %vm474, %v833, 0.0
  %v850 = vsel %vm474, %v834, 0.0
  %v851 = vsel %vm474, %v835, 0.0
  %v852 = vsel %vm474, %v836, 0.0
  %v853 = vsel %vm474, %v837, 0.0
  %v854 = vsel %vm474, %v838, 0.0
  %v855 = vsel %vm474, %v839, 0.0
  %v856 = vmul.f32 %v840, %v823
  %v857 = vmul.f32 %v841, %v823
  %v858 = vmul.f32 %v842, %v823
  %v859 = vmul.f32 %v843, %v823
  %v860 = vmul.f32 %v844, %v823
  %v861 = vmul.f32 %v845, %v823
  %v862 = vmul.f32 %v846, %v823
  %v863 = vmul.f32 %v847, %v823
  %v864 = vmul.f32 %v848, %v823
  %v865 = vmul.f32 %v849, %v823
  %v866 = vmul.f32 %v850, %v823
  %v867 = vmul.f32 %v851, %v823
  %v868 = vmul.f32 %v852, %v823
  %v869 = vmul.f32 %v853, %v823
  %v870 = vmul.f32 %v854, %v823
  %v871 = vmul.f32 %v855, %v823
  %v872 = vadd.f32 %v806, %v856
  %v873 = vadd.f32 %v807, %v857
  %v874 = vadd.f32 %v808, %v858
  %v875 = vadd.f32 %v809, %v859
  %v876 = vadd.f32 %v810, %v860
  %v877 = vadd.f32 %v811, %v861
  %v878 = vadd.f32 %v812, %v862
  %v879 = vadd.f32 %v813, %v863
  %v880 = vadd.f32 %v814, %v864
  %v881 = vadd.f32 %v815, %v865
  %v882 = vadd.f32 %v816, %v866
  %v883 = vadd.f32 %v817, %v867
  %v884 = vadd.f32 %v818, %v868
  %v885 = vadd.f32 %v819, %v869
  %v886 = vadd.f32 %v820, %v870
  %v887 = vadd.f32 %v821, %v871
  %v888 = vmax.f32 %v872, 0.0
  %v889 = vmax.f32 %v873, 0.0
  %v890 = vmax.f32 %v874, 0.0
  %v891 = vmax.f32 %v875, 0.0
  %v892 = vmax.f32 %v876, 0.0
  %v893 = vmax.f32 %v877, 0.0
  %v894 = vmax.f32 %v878, 0.0
  %v895 = vmax.f32 %v879, 0.0
  %v896 = vmax.f32 %v880, 0.0
  %v897 = vmax.f32 %v881, 0.0
  %v898 = vmax.f32 %v882, 0.0
  %v899 = vmax.f32 %v883, 0.0
  %v900 = vmax.f32 %v884, 0.0
  %v901 = vmax.f32 %v885, 0.0
  %v902 = vmax.f32 %v886, 0.0
  %v903 = vmax.f32 %v887, 0.0
  %v904 = vld [vmem:[%s7] sm:$0xff]
  %v905 = vld [vmem:[%s7 + $0x8] sm:$0xff]
  %v906 = vld [vmem:[%s8] sm:$0x1]
  %v908 = vlaneseq
  %v909 = vshrl.u32 %v908, 7
  %v910 = vsub.s32 0, %v909
  %v911 = vrot.slane %v906, %v910
  %v914 = vsel %vm316, %v888, 0
  %v917 = vsel %vm316, %v889, 0
  %v920 = vsel %vm316, %v890, 0
  %v923 = vsel %vm316, %v891, 0
  %v926 = vsel %vm316, %v892, 0
  %v929 = vsel %vm316, %v893, 0
  %v932 = vsel %vm316, %v894, 0
  %v935 = vsel %vm316, %v895, 0
  %v938 = vsel %vm316, %v896, 0
  %v941 = vsel %vm316, %v897, 0
  %v944 = vsel %vm316, %v898, 0
  %v947 = vsel %vm316, %v899, 0
  %v950 = vsel %vm316, %v900, 0
  %v953 = vsel %vm316, %v901, 0
  %v956 = vsel %vm316, %v902, 0
  %v959 = vsel %vm316, %v903, 0
  %961 = vmatprep.subr.mxu0 0.0
  %962 = vmatpush1.msra.mxu0 0.0
  %963 = vmatprep.subr.mxu0 0.0
  %964 = vmatpush1.msra.mxu0 0.0
  %965 = vmatprep.subr.mxu0 0.0
  %966 = vmatpush1.msra.mxu0 0.0
  %967 = vmatprep.subr.mxu0 0.0
  %968 = vmatpush1.msra.mxu0 0.0
  %969 = vmatprep.subr.mxu0 0.0
  %970 = vmatpush1.msra.mxu0 0.0
  %971 = vmatprep.subr.mxu0 0.0
  %972 = vmatpush1.msra.mxu0 0.0
  %973 = vmatprep.subr.mxu0 0.0
  %974 = vmatpush1.msra.mxu0 0.0
  %975 = vmatprep.subr.mxu0 0.0
  %976 = vmatpush1.msra.mxu0 0.0
  %977 = vmatprep.subr.mxu0 0.0
  %978 = vmatpush1.msra.mxu0 0.0
  %979 = vmatprep.subr.mxu0 0.0
  %980 = vmatpush1.msra.mxu0 0.0
  %981 = vmatprep.subr.mxu0 0.0
  %982 = vmatpush1.msra.mxu0 0.0
  %983 = vmatprep.subr.mxu0 0.0
  %984 = vmatpush1.msra.mxu0 0.0
  %985 = vmatprep.subr.mxu0 0.0
  %986 = vmatpush1.msra.mxu0 0.0
  %987 = vmatprep.subr.mxu0 0.0
  %988 = vmatpush1.msra.mxu0 0.0
  %989 = vmatprep.subr.mxu0 0.0
  %990 = vmatpush1.msra.mxu0 %v905
  %991 = vmatprep.subr.mxu0 0.0
  %992 = vmatpush1.msra.mxu0 %v904
  %993 = vmatprep.subr.mxu0 0.0
  %994 = vmatpush2.msra.mxu0 0.0
  %995 = vmatprep.subr.mxu0 0.0
  %996 = vmatpush2.msra.mxu0 0.0
  %997 = vmatprep.subr.mxu0 0.0
  %998 = vmatpush2.msra.mxu0 0.0
  %999 = vmatprep.subr.mxu0 0.0
  %1000 = vmatpush2.msra.mxu0 0.0
  %1001 = vmatprep.subr.mxu0 0.0
  %1002 = vmatpush2.msra.mxu0 0.0
  %1003 = vmatprep.subr.mxu0 0.0
  %1004 = vmatpush2.msra.mxu0 0.0
  %1005 = vmatprep.subr.mxu0 0.0
  %1006 = vmatpush2.msra.mxu0 0.0
  %1007 = vmatprep.subr.mxu0 0.0
  %1008 = vmatpush2.msra.mxu0 0.0
  %1009 = vmatprep.subr.mxu0 0.0
  %1010 = vmatpush2.msra.mxu0 0.0
  %1011 = vmatprep.subr.mxu0 0.0
  %1012 = vmatpush2.msra.mxu0 0.0
  %1013 = vmatprep.subr.mxu0 0.0
  %1014 = vmatpush2.msra.mxu0 0.0
  %1015 = vmatprep.subr.mxu0 0.0
  %1016 = vmatpush2.msra.mxu0 0.0
  %1017 = vmatprep.subr.mxu0 0.0
  %1018 = vmatpush2.msra.mxu0 0.0
  %1019 = vmatprep.subr.mxu0 0.0
  %1020 = vmatpush2.msra.mxu0 0.0
  %1021 = vmatprep.subr.mxu0 0.0
  %1022 = vmatpush2.msra.mxu0 0.0
  %1023 = vmatprep.subr.mxu0 0.0
  %1024 = vmatpush2.msra.mxu0 0.0
  %1025 = vmatprep.mubr.f32.mxu0 0.0
  %1026 = vmatmul.mubr.f32.gmra.mxu0 %v914
  %v1027 = vpop.f32.mrf.mxu0
  %v1028 = vadd.f32 %v911, %v1027
  %v1029 = vpop.f32.mrf.mxu0
  %1030 = vmatprep.mubr.f32.mxu0 0.0
  %1031 = vmatmul.mubr.f32.gmra.mxu0 %v917
  %v1032 = vpop.f32.mrf.mxu0
  %v1033 = vadd.f32 %v911, %v1032
  %v1034 = vpop.f32.mrf.mxu0
  %1035 = vmatprep.mubr.f32.mxu0 0.0
  %1036 = vmatmul.mubr.f32.gmra.mxu0 %v920
  %v1037 = vpop.f32.mrf.mxu0
  %v1038 = vadd.f32 %v911, %v1037
  %v1039 = vpop.f32.mrf.mxu0
  %1040 = vmatprep.mubr.f32.mxu0 0.0
  %1041 = vmatmul.mubr.f32.gmra.mxu0 %v923
  %v1042 = vpop.f32.mrf.mxu0
  %v1043 = vadd.f32 %v911, %v1042
  %v1044 = vpop.f32.mrf.mxu0
  %1045 = vmatprep.mubr.f32.mxu0 0.0
  %1046 = vmatmul.mubr.f32.gmra.mxu0 %v926
  %v1047 = vpop.f32.mrf.mxu0
  %v1048 = vadd.f32 %v911, %v1047
  %v1049 = vpop.f32.mrf.mxu0
  %1050 = vmatprep.mubr.f32.mxu0 0.0
  %1051 = vmatmul.mubr.f32.gmra.mxu0 %v929
  %v1052 = vpop.f32.mrf.mxu0
  %v1053 = vadd.f32 %v911, %v1052
  %v1054 = vpop.f32.mrf.mxu0
  %1055 = vmatprep.mubr.f32.mxu0 0.0
  %1056 = vmatmul.mubr.f32.gmra.mxu0 %v932
  %v1057 = vpop.f32.mrf.mxu0
  %v1058 = vadd.f32 %v911, %v1057
  %v1059 = vpop.f32.mrf.mxu0
  %1060 = vmatprep.mubr.f32.mxu0 0.0
  %1061 = vmatmul.mubr.f32.gmra.mxu0 %v935
  %v1062 = vpop.f32.mrf.mxu0
  %v1063 = vadd.f32 %v911, %v1062
  %v1064 = vpop.f32.mrf.mxu0
  %1065 = vmatprep.mubr.f32.mxu0 0.0
  %1066 = vmatmul.mubr.f32.gmra.mxu0 %v938
  %v1067 = vpop.f32.mrf.mxu0
  %v1068 = vadd.f32 %v911, %v1067
  %v1069 = vpop.f32.mrf.mxu0
  %1070 = vmatprep.mubr.f32.mxu0 0.0
  %1071 = vmatmul.mubr.f32.gmra.mxu0 %v941
  %v1072 = vpop.f32.mrf.mxu0
  %v1073 = vadd.f32 %v911, %v1072
  %v1074 = vpop.f32.mrf.mxu0
  %1075 = vmatprep.mubr.f32.mxu0 0.0
  %1076 = vmatmul.mubr.f32.gmra.mxu0 %v944
  %v1077 = vpop.f32.mrf.mxu0
  %v1078 = vadd.f32 %v911, %v1077
  %v1079 = vpop.f32.mrf.mxu0
  %1080 = vmatprep.mubr.f32.mxu0 0.0
  %1081 = vmatmul.mubr.f32.gmra.mxu0 %v947
  %v1082 = vpop.f32.mrf.mxu0
  %v1083 = vadd.f32 %v911, %v1082
  %v1084 = vpop.f32.mrf.mxu0
  %1085 = vmatprep.mubr.f32.mxu0 0.0
  %1086 = vmatmul.mubr.f32.gmra.mxu0 %v950
  %v1087 = vpop.f32.mrf.mxu0
  %v1088 = vadd.f32 %v911, %v1087
  %v1089 = vpop.f32.mrf.mxu0
  %1090 = vmatprep.mubr.f32.mxu0 0.0
  %1091 = vmatmul.mubr.f32.gmra.mxu0 %v953
  %v1092 = vpop.f32.mrf.mxu0
  %v1093 = vadd.f32 %v911, %v1092
  %v1094 = vpop.f32.mrf.mxu0
  %1095 = vmatprep.mubr.f32.mxu0 0.0
  %1096 = vmatmul.mubr.f32.gmra.mxu0 %v956
  %v1097 = vpop.f32.mrf.mxu0
  %v1098 = vadd.f32 %v911, %v1097
  %v1099 = vpop.f32.mrf.mxu0
  %1100 = vmatprep.mubr.f32.mxu0 0.0
  %1101 = vmatmul.mubr.f32.gmra.mxu0 %v959
  %v1102 = vpop.f32.mrf.mxu0
  %v1103 = vadd.f32 %v911, %v1102
  %v1104 = vpop.f32.mrf.mxu0
  %1105 = vdwg.mxu0
  %v1106 = vmax.f32 %v1028, 0.0
  %v1107 = vmax.f32 %v1033, 0.0
  %v1108 = vmax.f32 %v1038, 0.0
  %v1109 = vmax.f32 %v1043, 0.0
  %v1110 = vmax.f32 %v1048, 0.0
  %v1111 = vmax.f32 %v1053, 0.0
  %v1112 = vmax.f32 %v1058, 0.0
  %v1113 = vmax.f32 %v1063, 0.0
  %v1114 = vmax.f32 %v1068, 0.0
  %v1115 = vmax.f32 %v1073, 0.0
  %v1116 = vmax.f32 %v1078, 0.0
  %v1117 = vmax.f32 %v1083, 0.0
  %v1118 = vmax.f32 %v1088, 0.0
  %v1119 = vmax.f32 %v1093, 0.0
  %v1120 = vmax.f32 %v1098, 0.0
  %v1121 = vmax.f32 %v1103, 0.0
  %v1122 = vld [vmem:[%s1] sm:$0xff]
  %v1123 = vld [vmem:[%s1 + $0x8] sm:$0xff]
  %v1124 = vld [vmem:[%s1 + $0x10] sm:$0xff]
  %v1125 = vld [vmem:[%s1 + $0x18] sm:$0xff]
  %v1126 = vld [vmem:[%s1 + $0x20] sm:$0xff]
  %v1127 = vld [vmem:[%s1 + $0x28] sm:$0xff]
  %v1128 = vld [vmem:[%s1 + $0x30] sm:$0xff]
  %v1129 = vld [vmem:[%s1 + $0x38] sm:$0xff]
  %v1130 = vld [vmem:[%s1 + $0x40] sm:$0xff]
  %v1131 = vld [vmem:[%s1 + $0x48] sm:$0xff]
  %v1132 = vld [vmem:[%s1 + $0x50] sm:$0xff]
  %v1133 = vld [vmem:[%s1 + $0x58] sm:$0xff]
  %v1134 = vld [vmem:[%s1 + $0x60] sm:$0xff]
  %v1135 = vld [vmem:[%s1 + $0x68] sm:$0xff]
  %v1136 = vld [vmem:[%s1 + $0x70] sm:$0xff]
  %v1137 = vld [vmem:[%s1 + $0x78] sm:$0xff]
  %v1138 = vld [vmem:[%s2] sm:$0xff]
  %v1139 = vld [vmem:[%s2 + $0x8] sm:$0xff]
  %v1140 = vld [vmem:[%s2 + $0x10] sm:$0xff]
  %v1141 = vld [vmem:[%s2 + $0x18] sm:$0xff]
  %v1142 = vld [vmem:[%s2 + $0x20] sm:$0xff]
  %v1143 = vld [vmem:[%s2 + $0x28] sm:$0xff]
  %v1144 = vld [vmem:[%s2 + $0x30] sm:$0xff]
  %v1145 = vld [vmem:[%s2 + $0x38] sm:$0xff]
  %v1146 = vld [vmem:[%s2 + $0x40] sm:$0xff]
  %v1147 = vld [vmem:[%s2 + $0x48] sm:$0xff]
  %v1148 = vld [vmem:[%s2 + $0x50] sm:$0xff]
  %v1149 = vld [vmem:[%s2 + $0x58] sm:$0xff]
  %v1150 = vld [vmem:[%s2 + $0x60] sm:$0xff]
  %v1151 = vld [vmem:[%s2 + $0x68] sm:$0xff]
  %v1152 = vld [vmem:[%s2 + $0x70] sm:$0xff]
  %v1153 = vld [vmem:[%s2 + $0x78] sm:$0xff]
  %1154 = vst.msk [vmem:[%s315] sm:$0xff] %vm68, %v1106
  %1155 = vst.msk [vmem:[%s315 + $0x8] sm:$0xff] %vm68, %v1107
  %1156 = vst.msk [vmem:[%s315 + $0x10] sm:$0xff] %vm68, %v1108
  %1157 = vst.msk [vmem:[%s315 + $0x18] sm:$0xff] %vm68, %v1109
  %1158 = vst.msk [vmem:[%s315 + $0x20] sm:$0xff] %vm68, %v1110
  %1159 = vst.msk [vmem:[%s315 + $0x28] sm:$0xff] %vm68, %v1111
  %1160 = vst.msk [vmem:[%s315 + $0x30] sm:$0xff] %vm68, %v1112
  %1161 = vst.msk [vmem:[%s315 + $0x38] sm:$0xff] %vm68, %v1113
  %1162 = vst.msk [vmem:[%s315 + $0x50] sm:$0xff] %vm68, %v1114
  %1163 = vst.msk [vmem:[%s315 + $0x58] sm:$0xff] %vm68, %v1115
  %1164 = vst.msk [vmem:[%s315 + $0x60] sm:$0xff] %vm68, %v1116
  %1165 = vst.msk [vmem:[%s315 + $0x68] sm:$0xff] %vm68, %v1117
  %1166 = vst.msk [vmem:[%s315 + $0x70] sm:$0xff] %vm68, %v1118
  %1167 = vst.msk [vmem:[%s315 + $0x78] sm:$0xff] %vm68, %v1119
  %1168 = vst.msk [vmem:[%s315 + $0x80] sm:$0xff] %vm68, %v1120
  %1169 = vst.msk [vmem:[%s315 + $0x88] sm:$0xff] %vm68, %v1121
  %v1170 = vld [vmem:[%s10] sm:$0xff]
  %v1171 = vld [vmem:[#allocation2] sm:$0xff]
  %v1172 = vld [vmem:[#allocation2 + $0x8] sm:$0xff]
  %v1173 = vld [vmem:[#allocation2 + $0x10] sm:$0xff]
  %v1174 = vld [vmem:[#allocation2 + $0x18] sm:$0xff]
  %v1175 = vld [vmem:[#allocation2 + $0x20] sm:$0xff]
  %v1176 = vld [vmem:[#allocation2 + $0x28] sm:$0xff]
  %v1177 = vld [vmem:[#allocation2 + $0x30] sm:$0xff]
  %v1178 = vld [vmem:[#allocation2 + $0x38] sm:$0xff]
  %v1179 = vld [vmem:[#allocation2 + $0x50] sm:$0xff]
  %v1180 = vld [vmem:[#allocation2 + $0x58] sm:$0xff]
  %v1181 = vld [vmem:[#allocation2 + $0x60] sm:$0xff]
  %v1182 = vld [vmem:[#allocation2 + $0x68] sm:$0xff]
  %v1183 = vld [vmem:[#allocation2 + $0x70] sm:$0xff]
  %v1184 = vld [vmem:[#allocation2 + $0x78] sm:$0xff]
  %v1185 = vld [vmem:[#allocation2 + $0x80] sm:$0xff]
  %v1186 = vld [vmem:[#allocation2 + $0x88] sm:$0xff]
  %v1187 = vld [vmem:[%s9] sm:$0xff]
  %v1188 = vrot.slane %v1171, 7
  %v1189 = vrot.slane %v1172, 7
  %v1190 = vrot.slane %v1173, 7
  %v1191 = vrot.slane %v1174, 7
  %v1192 = vrot.slane %v1175, 7
  %v1193 = vrot.slane %v1176, 7
  %v1194 = vrot.slane %v1177, 7
  %v1195 = vrot.slane %v1178, 7
  %v1196 = vrot.slane %v1179, 7
  %v1197 = vrot.slane %v1180, 7
  %v1198 = vrot.slane %v1181, 7
  %v1199 = vrot.slane %v1182, 7
  %v1200 = vrot.slane %v1183, 7
  %v1201 = vrot.slane %v1184, 7
  %v1202 = vrot.slane %v1185, 7
  %v1203 = vrot.slane %v1186, 7
  %v1204 = vsel %vm372, %v1188, 0.0
  %v1205 = vsel %vm372, %v1189, 0.0
  %v1206 = vsel %vm372, %v1190, 0.0
  %v1207 = vsel %vm372, %v1191, 0.0
  %v1208 = vsel %vm372, %v1192, 0.0
  %v1209 = vsel %vm372, %v1193, 0.0
  %v1210 = vsel %vm372, %v1194, 0.0
  %v1211 = vsel %vm372, %v1195, 0.0
  %v1212 = vsel %vm372, %v1196, 0.0
  %v1213 = vsel %vm372, %v1197, 0.0
  %v1214 = vsel %vm372, %v1198, 0.0
  %v1215 = vsel %vm372, %v1199, 0.0
  %v1216 = vsel %vm372, %v1200, 0.0
  %v1217 = vsel %vm372, %v1201, 0.0
  %v1218 = vsel %vm372, %v1202, 0.0
  %v1219 = vsel %vm372, %v1203, 0.0
  %v1220 = vmul.f32 %v1204, %v1187
  %v1221 = vmul.f32 %v1205, %v1187
  %v1222 = vmul.f32 %v1206, %v1187
  %v1223 = vmul.f32 %v1207, %v1187
  %v1224 = vmul.f32 %v1208, %v1187
  %v1225 = vmul.f32 %v1209, %v1187
  %v1226 = vmul.f32 %v1210, %v1187
  %v1227 = vmul.f32 %v1211, %v1187
  %v1228 = vmul.f32 %v1212, %v1187
  %v1229 = vmul.f32 %v1213, %v1187
  %v1230 = vmul.f32 %v1214, %v1187
  %v1231 = vmul.f32 %v1215, %v1187
  %v1232 = vmul.f32 %v1216, %v1187
  %v1233 = vmul.f32 %v1217, %v1187
  %v1234 = vmul.f32 %v1218, %v1187
  %v1235 = vmul.f32 %v1219, %v1187
  %v1236 = vadd.f32 %v1170, %v1220
  %v1237 = vadd.f32 %v1170, %v1221
  %v1238 = vadd.f32 %v1170, %v1222
  %v1239 = vadd.f32 %v1170, %v1223
  %v1240 = vadd.f32 %v1170, %v1224
  %v1241 = vadd.f32 %v1170, %v1225
  %v1242 = vadd.f32 %v1170, %v1226
  %v1243 = vadd.f32 %v1170, %v1227
  %v1244 = vadd.f32 %v1170, %v1228
  %v1245 = vadd.f32 %v1170, %v1229
  %v1246 = vadd.f32 %v1170, %v1230
  %v1247 = vadd.f32 %v1170, %v1231
  %v1248 = vadd.f32 %v1170, %v1232
  %v1249 = vadd.f32 %v1170, %v1233
  %v1250 = vadd.f32 %v1170, %v1234
  %v1251 = vadd.f32 %v1170, %v1235
  %s1252 = scalar_lea.vmem %s9, 8
  %v1253 = vld [vmem:[%s1252] sm:$0xff]
  %v1254 = vmul.f32 %v1171, %v1253
  %v1255 = vmul.f32 %v1172, %v1253
  %v1256 = vmul.f32 %v1173, %v1253
  %v1257 = vmul.f32 %v1174, %v1253
  %v1258 = vmul.f32 %v1175, %v1253
  %v1259 = vmul.f32 %v1176, %v1253
  %v1260 = vmul.f32 %v1177, %v1253
  %v1261 = vmul.f32 %v1178, %v1253
  %v1262 = vmul.f32 %v1179, %v1253
  %v1263 = vmul.f32 %v1180, %v1253
  %v1264 = vmul.f32 %v1181, %v1253
  %v1265 = vmul.f32 %v1182, %v1253
  %v1266 = vmul.f32 %v1183, %v1253
  %v1267 = vmul.f32 %v1184, %v1253
  %v1268 = vmul.f32 %v1185, %v1253
  %v1269 = vmul.f32 %v1186, %v1253
  %v1270 = vadd.f32 %v1236, %v1254
  %v1271 = vadd.f32 %v1237, %v1255
  %v1272 = vadd.f32 %v1238, %v1256
  %v1273 = vadd.f32 %v1239, %v1257
  %v1274 = vadd.f32 %v1240, %v1258
  %v1275 = vadd.f32 %v1241, %v1259
  %v1276 = vadd.f32 %v1242, %v1260
  %v1277 = vadd.f32 %v1243, %v1261
  %v1278 = vadd.f32 %v1244, %v1262
  %v1279 = vadd.f32 %v1245, %v1263
  %v1280 = vadd.f32 %v1246, %v1264
  %v1281 = vadd.f32 %v1247, %v1265
  %v1282 = vadd.f32 %v1248, %v1266
  %v1283 = vadd.f32 %v1249, %v1267
  %v1284 = vadd.f32 %v1250, %v1268
  %v1285 = vadd.f32 %v1251, %v1269
  %s1286 = scalar_lea.vmem %s9, 16
  %v1287 = vld [vmem:[%s1286] sm:$0xff]
  %v1288 = vrot.slane %v1171, 1
  %v1289 = vrot.slane %v1172, 1
  %v1290 = vrot.slane %v1173, 1
  %v1291 = vrot.slane %v1174, 1
  %v1292 = vrot.slane %v1175, 1
  %v1293 = vrot.slane %v1176, 1
  %v1294 = vrot.slane %v1177, 1
  %v1295 = vrot.slane %v1178, 1
  %v1296 = vrot.slane %v1179, 1
  %v1297 = vrot.slane %v1180, 1
  %v1298 = vrot.slane %v1181, 1
  %v1299 = vrot.slane %v1182, 1
  %v1300 = vrot.slane %v1183, 1
  %v1301 = vrot.slane %v1184, 1
  %v1302 = vrot.slane %v1185, 1
  %v1303 = vrot.slane %v1186, 1
  %v1304 = vsel %vm474, %v1288, 0.0
  %v1305 = vsel %vm474, %v1289, 0.0
  %v1306 = vsel %vm474, %v1290, 0.0
  %v1307 = vsel %vm474, %v1291, 0.0
  %v1308 = vsel %vm474, %v1292, 0.0
  %v1309 = vsel %vm474, %v1293, 0.0
  %v1310 = vsel %vm474, %v1294, 0.0
  %v1311 = vsel %vm474, %v1295, 0.0
  %v1312 = vsel %vm474, %v1296, 0.0
  %v1313 = vsel %vm474, %v1297, 0.0
  %v1314 = vsel %vm474, %v1298, 0.0
  %v1315 = vsel %vm474, %v1299, 0.0
  %v1316 = vsel %vm474, %v1300, 0.0
  %v1317 = vsel %vm474, %v1301, 0.0
  %v1318 = vsel %vm474, %v1302, 0.0
  %v1319 = vsel %vm474, %v1303, 0.0
  %v1320 = vmul.f32 %v1304, %v1287
  %v1321 = vmul.f32 %v1305, %v1287
  %v1322 = vmul.f32 %v1306, %v1287
  %v1323 = vmul.f32 %v1307, %v1287
  %v1324 = vmul.f32 %v1308, %v1287
  %v1325 = vmul.f32 %v1309, %v1287
  %v1326 = vmul.f32 %v1310, %v1287
  %v1327 = vmul.f32 %v1311, %v1287
  %v1328 = vmul.f32 %v1312, %v1287
  %v1329 = vmul.f32 %v1313, %v1287
  %v1330 = vmul.f32 %v1314, %v1287
  %v1331 = vmul.f32 %v1315, %v1287
  %v1332 = vmul.f32 %v1316, %v1287
  %v1333 = vmul.f32 %v1317, %v1287
  %v1334 = vmul.f32 %v1318, %v1287
  %v1335 = vmul.f32 %v1319, %v1287
  %v1336 = vadd.f32 %v1270, %v1320
  %v1337 = vadd.f32 %v1271, %v1321
  %v1338 = vadd.f32 %v1272, %v1322
  %v1339 = vadd.f32 %v1273, %v1323
  %v1340 = vadd.f32 %v1274, %v1324
  %v1341 = vadd.f32 %v1275, %v1325
  %v1342 = vadd.f32 %v1276, %v1326
  %v1343 = vadd.f32 %v1277, %v1327
  %v1344 = vadd.f32 %v1278, %v1328
  %v1345 = vadd.f32 %v1279, %v1329
  %v1346 = vadd.f32 %v1280, %v1330
  %v1347 = vadd.f32 %v1281, %v1331
  %v1348 = vadd.f32 %v1282, %v1332
  %v1349 = vadd.f32 %v1283, %v1333
  %v1350 = vadd.f32 %v1284, %v1334
  %v1351 = vadd.f32 %v1285, %v1335
  %v1352 = vld [vmem:[%s315] sm:$0xff]
  %v1353 = vld [vmem:[%s315 + $0x8] sm:$0xff]
  %v1354 = vld [vmem:[%s315 + $0x10] sm:$0xff]
  %v1355 = vld [vmem:[%s315 + $0x18] sm:$0xff]
  %v1356 = vld [vmem:[%s315 + $0x20] sm:$0xff]
  %v1357 = vld [vmem:[%s315 + $0x28] sm:$0xff]
  %v1358 = vld [vmem:[%s315 + $0x30] sm:$0xff]
  %v1359 = vld [vmem:[%s315 + $0x38] sm:$0xff]
  %v1360 = vld [vmem:[%s315 + $0x50] sm:$0xff]
  %v1361 = vld [vmem:[%s315 + $0x58] sm:$0xff]
  %v1362 = vld [vmem:[%s315 + $0x60] sm:$0xff]
  %v1363 = vld [vmem:[%s315 + $0x68] sm:$0xff]
  %v1364 = vld [vmem:[%s315 + $0x70] sm:$0xff]
  %v1365 = vld [vmem:[%s315 + $0x78] sm:$0xff]
  %v1366 = vld [vmem:[%s315 + $0x80] sm:$0xff]
  %v1367 = vld [vmem:[%s315 + $0x88] sm:$0xff]
  %s1368 = scalar_lea.vmem %s9, 24
  %v1369 = vld [vmem:[%s1368] sm:$0xff]
  %v1370 = vrot.slane %v1352, 7
  %v1371 = vrot.slane %v1353, 7
  %v1372 = vrot.slane %v1354, 7
  %v1373 = vrot.slane %v1355, 7
  %v1374 = vrot.slane %v1356, 7
  %v1375 = vrot.slane %v1357, 7
  %v1376 = vrot.slane %v1358, 7
  %v1377 = vrot.slane %v1359, 7
  %v1378 = vrot.slane %v1360, 7
  %v1379 = vrot.slane %v1361, 7
  %v1380 = vrot.slane %v1362, 7
  %v1381 = vrot.slane %v1363, 7
  %v1382 = vrot.slane %v1364, 7
  %v1383 = vrot.slane %v1365, 7
  %v1384 = vrot.slane %v1366, 7
  %v1385 = vrot.slane %v1367, 7
  %v1386 = vsel %vm372, %v1370, 0.0
  %v1387 = vsel %vm372, %v1371, 0.0
  %v1388 = vsel %vm372, %v1372, 0.0
  %v1389 = vsel %vm372, %v1373, 0.0
  %v1390 = vsel %vm372, %v1374, 0.0
  %v1391 = vsel %vm372, %v1375, 0.0
  %v1392 = vsel %vm372, %v1376, 0.0
  %v1393 = vsel %vm372, %v1377, 0.0
  %v1394 = vsel %vm372, %v1378, 0.0
  %v1395 = vsel %vm372, %v1379, 0.0
  %v1396 = vsel %vm372, %v1380, 0.0
  %v1397 = vsel %vm372, %v1381, 0.0
  %v1398 = vsel %vm372, %v1382, 0.0
  %v1399 = vsel %vm372, %v1383, 0.0
  %v1400 = vsel %vm372, %v1384, 0.0
  %v1401 = vsel %vm372, %v1385, 0.0
  %v1402 = vmul.f32 %v1386, %v1369
  %v1403 = vmul.f32 %v1387, %v1369
  %v1404 = vmul.f32 %v1388, %v1369
  %v1405 = vmul.f32 %v1389, %v1369
  %v1406 = vmul.f32 %v1390, %v1369
  %v1407 = vmul.f32 %v1391, %v1369
  %v1408 = vmul.f32 %v1392, %v1369
  %v1409 = vmul.f32 %v1393, %v1369
  %v1410 = vmul.f32 %v1394, %v1369
  %v1411 = vmul.f32 %v1395, %v1369
  %v1412 = vmul.f32 %v1396, %v1369
  %v1413 = vmul.f32 %v1397, %v1369
  %v1414 = vmul.f32 %v1398, %v1369
  %v1415 = vmul.f32 %v1399, %v1369
  %v1416 = vmul.f32 %v1400, %v1369
  %v1417 = vmul.f32 %v1401, %v1369
  %v1418 = vadd.f32 %v1336, %v1402
  %v1419 = vadd.f32 %v1337, %v1403
  %v1420 = vadd.f32 %v1338, %v1404
  %v1421 = vadd.f32 %v1339, %v1405
  %v1422 = vadd.f32 %v1340, %v1406
  %v1423 = vadd.f32 %v1341, %v1407
  %v1424 = vadd.f32 %v1342, %v1408
  %v1425 = vadd.f32 %v1343, %v1409
  %v1426 = vadd.f32 %v1344, %v1410
  %v1427 = vadd.f32 %v1345, %v1411
  %v1428 = vadd.f32 %v1346, %v1412
  %v1429 = vadd.f32 %v1347, %v1413
  %v1430 = vadd.f32 %v1348, %v1414
  %v1431 = vadd.f32 %v1349, %v1415
  %v1432 = vadd.f32 %v1350, %v1416
  %v1433 = vadd.f32 %v1351, %v1417
  %s1434 = scalar_lea.vmem %s9, 32
  %v1435 = vld [vmem:[%s1434] sm:$0xff]
  %v1436 = vmul.f32 %v1352, %v1435
  %v1437 = vmul.f32 %v1353, %v1435
  %v1438 = vmul.f32 %v1354, %v1435
  %v1439 = vmul.f32 %v1355, %v1435
  %v1440 = vmul.f32 %v1356, %v1435
  %v1441 = vmul.f32 %v1357, %v1435
  %v1442 = vmul.f32 %v1358, %v1435
  %v1443 = vmul.f32 %v1359, %v1435
  %v1444 = vmul.f32 %v1360, %v1435
  %v1445 = vmul.f32 %v1361, %v1435
  %v1446 = vmul.f32 %v1362, %v1435
  %v1447 = vmul.f32 %v1363, %v1435
  %v1448 = vmul.f32 %v1364, %v1435
  %v1449 = vmul.f32 %v1365, %v1435
  %v1450 = vmul.f32 %v1366, %v1435
  %v1451 = vmul.f32 %v1367, %v1435
  %v1452 = vadd.f32 %v1418, %v1436
  %v1453 = vadd.f32 %v1419, %v1437
  %v1454 = vadd.f32 %v1420, %v1438
  %v1455 = vadd.f32 %v1421, %v1439
  %v1456 = vadd.f32 %v1422, %v1440
  %v1457 = vadd.f32 %v1423, %v1441
  %v1458 = vadd.f32 %v1424, %v1442
  %v1459 = vadd.f32 %v1425, %v1443
  %v1460 = vadd.f32 %v1426, %v1444
  %v1461 = vadd.f32 %v1427, %v1445
  %v1462 = vadd.f32 %v1428, %v1446
  %v1463 = vadd.f32 %v1429, %v1447
  %v1464 = vadd.f32 %v1430, %v1448
  %v1465 = vadd.f32 %v1431, %v1449
  %v1466 = vadd.f32 %v1432, %v1450
  %v1467 = vadd.f32 %v1433, %v1451
  %s1468 = scalar_lea.vmem %s9, 40
  %v1469 = vld [vmem:[%s1468] sm:$0xff]
  %v1470 = vrot.slane %v1352, 1
  %v1471 = vrot.slane %v1353, 1
  %v1472 = vrot.slane %v1354, 1
  %v1473 = vrot.slane %v1355, 1
  %v1474 = vrot.slane %v1356, 1
  %v1475 = vrot.slane %v1357, 1
  %v1476 = vrot.slane %v1358, 1
  %v1477 = vrot.slane %v1359, 1
  %v1478 = vrot.slane %v1360, 1
  %v1479 = vrot.slane %v1361, 1
  %v1480 = vrot.slane %v1362, 1
  %v1481 = vrot.slane %v1363, 1
  %v1482 = vrot.slane %v1364, 1
  %v1483 = vrot.slane %v1365, 1
  %v1484 = vrot.slane %v1366, 1
  %v1485 = vrot.slane %v1367, 1
  %v1486 = vsel %vm474, %v1470, 0.0
  %v1487 = vsel %vm474, %v1471, 0.0
  %v1488 = vsel %vm474, %v1472, 0.0
  %v1489 = vsel %vm474, %v1473, 0.0
  %v1490 = vsel %vm474, %v1474, 0.0
  %v1491 = vsel %vm474, %v1475, 0.0
  %v1492 = vsel %vm474, %v1476, 0.0
  %v1493 = vsel %vm474, %v1477, 0.0
  %v1494 = vsel %vm474, %v1478, 0.0
  %v1495 = vsel %vm474, %v1479, 0.0
  %v1496 = vsel %vm474, %v1480, 0.0
  %v1497 = vsel %vm474, %v1481, 0.0
  %v1498 = vsel %vm474, %v1482, 0.0
  %v1499 = vsel %vm474, %v1483, 0.0
  %v1500 = vsel %vm474, %v1484, 0.0
  %v1501 = vsel %vm474, %v1485, 0.0
  %v1502 = vmul.f32 %v1486, %v1469
  %v1503 = vmul.f32 %v1487, %v1469
  %v1504 = vmul.f32 %v1488, %v1469
  %v1505 = vmul.f32 %v1489, %v1469
  %v1506 = vmul.f32 %v1490, %v1469
  %v1507 = vmul.f32 %v1491, %v1469
  %v1508 = vmul.f32 %v1492, %v1469
  %v1509 = vmul.f32 %v1493, %v1469
  %v1510 = vmul.f32 %v1494, %v1469
  %v1511 = vmul.f32 %v1495, %v1469
  %v1512 = vmul.f32 %v1496, %v1469
  %v1513 = vmul.f32 %v1497, %v1469
  %v1514 = vmul.f32 %v1498, %v1469
  %v1515 = vmul.f32 %v1499, %v1469
  %v1516 = vmul.f32 %v1500, %v1469
  %v1517 = vmul.f32 %v1501, %v1469
  %v1518 = vadd.f32 %v1452, %v1502
  %v1519 = vadd.f32 %v1453, %v1503
  %v1520 = vadd.f32 %v1454, %v1504
  %v1521 = vadd.f32 %v1455, %v1505
  %v1522 = vadd.f32 %v1456, %v1506
  %v1523 = vadd.f32 %v1457, %v1507
  %v1524 = vadd.f32 %v1458, %v1508
  %v1525 = vadd.f32 %v1459, %v1509
  %v1526 = vadd.f32 %v1460, %v1510
  %v1527 = vadd.f32 %v1461, %v1511
  %v1528 = vadd.f32 %v1462, %v1512
  %v1529 = vadd.f32 %v1463, %v1513
  %v1530 = vadd.f32 %v1464, %v1514
  %v1531 = vadd.f32 %v1465, %v1515
  %v1532 = vadd.f32 %v1466, %v1516
  %v1533 = vadd.f32 %v1467, %v1517
  %v1534 = vld [vmem:[%s705] sm:$0xff]
  %v1535 = vld [vmem:[%s705 + $0x8] sm:$0xff]
  %v1536 = vld [vmem:[%s705 + $0x10] sm:$0xff]
  %v1537 = vld [vmem:[%s705 + $0x18] sm:$0xff]
  %v1538 = vld [vmem:[%s705 + $0x20] sm:$0xff]
  %v1539 = vld [vmem:[%s705 + $0x28] sm:$0xff]
  %v1540 = vld [vmem:[%s705 + $0x30] sm:$0xff]
  %v1541 = vld [vmem:[%s705 + $0x38] sm:$0xff]
  %v1542 = vld [vmem:[%s705 + $0x50] sm:$0xff]
  %v1543 = vld [vmem:[%s705 + $0x58] sm:$0xff]
  %v1544 = vld [vmem:[%s705 + $0x60] sm:$0xff]
  %v1545 = vld [vmem:[%s705 + $0x68] sm:$0xff]
  %v1546 = vld [vmem:[%s705 + $0x70] sm:$0xff]
  %v1547 = vld [vmem:[%s705 + $0x78] sm:$0xff]
  %v1548 = vld [vmem:[%s705 + $0x80] sm:$0xff]
  %v1549 = vld [vmem:[%s705 + $0x88] sm:$0xff]
  %s1550 = scalar_lea.vmem %s9, 48
  %v1551 = vld [vmem:[%s1550] sm:$0xff]
  %v1552 = vrot.slane %v1534, 7
  %v1553 = vrot.slane %v1535, 7
  %v1554 = vrot.slane %v1536, 7
  %v1555 = vrot.slane %v1537, 7
  %v1556 = vrot.slane %v1538, 7
  %v1557 = vrot.slane %v1539, 7
  %v1558 = vrot.slane %v1540, 7
  %v1559 = vrot.slane %v1541, 7
  %v1560 = vrot.slane %v1542, 7
  %v1561 = vrot.slane %v1543, 7
  %v1562 = vrot.slane %v1544, 7
  %v1563 = vrot.slane %v1545, 7
  %v1564 = vrot.slane %v1546, 7
  %v1565 = vrot.slane %v1547, 7
  %v1566 = vrot.slane %v1548, 7
  %v1567 = vrot.slane %v1549, 7
  %v1568 = vsel %vm372, %v1552, 0.0
  %v1569 = vsel %vm372, %v1553, 0.0
  %v1570 = vsel %vm372, %v1554, 0.0
  %v1571 = vsel %vm372, %v1555, 0.0
  %v1572 = vsel %vm372, %v1556, 0.0
  %v1573 = vsel %vm372, %v1557, 0.0
  %v1574 = vsel %vm372, %v1558, 0.0
  %v1575 = vsel %vm372, %v1559, 0.0
  %v1576 = vsel %vm372, %v1560, 0.0
  %v1577 = vsel %vm372, %v1561, 0.0
  %v1578 = vsel %vm372, %v1562, 0.0
  %v1579 = vsel %vm372, %v1563, 0.0
  %v1580 = vsel %vm372, %v1564, 0.0
  %v1581 = vsel %vm372, %v1565, 0.0
  %v1582 = vsel %vm372, %v1566, 0.0
  %v1583 = vsel %vm372, %v1567, 0.0
  %v1584 = vmul.f32 %v1568, %v1551
  %v1585 = vmul.f32 %v1569, %v1551
  %v1586 = vmul.f32 %v1570, %v1551
  %v1587 = vmul.f32 %v1571, %v1551
  %v1588 = vmul.f32 %v1572, %v1551
  %v1589 = vmul.f32 %v1573, %v1551
  %v1590 = vmul.f32 %v1574, %v1551
  %v1591 = vmul.f32 %v1575, %v1551
  %v1592 = vmul.f32 %v1576, %v1551
  %v1593 = vmul.f32 %v1577, %v1551
  %v1594 = vmul.f32 %v1578, %v1551
  %v1595 = vmul.f32 %v1579, %v1551
  %v1596 = vmul.f32 %v1580, %v1551
  %v1597 = vmul.f32 %v1581, %v1551
  %v1598 = vmul.f32 %v1582, %v1551
  %v1599 = vmul.f32 %v1583, %v1551
  %v1600 = vadd.f32 %v1518, %v1584
  %v1601 = vadd.f32 %v1519, %v1585
  %v1602 = vadd.f32 %v1520, %v1586
  %v1603 = vadd.f32 %v1521, %v1587
  %v1604 = vadd.f32 %v1522, %v1588
  %v1605 = vadd.f32 %v1523, %v1589
  %v1606 = vadd.f32 %v1524, %v1590
  %v1607 = vadd.f32 %v1525, %v1591
  %v1608 = vadd.f32 %v1526, %v1592
  %v1609 = vadd.f32 %v1527, %v1593
  %v1610 = vadd.f32 %v1528, %v1594
  %v1611 = vadd.f32 %v1529, %v1595
  %v1612 = vadd.f32 %v1530, %v1596
  %v1613 = vadd.f32 %v1531, %v1597
  %v1614 = vadd.f32 %v1532, %v1598
  %v1615 = vadd.f32 %v1533, %v1599
  %s1616 = scalar_lea.vmem %s9, 56
  %v1617 = vld [vmem:[%s1616] sm:$0xff]
  %v1618 = vmul.f32 %v1534, %v1617
  %v1619 = vmul.f32 %v1535, %v1617
  %v1620 = vmul.f32 %v1536, %v1617
  %v1621 = vmul.f32 %v1537, %v1617
  %v1622 = vmul.f32 %v1538, %v1617
  %v1623 = vmul.f32 %v1539, %v1617
  %v1624 = vmul.f32 %v1540, %v1617
  %v1625 = vmul.f32 %v1541, %v1617
  %v1626 = vmul.f32 %v1542, %v1617
  %v1627 = vmul.f32 %v1543, %v1617
  %v1628 = vmul.f32 %v1544, %v1617
  %v1629 = vmul.f32 %v1545, %v1617
  %v1630 = vmul.f32 %v1546, %v1617
  %v1631 = vmul.f32 %v1547, %v1617
  %v1632 = vmul.f32 %v1548, %v1617
  %v1633 = vmul.f32 %v1549, %v1617
  %v1634 = vadd.f32 %v1600, %v1618
  %v1635 = vadd.f32 %v1601, %v1619
  %v1636 = vadd.f32 %v1602, %v1620
  %v1637 = vadd.f32 %v1603, %v1621
  %v1638 = vadd.f32 %v1604, %v1622
  %v1639 = vadd.f32 %v1605, %v1623
  %v1640 = vadd.f32 %v1606, %v1624
  %v1641 = vadd.f32 %v1607, %v1625
  %v1642 = vadd.f32 %v1608, %v1626
  %v1643 = vadd.f32 %v1609, %v1627
  %v1644 = vadd.f32 %v1610, %v1628
  %v1645 = vadd.f32 %v1611, %v1629
  %v1646 = vadd.f32 %v1612, %v1630
  %v1647 = vadd.f32 %v1613, %v1631
  %v1648 = vadd.f32 %v1614, %v1632
  %v1649 = vadd.f32 %v1615, %v1633
  %s1650 = scalar_lea.vmem %s9, 64
  %v1651 = vld [vmem:[%s1650] sm:$0xff]
  %v1652 = vrot.slane %v1534, 1
  %v1653 = vrot.slane %v1535, 1
  %v1654 = vrot.slane %v1536, 1
  %v1655 = vrot.slane %v1537, 1
  %v1656 = vrot.slane %v1538, 1
  %v1657 = vrot.slane %v1539, 1
  %v1658 = vrot.slane %v1540, 1
  %v1659 = vrot.slane %v1541, 1
  %v1660 = vrot.slane %v1542, 1
  %v1661 = vrot.slane %v1543, 1
  %v1662 = vrot.slane %v1544, 1
  %v1663 = vrot.slane %v1545, 1
  %v1664 = vrot.slane %v1546, 1
  %v1665 = vrot.slane %v1547, 1
  %v1666 = vrot.slane %v1548, 1
  %v1667 = vrot.slane %v1549, 1
  %v1668 = vsel %vm474, %v1652, 0.0
  %v1669 = vsel %vm474, %v1653, 0.0
  %v1670 = vsel %vm474, %v1654, 0.0
  %v1671 = vsel %vm474, %v1655, 0.0
  %v1672 = vsel %vm474, %v1656, 0.0
  %v1673 = vsel %vm474, %v1657, 0.0
  %v1674 = vsel %vm474, %v1658, 0.0
  %v1675 = vsel %vm474, %v1659, 0.0
  %v1676 = vsel %vm474, %v1660, 0.0
  %v1677 = vsel %vm474, %v1661, 0.0
  %v1678 = vsel %vm474, %v1662, 0.0
  %v1679 = vsel %vm474, %v1663, 0.0
  %v1680 = vsel %vm474, %v1664, 0.0
  %v1681 = vsel %vm474, %v1665, 0.0
  %v1682 = vsel %vm474, %v1666, 0.0
  %v1683 = vsel %vm474, %v1667, 0.0
  %v1684 = vmul.f32 %v1668, %v1651
  %v1685 = vmul.f32 %v1669, %v1651
  %v1686 = vmul.f32 %v1670, %v1651
  %v1687 = vmul.f32 %v1671, %v1651
  %v1688 = vmul.f32 %v1672, %v1651
  %v1689 = vmul.f32 %v1673, %v1651
  %v1690 = vmul.f32 %v1674, %v1651
  %v1691 = vmul.f32 %v1675, %v1651
  %v1692 = vmul.f32 %v1676, %v1651
  %v1693 = vmul.f32 %v1677, %v1651
  %v1694 = vmul.f32 %v1678, %v1651
  %v1695 = vmul.f32 %v1679, %v1651
  %v1696 = vmul.f32 %v1680, %v1651
  %v1697 = vmul.f32 %v1681, %v1651
  %v1698 = vmul.f32 %v1682, %v1651
  %v1699 = vmul.f32 %v1683, %v1651
  %v1700 = vadd.f32 %v1634, %v1684
  %v1701 = vadd.f32 %v1635, %v1685
  %v1702 = vadd.f32 %v1636, %v1686
  %v1703 = vadd.f32 %v1637, %v1687
  %v1704 = vadd.f32 %v1638, %v1688
  %v1705 = vadd.f32 %v1639, %v1689
  %v1706 = vadd.f32 %v1640, %v1690
  %v1707 = vadd.f32 %v1641, %v1691
  %v1708 = vadd.f32 %v1642, %v1692
  %v1709 = vadd.f32 %v1643, %v1693
  %v1710 = vadd.f32 %v1644, %v1694
  %v1711 = vadd.f32 %v1645, %v1695
  %v1712 = vadd.f32 %v1646, %v1696
  %v1713 = vadd.f32 %v1647, %v1697
  %v1714 = vadd.f32 %v1648, %v1698
  %v1715 = vadd.f32 %v1649, %v1699
  %v1716 = vld [vmem:[%s11] sm:$0xff]
  %v1717 = vld [vmem:[%s11 + $0x8] sm:$0xff]
  %v1718 = vld [vmem:[%s11 + $0x10] sm:$0xff]
  %v1719 = vld [vmem:[%s11 + $0x18] sm:$0xff]
  %v1720 = vld [vmem:[%s12] sm:$0xff]
  %v1721 = vld [vmem:[%s12 + $0x8] sm:$0xff]
  %v1723 = vsel %vm316, %v1122, 0
  %v1726 = vsel %vm316, %v1123, 0
  %v1729 = vsel %vm316, %v1124, 0
  %v1732 = vsel %vm316, %v1125, 0
  %v1735 = vsel %vm316, %v1126, 0
  %v1738 = vsel %vm316, %v1127, 0
  %v1741 = vsel %vm316, %v1128, 0
  %v1744 = vsel %vm316, %v1129, 0
  %v1747 = vsel %vm316, %v1130, 0
  %v1750 = vsel %vm316, %v1131, 0
  %v1753 = vsel %vm316, %v1132, 0
  %v1756 = vsel %vm316, %v1133, 0
  %v1759 = vsel %vm316, %v1134, 0
  %v1762 = vsel %vm316, %v1135, 0
  %v1765 = vsel %vm316, %v1136, 0
  %v1768 = vsel %vm316, %v1137, 0
  %1770 = vmatprep.subr.mxu0 0.0
  %1771 = vmatpush1.msra.mxu0 0.0
  %1772 = vmatprep.subr.mxu0 0.0
  %1773 = vmatpush1.msra.mxu0 0.0
  %1774 = vmatprep.subr.mxu0 0.0
  %1775 = vmatpush1.msra.mxu0 0.0
  %1776 = vmatprep.subr.mxu0 0.0
  %1777 = vmatpush1.msra.mxu0 0.0
  %1778 = vmatprep.subr.mxu0 0.0
  %1779 = vmatpush1.msra.mxu0 0.0
  %1780 = vmatprep.subr.mxu0 0.0
  %1781 = vmatpush1.msra.mxu0 0.0
  %1782 = vmatprep.subr.mxu0 0.0
  %1783 = vmatpush1.msra.mxu0 0.0
  %1784 = vmatprep.subr.mxu0 0.0
  %1785 = vmatpush1.msra.mxu0 0.0
  %1786 = vmatprep.subr.mxu0 0.0
  %1787 = vmatpush1.msra.mxu0 0.0
  %1788 = vmatprep.subr.mxu0 0.0
  %1789 = vmatpush1.msra.mxu0 0.0
  %1790 = vmatprep.subr.mxu0 0.0
  %1791 = vmatpush1.msra.mxu0 0.0
  %1792 = vmatprep.subr.mxu0 0.0
  %1793 = vmatpush1.msra.mxu0 0.0
  %1794 = vmatprep.subr.mxu0 0.0
  %1795 = vmatpush1.msra.mxu0 0.0
  %1796 = vmatprep.subr.mxu0 0.0
  %1797 = vmatpush1.msra.mxu0 0.0
  %1798 = vmatprep.subr.mxu0 0.0
  %1799 = vmatpush1.msra.mxu0 %v1721
  %1800 = vmatprep.subr.mxu0 0.0
  %1801 = vmatpush1.msra.mxu0 %v1720
  %1802 = vmatprep.subr.mxu0 0.0
  %1803 = vmatpush2.msra.mxu0 0.0
  %1804 = vmatprep.subr.mxu0 0.0
  %1805 = vmatpush2.msra.mxu0 0.0
  %1806 = vmatprep.subr.mxu0 0.0
  %1807 = vmatpush2.msra.mxu0 0.0
  %1808 = vmatprep.subr.mxu0 0.0
  %1809 = vmatpush2.msra.mxu0 0.0
  %1810 = vmatprep.subr.mxu0 0.0
  %1811 = vmatpush2.msra.mxu0 0.0
  %1812 = vmatprep.subr.mxu0 0.0
  %1813 = vmatpush2.msra.mxu0 0.0
  %1814 = vmatprep.subr.mxu0 0.0
  %1815 = vmatpush2.msra.mxu0 0.0
  %1816 = vmatprep.subr.mxu0 0.0
  %1817 = vmatpush2.msra.mxu0 0.0
  %1818 = vmatprep.subr.mxu0 0.0
  %1819 = vmatpush2.msra.mxu0 0.0
  %1820 = vmatprep.subr.mxu0 0.0
  %1821 = vmatpush2.msra.mxu0 0.0
  %1822 = vmatprep.subr.mxu0 0.0
  %1823 = vmatpush2.msra.mxu0 0.0
  %1824 = vmatprep.subr.mxu0 0.0
  %1825 = vmatpush2.msra.mxu0 0.0
  %1826 = vmatprep.subr.mxu0 0.0
  %1827 = vmatpush2.msra.mxu0 0.0
  %1828 = vmatprep.subr.mxu0 0.0
  %1829 = vmatpush2.msra.mxu0 0.0
  %1830 = vmatprep.subr.mxu0 0.0
  %1831 = vmatpush2.msra.mxu0 0.0
  %1832 = vmatprep.subr.mxu0 0.0
  %1833 = vmatpush2.msra.mxu0 0.0
  %1834 = vmatprep.mubr.f32.mxu0 0.0
  %1835 = vmatmul.mubr.f32.gmra.mxu0 %v1723
  %v1836 = vpop.f32.mrf.mxu0
  %v1837 = vadd.f32 0.0, %v1836
  %v1838 = vpop.f32.mrf.mxu0
  %1839 = vmatprep.mubr.f32.mxu0 0.0
  %1840 = vmatmul.mubr.f32.gmra.mxu0 %v1726
  %v1841 = vpop.f32.mrf.mxu0
  %v1842 = vadd.f32 0.0, %v1841
  %v1843 = vpop.f32.mrf.mxu0
  %1844 = vmatprep.mubr.f32.mxu0 0.0
  %1845 = vmatmul.mubr.f32.gmra.mxu0 %v1729
  %v1846 = vpop.f32.mrf.mxu0
  %v1847 = vadd.f32 0.0, %v1846
  %v1848 = vpop.f32.mrf.mxu0
  %1849 = vmatprep.mubr.f32.mxu0 0.0
  %1850 = vmatmul.mubr.f32.gmra.mxu0 %v1732
  %v1851 = vpop.f32.mrf.mxu0
  %v1852 = vadd.f32 0.0, %v1851
  %v1853 = vpop.f32.mrf.mxu0
  %1854 = vmatprep.mubr.f32.mxu0 0.0
  %1855 = vmatmul.mubr.f32.gmra.mxu0 %v1735
  %v1856 = vpop.f32.mrf.mxu0
  %v1857 = vadd.f32 0.0, %v1856
  %v1858 = vpop.f32.mrf.mxu0
  %1859 = vmatprep.mubr.f32.mxu0 0.0
  %1860 = vmatmul.mubr.f32.gmra.mxu0 %v1738
  %v1861 = vpop.f32.mrf.mxu0
  %v1862 = vadd.f32 0.0, %v1861
  %v1863 = vpop.f32.mrf.mxu0
  %1864 = vmatprep.mubr.f32.mxu0 0.0
  %1865 = vmatmul.mubr.f32.gmra.mxu0 %v1741
  %v1866 = vpop.f32.mrf.mxu0
  %v1867 = vadd.f32 0.0, %v1866
  %v1868 = vpop.f32.mrf.mxu0
  %1869 = vmatprep.mubr.f32.mxu0 0.0
  %1870 = vmatmul.mubr.f32.gmra.mxu0 %v1744
  %v1871 = vpop.f32.mrf.mxu0
  %v1872 = vadd.f32 0.0, %v1871
  %v1873 = vpop.f32.mrf.mxu0
  %1874 = vmatprep.mubr.f32.mxu0 0.0
  %1875 = vmatmul.mubr.f32.gmra.mxu0 %v1747
  %v1876 = vpop.f32.mrf.mxu0
  %v1877 = vadd.f32 0.0, %v1876
  %v1878 = vpop.f32.mrf.mxu0
  %1879 = vmatprep.mubr.f32.mxu0 0.0
  %1880 = vmatmul.mubr.f32.gmra.mxu0 %v1750
  %v1881 = vpop.f32.mrf.mxu0
  %v1882 = vadd.f32 0.0, %v1881
  %v1883 = vpop.f32.mrf.mxu0
  %1884 = vmatprep.mubr.f32.mxu0 0.0
  %1885 = vmatmul.mubr.f32.gmra.mxu0 %v1753
  %v1886 = vpop.f32.mrf.mxu0
  %v1887 = vadd.f32 0.0, %v1886
  %v1888 = vpop.f32.mrf.mxu0
  %1889 = vmatprep.mubr.f32.mxu0 0.0
  %1890 = vmatmul.mubr.f32.gmra.mxu0 %v1756
  %v1891 = vpop.f32.mrf.mxu0
  %v1892 = vadd.f32 0.0, %v1891
  %v1893 = vpop.f32.mrf.mxu0
  %1894 = vmatprep.mubr.f32.mxu0 0.0
  %1895 = vmatmul.mubr.f32.gmra.mxu0 %v1759
  %v1896 = vpop.f32.mrf.mxu0
  %v1897 = vadd.f32 0.0, %v1896
  %v1898 = vpop.f32.mrf.mxu0
  %1899 = vmatprep.mubr.f32.mxu0 0.0
  %1900 = vmatmul.mubr.f32.gmra.mxu0 %v1762
  %v1901 = vpop.f32.mrf.mxu0
  %v1902 = vadd.f32 0.0, %v1901
  %v1903 = vpop.f32.mrf.mxu0
  %1904 = vmatprep.mubr.f32.mxu0 0.0
  %1905 = vmatmul.mubr.f32.gmra.mxu0 %v1765
  %v1906 = vpop.f32.mrf.mxu0
  %v1907 = vadd.f32 0.0, %v1906
  %v1908 = vpop.f32.mrf.mxu0
  %1909 = vmatprep.mubr.f32.mxu0 0.0
  %1910 = vmatmul.mubr.f32.gmra.mxu0 %v1768
  %v1911 = vpop.f32.mrf.mxu0
  %v1912 = vadd.f32 0.0, %v1911
  %v1913 = vpop.f32.mrf.mxu0
  %1914 = vdwg.mxu0
  %v1916 = vsel %vm68, %v1700, 0
  %v1919 = vsel %vm68, %v1701, 0
  %v1922 = vsel %vm68, %v1702, 0
  %v1925 = vsel %vm68, %v1703, 0
  %v1928 = vsel %vm68, %v1704, 0
  %v1931 = vsel %vm68, %v1705, 0
  %v1934 = vsel %vm68, %v1706, 0
  %v1937 = vsel %vm68, %v1707, 0
  %v1940 = vsel %vm68, %v1708, 0
  %v1943 = vsel %vm68, %v1709, 0
  %v1946 = vsel %vm68, %v1710, 0
  %v1949 = vsel %vm68, %v1711, 0
  %v1952 = vsel %vm68, %v1712, 0
  %v1955 = vsel %vm68, %v1713, 0
  %v1958 = vsel %vm68, %v1714, 0
  %v1961 = vsel %vm68, %v1715, 0
  %1963 = vmatprep.subr.mxu0 0.0
  %1964 = vmatpush1.msra.mxu0 0.0
  %1965 = vmatprep.subr.mxu0 0.0
  %1966 = vmatpush1.msra.mxu0 0.0
  %1967 = vmatprep.subr.mxu0 0.0
  %1968 = vmatpush1.msra.mxu0 0.0
  %1969 = vmatprep.subr.mxu0 0.0
  %1970 = vmatpush1.msra.mxu0 0.0
  %1971 = vmatprep.subr.mxu0 0.0
  %1972 = vmatpush1.msra.mxu0 0.0
  %1973 = vmatprep.subr.mxu0 0.0
  %1974 = vmatpush1.msra.mxu0 0.0
  %1975 = vmatprep.subr.mxu0 0.0
  %1976 = vmatpush1.msra.mxu0 0.0
  %1977 = vmatprep.subr.mxu0 0.0
  %1978 = vmatpush1.msra.mxu0 0.0
  %1979 = vmatprep.subr.mxu0 0.0
  %1980 = vmatpush1.msra.mxu0 0.0
  %1981 = vmatprep.subr.mxu0 0.0
  %1982 = vmatpush1.msra.mxu0 0.0
  %1983 = vmatprep.subr.mxu0 0.0
  %1984 = vmatpush1.msra.mxu0 0.0
  %1985 = vmatprep.subr.mxu0 0.0
  %1986 = vmatpush1.msra.mxu0 0.0
  %1987 = vmatprep.subr.mxu0 0.0
  %1988 = vmatpush1.msra.mxu0 %v1719
  %1989 = vmatprep.subr.mxu0 0.0
  %1990 = vmatpush1.msra.mxu0 %v1718
  %1991 = vmatprep.subr.mxu0 0.0
  %1992 = vmatpush1.msra.mxu0 %v1717
  %1993 = vmatprep.subr.mxu0 0.0
  %1994 = vmatpush1.msra.mxu0 %v1716
  %1995 = vmatprep.subr.mxu0 0.0
  %1996 = vmatpush2.msra.mxu0 0.0
  %1997 = vmatprep.subr.mxu0 0.0
  %1998 = vmatpush2.msra.mxu0 0.0
  %1999 = vmatprep.subr.mxu0 0.0
  %2000 = vmatpush2.msra.mxu0 0.0
  %2001 = vmatprep.subr.mxu0 0.0
  %2002 = vmatpush2.msra.mxu0 0.0
  %2003 = vmatprep.subr.mxu0 0.0
  %2004 = vmatpush2.msra.mxu0 0.0
  %2005 = vmatprep.subr.mxu0 0.0
  %2006 = vmatpush2.msra.mxu0 0.0
  %2007 = vmatprep.subr.mxu0 0.0
  %2008 = vmatpush2.msra.mxu0 0.0
  %2009 = vmatprep.subr.mxu0 0.0
  %2010 = vmatpush2.msra.mxu0 0.0
  %2011 = vmatprep.subr.mxu0 0.0
  %2012 = vmatpush2.msra.mxu0 0.0
  %2013 = vmatprep.subr.mxu0 0.0
  %2014 = vmatpush2.msra.mxu0 0.0
  %2015 = vmatprep.subr.mxu0 0.0
  %2016 = vmatpush2.msra.mxu0 0.0
  %2017 = vmatprep.subr.mxu0 0.0
  %2018 = vmatpush2.msra.mxu0 0.0
  %2019 = vmatprep.subr.mxu0 0.0
  %2020 = vmatpush2.msra.mxu0 0.0
  %2021 = vmatprep.subr.mxu0 0.0
  %2022 = vmatpush2.msra.mxu0 0.0
  %2023 = vmatprep.subr.mxu0 0.0
  %2024 = vmatpush2.msra.mxu0 0.0
  %2025 = vmatprep.subr.mxu0 0.0
  %2026 = vmatpush2.msra.mxu0 0.0
  %2027 = vmatprep.mubr.f32.mxu0 0.0
  %2028 = vmatmul.mubr.f32.gmra.mxu0 %v1916
  %v2029 = vpop.f32.mrf.mxu0
  %v2030 = vadd.f32 %v1837, %v2029
  %v2031 = vpop.f32.mrf.mxu0
  %2032 = vmatprep.mubr.f32.mxu0 0.0
  %2033 = vmatmul.mubr.f32.gmra.mxu0 %v1919
  %v2034 = vpop.f32.mrf.mxu0
  %v2035 = vadd.f32 %v1842, %v2034
  %v2036 = vpop.f32.mrf.mxu0
  %2037 = vmatprep.mubr.f32.mxu0 0.0
  %2038 = vmatmul.mubr.f32.gmra.mxu0 %v1922
  %v2039 = vpop.f32.mrf.mxu0
  %v2040 = vadd.f32 %v1847, %v2039
  %v2041 = vpop.f32.mrf.mxu0
  %2042 = vmatprep.mubr.f32.mxu0 0.0
  %2043 = vmatmul.mubr.f32.gmra.mxu0 %v1925
  %v2044 = vpop.f32.mrf.mxu0
  %v2045 = vadd.f32 %v1852, %v2044
  %v2046 = vpop.f32.mrf.mxu0
  %2047 = vmatprep.mubr.f32.mxu0 0.0
  %2048 = vmatmul.mubr.f32.gmra.mxu0 %v1928
  %v2049 = vpop.f32.mrf.mxu0
  %v2050 = vadd.f32 %v1857, %v2049
  %v2051 = vpop.f32.mrf.mxu0
  %2052 = vmatprep.mubr.f32.mxu0 0.0
  %2053 = vmatmul.mubr.f32.gmra.mxu0 %v1931
  %v2054 = vpop.f32.mrf.mxu0
  %v2055 = vadd.f32 %v1862, %v2054
  %v2056 = vpop.f32.mrf.mxu0
  %2057 = vmatprep.mubr.f32.mxu0 0.0
  %2058 = vmatmul.mubr.f32.gmra.mxu0 %v1934
  %v2059 = vpop.f32.mrf.mxu0
  %v2060 = vadd.f32 %v1867, %v2059
  %v2061 = vpop.f32.mrf.mxu0
  %2062 = vmatprep.mubr.f32.mxu0 0.0
  %2063 = vmatmul.mubr.f32.gmra.mxu0 %v1937
  %v2064 = vpop.f32.mrf.mxu0
  %v2065 = vadd.f32 %v1872, %v2064
  %v2066 = vpop.f32.mrf.mxu0
  %2067 = vmatprep.mubr.f32.mxu0 0.0
  %2068 = vmatmul.mubr.f32.gmra.mxu0 %v1940
  %v2069 = vpop.f32.mrf.mxu0
  %v2070 = vadd.f32 %v1877, %v2069
  %v2071 = vpop.f32.mrf.mxu0
  %2072 = vmatprep.mubr.f32.mxu0 0.0
  %2073 = vmatmul.mubr.f32.gmra.mxu0 %v1943
  %v2074 = vpop.f32.mrf.mxu0
  %v2075 = vadd.f32 %v1882, %v2074
  %v2076 = vpop.f32.mrf.mxu0
  %2077 = vmatprep.mubr.f32.mxu0 0.0
  %2078 = vmatmul.mubr.f32.gmra.mxu0 %v1946
  %v2079 = vpop.f32.mrf.mxu0
  %v2080 = vadd.f32 %v1887, %v2079
  %v2081 = vpop.f32.mrf.mxu0
  %2082 = vmatprep.mubr.f32.mxu0 0.0
  %2083 = vmatmul.mubr.f32.gmra.mxu0 %v1949
  %v2084 = vpop.f32.mrf.mxu0
  %v2085 = vadd.f32 %v1892, %v2084
  %v2086 = vpop.f32.mrf.mxu0
  %2087 = vmatprep.mubr.f32.mxu0 0.0
  %2088 = vmatmul.mubr.f32.gmra.mxu0 %v1952
  %v2089 = vpop.f32.mrf.mxu0
  %v2090 = vadd.f32 %v1897, %v2089
  %v2091 = vpop.f32.mrf.mxu0
  %2092 = vmatprep.mubr.f32.mxu0 0.0
  %2093 = vmatmul.mubr.f32.gmra.mxu0 %v1955
  %v2094 = vpop.f32.mrf.mxu0
  %v2095 = vadd.f32 %v1902, %v2094
  %v2096 = vpop.f32.mrf.mxu0
  %2097 = vmatprep.mubr.f32.mxu0 0.0
  %2098 = vmatmul.mubr.f32.gmra.mxu0 %v1958
  %v2099 = vpop.f32.mrf.mxu0
  %v2100 = vadd.f32 %v1907, %v2099
  %v2101 = vpop.f32.mrf.mxu0
  %2102 = vmatprep.mubr.f32.mxu0 0.0
  %2103 = vmatmul.mubr.f32.gmra.mxu0 %v1961
  %v2104 = vpop.f32.mrf.mxu0
  %v2105 = vadd.f32 %v1912, %v2104
  %v2106 = vpop.f32.mrf.mxu0
  %2107 = vdwg.mxu0
  %v2108 = vld [vmem:[%s13] sm:$0x1]
  %v2110 = vlaneseq
  %v2111 = vshrl.u32 %v2110, 7
  %v2112 = vsub.s32 0, %v2111
  %v2113 = vrot.slane %v2108, %v2112
  %v2115 = vadd.f32 %v2030, %v2113
  %v2116 = vadd.f32 %v2035, %v2113
  %v2117 = vadd.f32 %v2040, %v2113
  %v2118 = vadd.f32 %v2045, %v2113
  %v2119 = vadd.f32 %v2050, %v2113
  %v2120 = vadd.f32 %v2055, %v2113
  %v2121 = vadd.f32 %v2060, %v2113
  %v2122 = vadd.f32 %v2065, %v2113
  %v2123 = vadd.f32 %v2070, %v2113
  %v2124 = vadd.f32 %v2075, %v2113
  %v2125 = vadd.f32 %v2080, %v2113
  %v2126 = vadd.f32 %v2085, %v2113
  %v2127 = vadd.f32 %v2090, %v2113
  %v2128 = vadd.f32 %v2095, %v2113
  %v2129 = vadd.f32 %v2100, %v2113
  %v2130 = vadd.f32 %v2105, %v2113
  %2131 = vst.msk [vmem:[%s315] sm:$0xff] %vm316, %v2115
  %2132 = vst.msk [vmem:[%s315 + $0x8] sm:$0xff] %vm316, %v2116
  %2133 = vst.msk [vmem:[%s315 + $0x10] sm:$0xff] %vm316, %v2117
  %2134 = vst.msk [vmem:[%s315 + $0x18] sm:$0xff] %vm316, %v2118
  %2135 = vst.msk [vmem:[%s315 + $0x20] sm:$0xff] %vm316, %v2119
  %2136 = vst.msk [vmem:[%s315 + $0x28] sm:$0xff] %vm316, %v2120
  %2137 = vst.msk [vmem:[%s315 + $0x30] sm:$0xff] %vm316, %v2121
  %2138 = vst.msk [vmem:[%s315 + $0x38] sm:$0xff] %vm316, %v2122
  %2139 = vst.msk [vmem:[%s315 + $0x50] sm:$0xff] %vm316, %v2123
  %2140 = vst.msk [vmem:[%s315 + $0x58] sm:$0xff] %vm316, %v2124
  %2141 = vst.msk [vmem:[%s315 + $0x60] sm:$0xff] %vm316, %v2125
  %2142 = vst.msk [vmem:[%s315 + $0x68] sm:$0xff] %vm316, %v2126
  %2143 = vst.msk [vmem:[%s315 + $0x70] sm:$0xff] %vm316, %v2127
  %2144 = vst.msk [vmem:[%s315 + $0x78] sm:$0xff] %vm316, %v2128
  %2145 = vst.msk [vmem:[%s315 + $0x80] sm:$0xff] %vm316, %v2129
  %2146 = vst.msk [vmem:[%s315 + $0x88] sm:$0xff] %vm316, %v2130
  %v2147 = vld [vmem:[#allocation2] sm:$0xff]
  %v2148 = vld [vmem:[#allocation2 + $0x8] sm:$0xff]
  %v2149 = vld [vmem:[#allocation2 + $0x10] sm:$0xff]
  %v2150 = vld [vmem:[#allocation2 + $0x18] sm:$0xff]
  %v2151 = vld [vmem:[#allocation2 + $0x20] sm:$0xff]
  %v2152 = vld [vmem:[#allocation2 + $0x28] sm:$0xff]
  %v2153 = vld [vmem:[#allocation2 + $0x30] sm:$0xff]
  %v2154 = vld [vmem:[#allocation2 + $0x38] sm:$0xff]
  %v2155 = vld [vmem:[#allocation2 + $0x50] sm:$0xff]
  %v2156 = vld [vmem:[#allocation2 + $0x58] sm:$0xff]
  %v2157 = vld [vmem:[#allocation2 + $0x60] sm:$0xff]
  %v2158 = vld [vmem:[#allocation2 + $0x68] sm:$0xff]
  %v2159 = vld [vmem:[#allocation2 + $0x70] sm:$0xff]
  %v2160 = vld [vmem:[#allocation2 + $0x78] sm:$0xff]
  %v2161 = vld [vmem:[#allocation2 + $0x80] sm:$0xff]
  %v2162 = vld [vmem:[#allocation2 + $0x88] sm:$0xff]
  %v2163 = vld [vmem:[%s14] sm:$0xff]
  %v2164 = vrot.slane %v2147, 7
  %v2165 = vrot.slane %v2148, 7
  %v2166 = vrot.slane %v2149, 7
  %v2167 = vrot.slane %v2150, 7
  %v2168 = vrot.slane %v2151, 7
  %v2169 = vrot.slane %v2152, 7
  %v2170 = vrot.slane %v2153, 7
  %v2171 = vrot.slane %v2154, 7
  %v2172 = vrot.slane %v2155, 7
  %v2173 = vrot.slane %v2156, 7
  %v2174 = vrot.slane %v2157, 7
  %v2175 = vrot.slane %v2158, 7
  %v2176 = vrot.slane %v2159, 7
  %v2177 = vrot.slane %v2160, 7
  %v2178 = vrot.slane %v2161, 7
  %v2179 = vrot.slane %v2162, 7
  %v2180 = vsel %vm372, %v2164, 0.0
  %v2181 = vsel %vm372, %v2165, 0.0
  %v2182 = vsel %vm372, %v2166, 0.0
  %v2183 = vsel %vm372, %v2167, 0.0
  %v2184 = vsel %vm372, %v2168, 0.0
  %v2185 = vsel %vm372, %v2169, 0.0
  %v2186 = vsel %vm372, %v2170, 0.0
  %v2187 = vsel %vm372, %v2171, 0.0
  %v2188 = vsel %vm372, %v2172, 0.0
  %v2189 = vsel %vm372, %v2173, 0.0
  %v2190 = vsel %vm372, %v2174, 0.0
  %v2191 = vsel %vm372, %v2175, 0.0
  %v2192 = vsel %vm372, %v2176, 0.0
  %v2193 = vsel %vm372, %v2177, 0.0
  %v2194 = vsel %vm372, %v2178, 0.0
  %v2195 = vsel %vm372, %v2179, 0.0
  %v2196 = vmul.f32 %v2180, %v2163
  %v2197 = vmul.f32 %v2181, %v2163
  %v2198 = vmul.f32 %v2182, %v2163
  %v2199 = vmul.f32 %v2183, %v2163
  %v2200 = vmul.f32 %v2184, %v2163
  %v2201 = vmul.f32 %v2185, %v2163
  %v2202 = vmul.f32 %v2186, %v2163
  %v2203 = vmul.f32 %v2187, %v2163
  %v2204 = vmul.f32 %v2188, %v2163
  %v2205 = vmul.f32 %v2189, %v2163
  %v2206 = vmul.f32 %v2190, %v2163
  %v2207 = vmul.f32 %v2191, %v2163
  %v2208 = vmul.f32 %v2192, %v2163
  %v2209 = vmul.f32 %v2193, %v2163
  %v2210 = vmul.f32 %v2194, %v2163
  %v2211 = vmul.f32 %v2195, %v2163
  %v2212 = vadd.f32 %v2196, 0.0
  %v2213 = vadd.f32 %v2197, 0.0
  %v2214 = vadd.f32 %v2198, 0.0
  %v2215 = vadd.f32 %v2199, 0.0
  %v2216 = vadd.f32 %v2200, 0.0
  %v2217 = vadd.f32 %v2201, 0.0
  %v2218 = vadd.f32 %v2202, 0.0
  %v2219 = vadd.f32 %v2203, 0.0
  %v2220 = vadd.f32 %v2204, 0.0
  %v2221 = vadd.f32 %v2205, 0.0
  %v2222 = vadd.f32 %v2206, 0.0
  %v2223 = vadd.f32 %v2207, 0.0
  %v2224 = vadd.f32 %v2208, 0.0
  %v2225 = vadd.f32 %v2209, 0.0
  %v2226 = vadd.f32 %v2210, 0.0
  %v2227 = vadd.f32 %v2211, 0.0
  %s2228 = scalar_lea.vmem %s14, 8
  %v2229 = vld [vmem:[%s2228] sm:$0xff]
  %v2230 = vmul.f32 %v2147, %v2229
  %v2231 = vmul.f32 %v2148, %v2229
  %v2232 = vmul.f32 %v2149, %v2229
  %v2233 = vmul.f32 %v2150, %v2229
  %v2234 = vmul.f32 %v2151, %v2229
  %v2235 = vmul.f32 %v2152, %v2229
  %v2236 = vmul.f32 %v2153, %v2229
  %v2237 = vmul.f32 %v2154, %v2229
  %v2238 = vmul.f32 %v2155, %v2229
  %v2239 = vmul.f32 %v2156, %v2229
  %v2240 = vmul.f32 %v2157, %v2229
  %v2241 = vmul.f32 %v2158, %v2229
  %v2242 = vmul.f32 %v2159, %v2229
  %v2243 = vmul.f32 %v2160, %v2229
  %v2244 = vmul.f32 %v2161, %v2229
  %v2245 = vmul.f32 %v2162, %v2229
  %v2246 = vadd.f32 %v2212, %v2230
  %v2247 = vadd.f32 %v2213, %v2231
  %v2248 = vadd.f32 %v2214, %v2232
  %v2249 = vadd.f32 %v2215, %v2233
  %v2250 = vadd.f32 %v2216, %v2234
  %v2251 = vadd.f32 %v2217, %v2235
  %v2252 = vadd.f32 %v2218, %v2236
  %v2253 = vadd.f32 %v2219, %v2237
  %v2254 = vadd.f32 %v2220, %v2238
  %v2255 = vadd.f32 %v2221, %v2239
  %v2256 = vadd.f32 %v2222, %v2240
  %v2257 = vadd.f32 %v2223, %v2241
  %v2258 = vadd.f32 %v2224, %v2242
  %v2259 = vadd.f32 %v2225, %v2243
  %v2260 = vadd.f32 %v2226, %v2244
  %v2261 = vadd.f32 %v2227, %v2245
  %s2262 = scalar_lea.vmem %s14, 16
  %v2263 = vld [vmem:[%s2262] sm:$0xff]
  %v2264 = vrot.slane %v2147, 1
  %v2265 = vrot.slane %v2148, 1
  %v2266 = vrot.slane %v2149, 1
  %v2267 = vrot.slane %v2150, 1
  %v2268 = vrot.slane %v2151, 1
  %v2269 = vrot.slane %v2152, 1
  %v2270 = vrot.slane %v2153, 1
  %v2271 = vrot.slane %v2154, 1
  %v2272 = vrot.slane %v2155, 1
  %v2273 = vrot.slane %v2156, 1
  %v2274 = vrot.slane %v2157, 1
  %v2275 = vrot.slane %v2158, 1
  %v2276 = vrot.slane %v2159, 1
  %v2277 = vrot.slane %v2160, 1
  %v2278 = vrot.slane %v2161, 1
  %v2279 = vrot.slane %v2162, 1
  %v2280 = vsel %vm474, %v2264, 0.0
  %v2281 = vsel %vm474, %v2265, 0.0
  %v2282 = vsel %vm474, %v2266, 0.0
  %v2283 = vsel %vm474, %v2267, 0.0
  %v2284 = vsel %vm474, %v2268, 0.0
  %v2285 = vsel %vm474, %v2269, 0.0
  %v2286 = vsel %vm474, %v2270, 0.0
  %v2287 = vsel %vm474, %v2271, 0.0
  %v2288 = vsel %vm474, %v2272, 0.0
  %v2289 = vsel %vm474, %v2273, 0.0
  %v2290 = vsel %vm474, %v2274, 0.0
  %v2291 = vsel %vm474, %v2275, 0.0
  %v2292 = vsel %vm474, %v2276, 0.0
  %v2293 = vsel %vm474, %v2277, 0.0
  %v2294 = vsel %vm474, %v2278, 0.0
  %v2295 = vsel %vm474, %v2279, 0.0
  %v2296 = vmul.f32 %v2280, %v2263
  %v2297 = vmul.f32 %v2281, %v2263
  %v2298 = vmul.f32 %v2282, %v2263
  %v2299 = vmul.f32 %v2283, %v2263
  %v2300 = vmul.f32 %v2284, %v2263
  %v2301 = vmul.f32 %v2285, %v2263
  %v2302 = vmul.f32 %v2286, %v2263
  %v2303 = vmul.f32 %v2287, %v2263
  %v2304 = vmul.f32 %v2288, %v2263
  %v2305 = vmul.f32 %v2289, %v2263
  %v2306 = vmul.f32 %v2290, %v2263
  %v2307 = vmul.f32 %v2291, %v2263
  %v2308 = vmul.f32 %v2292, %v2263
  %v2309 = vmul.f32 %v2293, %v2263
  %v2310 = vmul.f32 %v2294, %v2263
  %v2311 = vmul.f32 %v2295, %v2263
  %v2312 = vadd.f32 %v2246, %v2296
  %v2313 = vadd.f32 %v2247, %v2297
  %v2314 = vadd.f32 %v2248, %v2298
  %v2315 = vadd.f32 %v2249, %v2299
  %v2316 = vadd.f32 %v2250, %v2300
  %v2317 = vadd.f32 %v2251, %v2301
  %v2318 = vadd.f32 %v2252, %v2302
  %v2319 = vadd.f32 %v2253, %v2303
  %v2320 = vadd.f32 %v2254, %v2304
  %v2321 = vadd.f32 %v2255, %v2305
  %v2322 = vadd.f32 %v2256, %v2306
  %v2323 = vadd.f32 %v2257, %v2307
  %v2324 = vadd.f32 %v2258, %v2308
  %v2325 = vadd.f32 %v2259, %v2309
  %v2326 = vadd.f32 %v2260, %v2310
  %v2327 = vadd.f32 %v2261, %v2311
  %v2328 = vld [vmem:[%s315] sm:$0xff]
  %v2329 = vld [vmem:[%s315 + $0x8] sm:$0xff]
  %v2330 = vld [vmem:[%s315 + $0x10] sm:$0xff]
  %v2331 = vld [vmem:[%s315 + $0x18] sm:$0xff]
  %v2332 = vld [vmem:[%s315 + $0x20] sm:$0xff]
  %v2333 = vld [vmem:[%s315 + $0x28] sm:$0xff]
  %v2334 = vld [vmem:[%s315 + $0x30] sm:$0xff]
  %v2335 = vld [vmem:[%s315 + $0x38] sm:$0xff]
  %v2336 = vld [vmem:[%s315 + $0x50] sm:$0xff]
  %v2337 = vld [vmem:[%s315 + $0x58] sm:$0xff]
  %v2338 = vld [vmem:[%s315 + $0x60] sm:$0xff]
  %v2339 = vld [vmem:[%s315 + $0x68] sm:$0xff]
  %v2340 = vld [vmem:[%s315 + $0x70] sm:$0xff]
  %v2341 = vld [vmem:[%s315 + $0x78] sm:$0xff]
  %v2342 = vld [vmem:[%s315 + $0x80] sm:$0xff]
  %v2343 = vld [vmem:[%s315 + $0x88] sm:$0xff]
  %s2344 = scalar_lea.vmem %s14, 24
  %v2345 = vld [vmem:[%s2344] sm:$0xff]
  %v2346 = vrot.slane %v2328, 7
  %v2347 = vrot.slane %v2329, 7
  %v2348 = vrot.slane %v2330, 7
  %v2349 = vrot.slane %v2331, 7
  %v2350 = vrot.slane %v2332, 7
  %v2351 = vrot.slane %v2333, 7
  %v2352 = vrot.slane %v2334, 7
  %v2353 = vrot.slane %v2335, 7
  %v2354 = vrot.slane %v2336, 7
  %v2355 = vrot.slane %v2337, 7
  %v2356 = vrot.slane %v2338, 7
  %v2357 = vrot.slane %v2339, 7
  %v2358 = vrot.slane %v2340, 7
  %v2359 = vrot.slane %v2341, 7
  %v2360 = vrot.slane %v2342, 7
  %v2361 = vrot.slane %v2343, 7
  %v2362 = vsel %vm372, %v2346, 0.0
  %v2363 = vsel %vm372, %v2347, 0.0
  %v2364 = vsel %vm372, %v2348, 0.0
  %v2365 = vsel %vm372, %v2349, 0.0
  %v2366 = vsel %vm372, %v2350, 0.0
  %v2367 = vsel %vm372, %v2351, 0.0
  %v2368 = vsel %vm372, %v2352, 0.0
  %v2369 = vsel %vm372, %v2353, 0.0
  %v2370 = vsel %vm372, %v2354, 0.0
  %v2371 = vsel %vm372, %v2355, 0.0
  %v2372 = vsel %vm372, %v2356, 0.0
  %v2373 = vsel %vm372, %v2357, 0.0
  %v2374 = vsel %vm372, %v2358, 0.0
  %v2375 = vsel %vm372, %v2359, 0.0
  %v2376 = vsel %vm372, %v2360, 0.0
  %v2377 = vsel %vm372, %v2361, 0.0
  %v2378 = vmul.f32 %v2362, %v2345
  %v2379 = vmul.f32 %v2363, %v2345
  %v2380 = vmul.f32 %v2364, %v2345
  %v2381 = vmul.f32 %v2365, %v2345
  %v2382 = vmul.f32 %v2366, %v2345
  %v2383 = vmul.f32 %v2367, %v2345
  %v2384 = vmul.f32 %v2368, %v2345
  %v2385 = vmul.f32 %v2369, %v2345
  %v2386 = vmul.f32 %v2370, %v2345
  %v2387 = vmul.f32 %v2371, %v2345
  %v2388 = vmul.f32 %v2372, %v2345
  %v2389 = vmul.f32 %v2373, %v2345
  %v2390 = vmul.f32 %v2374, %v2345
  %v2391 = vmul.f32 %v2375, %v2345
  %v2392 = vmul.f32 %v2376, %v2345
  %v2393 = vmul.f32 %v2377, %v2345
  %v2394 = vadd.f32 %v2312, %v2378
  %v2395 = vadd.f32 %v2313, %v2379
  %v2396 = vadd.f32 %v2314, %v2380
  %v2397 = vadd.f32 %v2315, %v2381
  %v2398 = vadd.f32 %v2316, %v2382
  %v2399 = vadd.f32 %v2317, %v2383
  %v2400 = vadd.f32 %v2318, %v2384
  %v2401 = vadd.f32 %v2319, %v2385
  %v2402 = vadd.f32 %v2320, %v2386
  %v2403 = vadd.f32 %v2321, %v2387
  %v2404 = vadd.f32 %v2322, %v2388
  %v2405 = vadd.f32 %v2323, %v2389
  %v2406 = vadd.f32 %v2324, %v2390
  %v2407 = vadd.f32 %v2325, %v2391
  %v2408 = vadd.f32 %v2326, %v2392
  %v2409 = vadd.f32 %v2327, %v2393
  %s2410 = scalar_lea.vmem %s14, 32
  %v2411 = vld [vmem:[%s2410] sm:$0xff]
  %v2412 = vmul.f32 %v2328, %v2411
  %v2413 = vmul.f32 %v2329, %v2411
  %v2414 = vmul.f32 %v2330, %v2411
  %v2415 = vmul.f32 %v2331, %v2411
  %v2416 = vmul.f32 %v2332, %v2411
  %v2417 = vmul.f32 %v2333, %v2411
  %v2418 = vmul.f32 %v2334, %v2411
  %v2419 = vmul.f32 %v2335, %v2411
  %v2420 = vmul.f32 %v2336, %v2411
  %v2421 = vmul.f32 %v2337, %v2411
  %v2422 = vmul.f32 %v2338, %v2411
  %v2423 = vmul.f32 %v2339, %v2411
  %v2424 = vmul.f32 %v2340, %v2411
  %v2425 = vmul.f32 %v2341, %v2411
  %v2426 = vmul.f32 %v2342, %v2411
  %v2427 = vmul.f32 %v2343, %v2411
  %v2428 = vadd.f32 %v2394, %v2412
  %v2429 = vadd.f32 %v2395, %v2413
  %v2430 = vadd.f32 %v2396, %v2414
  %v2431 = vadd.f32 %v2397, %v2415
  %v2432 = vadd.f32 %v2398, %v2416
  %v2433 = vadd.f32 %v2399, %v2417
  %v2434 = vadd.f32 %v2400, %v2418
  %v2435 = vadd.f32 %v2401, %v2419
  %v2436 = vadd.f32 %v2402, %v2420
  %v2437 = vadd.f32 %v2403, %v2421
  %v2438 = vadd.f32 %v2404, %v2422
  %v2439 = vadd.f32 %v2405, %v2423
  %v2440 = vadd.f32 %v2406, %v2424
  %v2441 = vadd.f32 %v2407, %v2425
  %v2442 = vadd.f32 %v2408, %v2426
  %v2443 = vadd.f32 %v2409, %v2427
  %s2444 = scalar_lea.vmem %s14, 40
  %v2445 = vld [vmem:[%s2444] sm:$0xff]
  %v2446 = vrot.slane %v2328, 1
  %v2447 = vrot.slane %v2329, 1
  %v2448 = vrot.slane %v2330, 1
  %v2449 = vrot.slane %v2331, 1
  %v2450 = vrot.slane %v2332, 1
  %v2451 = vrot.slane %v2333, 1
  %v2452 = vrot.slane %v2334, 1
  %v2453 = vrot.slane %v2335, 1
  %v2454 = vrot.slane %v2336, 1
  %v2455 = vrot.slane %v2337, 1
  %v2456 = vrot.slane %v2338, 1
  %v2457 = vrot.slane %v2339, 1
  %v2458 = vrot.slane %v2340, 1
  %v2459 = vrot.slane %v2341, 1
  %v2460 = vrot.slane %v2342, 1
  %v2461 = vrot.slane %v2343, 1
  %v2462 = vsel %vm474, %v2446, 0.0
  %v2463 = vsel %vm474, %v2447, 0.0
  %v2464 = vsel %vm474, %v2448, 0.0
  %v2465 = vsel %vm474, %v2449, 0.0
  %v2466 = vsel %vm474, %v2450, 0.0
  %v2467 = vsel %vm474, %v2451, 0.0
  %v2468 = vsel %vm474, %v2452, 0.0
  %v2469 = vsel %vm474, %v2453, 0.0
  %v2470 = vsel %vm474, %v2454, 0.0
  %v2471 = vsel %vm474, %v2455, 0.0
  %v2472 = vsel %vm474, %v2456, 0.0
  %v2473 = vsel %vm474, %v2457, 0.0
  %v2474 = vsel %vm474, %v2458, 0.0
  %v2475 = vsel %vm474, %v2459, 0.0
  %v2476 = vsel %vm474, %v2460, 0.0
  %v2477 = vsel %vm474, %v2461, 0.0
  %v2478 = vmul.f32 %v2462, %v2445
  %v2479 = vmul.f32 %v2463, %v2445
  %v2480 = vmul.f32 %v2464, %v2445
  %v2481 = vmul.f32 %v2465, %v2445
  %v2482 = vmul.f32 %v2466, %v2445
  %v2483 = vmul.f32 %v2467, %v2445
  %v2484 = vmul.f32 %v2468, %v2445
  %v2485 = vmul.f32 %v2469, %v2445
  %v2486 = vmul.f32 %v2470, %v2445
  %v2487 = vmul.f32 %v2471, %v2445
  %v2488 = vmul.f32 %v2472, %v2445
  %v2489 = vmul.f32 %v2473, %v2445
  %v2490 = vmul.f32 %v2474, %v2445
  %v2491 = vmul.f32 %v2475, %v2445
  %v2492 = vmul.f32 %v2476, %v2445
  %v2493 = vmul.f32 %v2477, %v2445
  %v2494 = vadd.f32 %v2428, %v2478
  %v2495 = vadd.f32 %v2429, %v2479
  %v2496 = vadd.f32 %v2430, %v2480
  %v2497 = vadd.f32 %v2431, %v2481
  %v2498 = vadd.f32 %v2432, %v2482
  %v2499 = vadd.f32 %v2433, %v2483
  %v2500 = vadd.f32 %v2434, %v2484
  %v2501 = vadd.f32 %v2435, %v2485
  %v2502 = vadd.f32 %v2436, %v2486
  %v2503 = vadd.f32 %v2437, %v2487
  %v2504 = vadd.f32 %v2438, %v2488
  %v2505 = vadd.f32 %v2439, %v2489
  %v2506 = vadd.f32 %v2440, %v2490
  %v2507 = vadd.f32 %v2441, %v2491
  %v2508 = vadd.f32 %v2442, %v2492
  %v2509 = vadd.f32 %v2443, %v2493
  %v2510 = vld [vmem:[%s705] sm:$0xff]
  %v2511 = vld [vmem:[%s705 + $0x8] sm:$0xff]
  %v2512 = vld [vmem:[%s705 + $0x10] sm:$0xff]
  %v2513 = vld [vmem:[%s705 + $0x18] sm:$0xff]
  %v2514 = vld [vmem:[%s705 + $0x20] sm:$0xff]
  %v2515 = vld [vmem:[%s705 + $0x28] sm:$0xff]
  %v2516 = vld [vmem:[%s705 + $0x30] sm:$0xff]
  %v2517 = vld [vmem:[%s705 + $0x38] sm:$0xff]
  %v2518 = vld [vmem:[%s705 + $0x50] sm:$0xff]
  %v2519 = vld [vmem:[%s705 + $0x58] sm:$0xff]
  %v2520 = vld [vmem:[%s705 + $0x60] sm:$0xff]
  %v2521 = vld [vmem:[%s705 + $0x68] sm:$0xff]
  %v2522 = vld [vmem:[%s705 + $0x70] sm:$0xff]
  %v2523 = vld [vmem:[%s705 + $0x78] sm:$0xff]
  %v2524 = vld [vmem:[%s705 + $0x80] sm:$0xff]
  %v2525 = vld [vmem:[%s705 + $0x88] sm:$0xff]
  %s2526 = scalar_lea.vmem %s14, 48
  %v2527 = vld [vmem:[%s2526] sm:$0xff]
  %v2528 = vrot.slane %v2510, 7
  %v2529 = vrot.slane %v2511, 7
  %v2530 = vrot.slane %v2512, 7
  %v2531 = vrot.slane %v2513, 7
  %v2532 = vrot.slane %v2514, 7
  %v2533 = vrot.slane %v2515, 7
  %v2534 = vrot.slane %v2516, 7
  %v2535 = vrot.slane %v2517, 7
  %v2536 = vrot.slane %v2518, 7
  %v2537 = vrot.slane %v2519, 7
  %v2538 = vrot.slane %v2520, 7
  %v2539 = vrot.slane %v2521, 7
  %v2540 = vrot.slane %v2522, 7
  %v2541 = vrot.slane %v2523, 7
  %v2542 = vrot.slane %v2524, 7
  %v2543 = vrot.slane %v2525, 7
  %v2544 = vsel %vm372, %v2528, 0.0
  %v2545 = vsel %vm372, %v2529, 0.0
  %v2546 = vsel %vm372, %v2530, 0.0
  %v2547 = vsel %vm372, %v2531, 0.0
  %v2548 = vsel %vm372, %v2532, 0.0
  %v2549 = vsel %vm372, %v2533, 0.0
  %v2550 = vsel %vm372, %v2534, 0.0
  %v2551 = vsel %vm372, %v2535, 0.0
  %v2552 = vsel %vm372, %v2536, 0.0
  %v2553 = vsel %vm372, %v2537, 0.0
  %v2554 = vsel %vm372, %v2538, 0.0
  %v2555 = vsel %vm372, %v2539, 0.0
  %v2556 = vsel %vm372, %v2540, 0.0
  %v2557 = vsel %vm372, %v2541, 0.0
  %v2558 = vsel %vm372, %v2542, 0.0
  %v2559 = vsel %vm372, %v2543, 0.0
  %v2560 = vmul.f32 %v2544, %v2527
  %v2561 = vmul.f32 %v2545, %v2527
  %v2562 = vmul.f32 %v2546, %v2527
  %v2563 = vmul.f32 %v2547, %v2527
  %v2564 = vmul.f32 %v2548, %v2527
  %v2565 = vmul.f32 %v2549, %v2527
  %v2566 = vmul.f32 %v2550, %v2527
  %v2567 = vmul.f32 %v2551, %v2527
  %v2568 = vmul.f32 %v2552, %v2527
  %v2569 = vmul.f32 %v2553, %v2527
  %v2570 = vmul.f32 %v2554, %v2527
  %v2571 = vmul.f32 %v2555, %v2527
  %v2572 = vmul.f32 %v2556, %v2527
  %v2573 = vmul.f32 %v2557, %v2527
  %v2574 = vmul.f32 %v2558, %v2527
  %v2575 = vmul.f32 %v2559, %v2527
  %v2576 = vadd.f32 %v2494, %v2560
  %v2577 = vadd.f32 %v2495, %v2561
  %v2578 = vadd.f32 %v2496, %v2562
  %v2579 = vadd.f32 %v2497, %v2563
  %v2580 = vadd.f32 %v2498, %v2564
  %v2581 = vadd.f32 %v2499, %v2565
  %v2582 = vadd.f32 %v2500, %v2566
  %v2583 = vadd.f32 %v2501, %v2567
  %v2584 = vadd.f32 %v2502, %v2568
  %v2585 = vadd.f32 %v2503, %v2569
  %v2586 = vadd.f32 %v2504, %v2570
  %v2587 = vadd.f32 %v2505, %v2571
  %v2588 = vadd.f32 %v2506, %v2572
  %v2589 = vadd.f32 %v2507, %v2573
  %v2590 = vadd.f32 %v2508, %v2574
  %v2591 = vadd.f32 %v2509, %v2575
  %s2592 = scalar_lea.vmem %s14, 56
  %v2593 = vld [vmem:[%s2592] sm:$0xff]
  %v2594 = vmul.f32 %v2510, %v2593
  %v2595 = vmul.f32 %v2511, %v2593
  %v2596 = vmul.f32 %v2512, %v2593
  %v2597 = vmul.f32 %v2513, %v2593
  %v2598 = vmul.f32 %v2514, %v2593
  %v2599 = vmul.f32 %v2515, %v2593
  %v2600 = vmul.f32 %v2516, %v2593
  %v2601 = vmul.f32 %v2517, %v2593
  %v2602 = vmul.f32 %v2518, %v2593
  %v2603 = vmul.f32 %v2519, %v2593
  %v2604 = vmul.f32 %v2520, %v2593
  %v2605 = vmul.f32 %v2521, %v2593
  %v2606 = vmul.f32 %v2522, %v2593
  %v2607 = vmul.f32 %v2523, %v2593
  %v2608 = vmul.f32 %v2524, %v2593
  %v2609 = vmul.f32 %v2525, %v2593
  %v2610 = vadd.f32 %v2576, %v2594
  %v2611 = vadd.f32 %v2577, %v2595
  %v2612 = vadd.f32 %v2578, %v2596
  %v2613 = vadd.f32 %v2579, %v2597
  %v2614 = vadd.f32 %v2580, %v2598
  %v2615 = vadd.f32 %v2581, %v2599
  %v2616 = vadd.f32 %v2582, %v2600
  %v2617 = vadd.f32 %v2583, %v2601
  %v2618 = vadd.f32 %v2584, %v2602
  %v2619 = vadd.f32 %v2585, %v2603
  %v2620 = vadd.f32 %v2586, %v2604
  %v2621 = vadd.f32 %v2587, %v2605
  %v2622 = vadd.f32 %v2588, %v2606
  %v2623 = vadd.f32 %v2589, %v2607
  %v2624 = vadd.f32 %v2590, %v2608
  %v2625 = vadd.f32 %v2591, %v2609
  %s2626 = scalar_lea.vmem %s14, 64
  %v2627 = vld [vmem:[%s2626] sm:$0xff]
  %v2628 = vrot.slane %v2510, 1
  %v2629 = vrot.slane %v2511, 1
  %v2630 = vrot.slane %v2512, 1
  %v2631 = vrot.slane %v2513, 1
  %v2632 = vrot.slane %v2514, 1
  %v2633 = vrot.slane %v2515, 1
  %v2634 = vrot.slane %v2516, 1
  %v2635 = vrot.slane %v2517, 1
  %v2636 = vrot.slane %v2518, 1
  %v2637 = vrot.slane %v2519, 1
  %v2638 = vrot.slane %v2520, 1
  %v2639 = vrot.slane %v2521, 1
  %v2640 = vrot.slane %v2522, 1
  %v2641 = vrot.slane %v2523, 1
  %v2642 = vrot.slane %v2524, 1
  %v2643 = vrot.slane %v2525, 1
  %v2644 = vsel %vm474, %v2628, 0.0
  %v2645 = vsel %vm474, %v2629, 0.0
  %v2646 = vsel %vm474, %v2630, 0.0
  %v2647 = vsel %vm474, %v2631, 0.0
  %v2648 = vsel %vm474, %v2632, 0.0
  %v2649 = vsel %vm474, %v2633, 0.0
  %v2650 = vsel %vm474, %v2634, 0.0
  %v2651 = vsel %vm474, %v2635, 0.0
  %v2652 = vsel %vm474, %v2636, 0.0
  %v2653 = vsel %vm474, %v2637, 0.0
  %v2654 = vsel %vm474, %v2638, 0.0
  %v2655 = vsel %vm474, %v2639, 0.0
  %v2656 = vsel %vm474, %v2640, 0.0
  %v2657 = vsel %vm474, %v2641, 0.0
  %v2658 = vsel %vm474, %v2642, 0.0
  %v2659 = vsel %vm474, %v2643, 0.0
  %v2660 = vmul.f32 %v2644, %v2627
  %v2661 = vmul.f32 %v2645, %v2627
  %v2662 = vmul.f32 %v2646, %v2627
  %v2663 = vmul.f32 %v2647, %v2627
  %v2664 = vmul.f32 %v2648, %v2627
  %v2665 = vmul.f32 %v2649, %v2627
  %v2666 = vmul.f32 %v2650, %v2627
  %v2667 = vmul.f32 %v2651, %v2627
  %v2668 = vmul.f32 %v2652, %v2627
  %v2669 = vmul.f32 %v2653, %v2627
  %v2670 = vmul.f32 %v2654, %v2627
  %v2671 = vmul.f32 %v2655, %v2627
  %v2672 = vmul.f32 %v2656, %v2627
  %v2673 = vmul.f32 %v2657, %v2627
  %v2674 = vmul.f32 %v2658, %v2627
  %v2675 = vmul.f32 %v2659, %v2627
  %v2676 = vadd.f32 %v2610, %v2660
  %v2677 = vadd.f32 %v2611, %v2661
  %v2678 = vadd.f32 %v2612, %v2662
  %v2679 = vadd.f32 %v2613, %v2663
  %v2680 = vadd.f32 %v2614, %v2664
  %v2681 = vadd.f32 %v2615, %v2665
  %v2682 = vadd.f32 %v2616, %v2666
  %v2683 = vadd.f32 %v2617, %v2667
  %v2684 = vadd.f32 %v2618, %v2668
  %v2685 = vadd.f32 %v2619, %v2669
  %v2686 = vadd.f32 %v2620, %v2670
  %v2687 = vadd.f32 %v2621, %v2671
  %v2688 = vadd.f32 %v2622, %v2672
  %v2689 = vadd.f32 %v2623, %v2673
  %v2690 = vadd.f32 %v2624, %v2674
  %v2691 = vadd.f32 %v2625, %v2675
  %v2692 = vld [vmem:[%s15] sm:$0xff]
  %v2693 = vld [vmem:[%s15 + $0x8] sm:$0xff]
  %v2695 = vsel %vm316, %v2676, 0
  %v2698 = vsel %vm316, %v2677, 0
  %v2701 = vsel %vm316, %v2678, 0
  %v2704 = vsel %vm316, %v2679, 0
  %v2707 = vsel %vm316, %v2680, 0
  %v2710 = vsel %vm316, %v2681, 0
  %v2713 = vsel %vm316, %v2682, 0
  %v2716 = vsel %vm316, %v2683, 0
  %v2719 = vsel %vm316, %v2684, 0
  %v2722 = vsel %vm316, %v2685, 0
  %v2725 = vsel %vm316, %v2686, 0
  %v2728 = vsel %vm316, %v2687, 0
  %v2731 = vsel %vm316, %v2688, 0
  %v2734 = vsel %vm316, %v2689, 0
  %v2737 = vsel %vm316, %v2690, 0
  %v2740 = vsel %vm316, %v2691, 0
  %2742 = vmatprep.subr.mxu0 0.0
  %2743 = vmatpush1.msra.mxu0 0.0
  %2744 = vmatprep.subr.mxu0 0.0
  %2745 = vmatpush1.msra.mxu0 0.0
  %2746 = vmatprep.subr.mxu0 0.0
  %2747 = vmatpush1.msra.mxu0 0.0
  %2748 = vmatprep.subr.mxu0 0.0
  %2749 = vmatpush1.msra.mxu0 0.0
  %2750 = vmatprep.subr.mxu0 0.0
  %2751 = vmatpush1.msra.mxu0 0.0
  %2752 = vmatprep.subr.mxu0 0.0
  %2753 = vmatpush1.msra.mxu0 0.0
  %2754 = vmatprep.subr.mxu0 0.0
  %2755 = vmatpush1.msra.mxu0 0.0
  %2756 = vmatprep.subr.mxu0 0.0
  %2757 = vmatpush1.msra.mxu0 0.0
  %2758 = vmatprep.subr.mxu0 0.0
  %2759 = vmatpush1.msra.mxu0 0.0
  %2760 = vmatprep.subr.mxu0 0.0
  %2761 = vmatpush1.msra.mxu0 0.0
  %2762 = vmatprep.subr.mxu0 0.0
  %2763 = vmatpush1.msra.mxu0 0.0
  %2764 = vmatprep.subr.mxu0 0.0
  %2765 = vmatpush1.msra.mxu0 0.0
  %2766 = vmatprep.subr.mxu0 0.0
  %2767 = vmatpush1.msra.mxu0 0.0
  %2768 = vmatprep.subr.mxu0 0.0
  %2769 = vmatpush1.msra.mxu0 0.0
  %2770 = vmatprep.subr.mxu0 0.0
  %2771 = vmatpush1.msra.mxu0 %v2693
  %2772 = vmatprep.subr.mxu0 0.0
  %2773 = vmatpush1.msra.mxu0 %v2692
  %2774 = vmatprep.subr.mxu0 0.0
  %2775 = vmatpush2.msra.mxu0 0.0
  %2776 = vmatprep.subr.mxu0 0.0
  %2777 = vmatpush2.msra.mxu0 0.0
  %2778 = vmatprep.subr.mxu0 0.0
  %2779 = vmatpush2.msra.mxu0 0.0
  %2780 = vmatprep.subr.mxu0 0.0
  %2781 = vmatpush2.msra.mxu0 0.0
  %2782 = vmatprep.subr.mxu0 0.0
  %2783 = vmatpush2.msra.mxu0 0.0
  %2784 = vmatprep.subr.mxu0 0.0
  %2785 = vmatpush2.msra.mxu0 0.0
  %2786 = vmatprep.subr.mxu0 0.0
  %2787 = vmatpush2.msra.mxu0 0.0
  %2788 = vmatprep.subr.mxu0 0.0
  %2789 = vmatpush2.msra.mxu0 0.0
  %2790 = vmatprep.subr.mxu0 0.0
  %2791 = vmatpush2.msra.mxu0 0.0
  %2792 = vmatprep.subr.mxu0 0.0
  %2793 = vmatpush2.msra.mxu0 0.0
  %2794 = vmatprep.subr.mxu0 0.0
  %2795 = vmatpush2.msra.mxu0 0.0
  %2796 = vmatprep.subr.mxu0 0.0
  %2797 = vmatpush2.msra.mxu0 0.0
  %2798 = vmatprep.subr.mxu0 0.0
  %2799 = vmatpush2.msra.mxu0 0.0
  %2800 = vmatprep.subr.mxu0 0.0
  %2801 = vmatpush2.msra.mxu0 0.0
  %2802 = vmatprep.subr.mxu0 0.0
  %2803 = vmatpush2.msra.mxu0 0.0
  %2804 = vmatprep.subr.mxu0 0.0
  %2805 = vmatpush2.msra.mxu0 0.0
  %2806 = vmatprep.mubr.f32.mxu0 0.0
  %2807 = vmatmul.mubr.f32.gmra.mxu0 %v2695
  %v2808 = vpop.f32.mrf.mxu0
  %v2809 = vadd.f32 0.0, %v2808
  %v2810 = vpop.f32.mrf.mxu0
  %2811 = vmatprep.mubr.f32.mxu0 0.0
  %2812 = vmatmul.mubr.f32.gmra.mxu0 %v2698
  %v2813 = vpop.f32.mrf.mxu0
  %v2814 = vadd.f32 0.0, %v2813
  %v2815 = vpop.f32.mrf.mxu0
  %2816 = vmatprep.mubr.f32.mxu0 0.0
  %2817 = vmatmul.mubr.f32.gmra.mxu0 %v2701
  %v2818 = vpop.f32.mrf.mxu0
  %v2819 = vadd.f32 0.0, %v2818
  %v2820 = vpop.f32.mrf.mxu0
  %2821 = vmatprep.mubr.f32.mxu0 0.0
  %2822 = vmatmul.mubr.f32.gmra.mxu0 %v2704
  %v2823 = vpop.f32.mrf.mxu0
  %v2824 = vadd.f32 0.0, %v2823
  %v2825 = vpop.f32.mrf.mxu0
  %2826 = vmatprep.mubr.f32.mxu0 0.0
  %2827 = vmatmul.mubr.f32.gmra.mxu0 %v2707
  %v2828 = vpop.f32.mrf.mxu0
  %v2829 = vadd.f32 0.0, %v2828
  %v2830 = vpop.f32.mrf.mxu0
  %2831 = vmatprep.mubr.f32.mxu0 0.0
  %2832 = vmatmul.mubr.f32.gmra.mxu0 %v2710
  %v2833 = vpop.f32.mrf.mxu0
  %v2834 = vadd.f32 0.0, %v2833
  %v2835 = vpop.f32.mrf.mxu0
  %2836 = vmatprep.mubr.f32.mxu0 0.0
  %2837 = vmatmul.mubr.f32.gmra.mxu0 %v2713
  %v2838 = vpop.f32.mrf.mxu0
  %v2839 = vadd.f32 0.0, %v2838
  %v2840 = vpop.f32.mrf.mxu0
  %2841 = vmatprep.mubr.f32.mxu0 0.0
  %2842 = vmatmul.mubr.f32.gmra.mxu0 %v2716
  %v2843 = vpop.f32.mrf.mxu0
  %v2844 = vadd.f32 0.0, %v2843
  %v2845 = vpop.f32.mrf.mxu0
  %2846 = vmatprep.mubr.f32.mxu0 0.0
  %2847 = vmatmul.mubr.f32.gmra.mxu0 %v2719
  %v2848 = vpop.f32.mrf.mxu0
  %v2849 = vadd.f32 0.0, %v2848
  %v2850 = vpop.f32.mrf.mxu0
  %2851 = vmatprep.mubr.f32.mxu0 0.0
  %2852 = vmatmul.mubr.f32.gmra.mxu0 %v2722
  %v2853 = vpop.f32.mrf.mxu0
  %v2854 = vadd.f32 0.0, %v2853
  %v2855 = vpop.f32.mrf.mxu0
  %2856 = vmatprep.mubr.f32.mxu0 0.0
  %2857 = vmatmul.mubr.f32.gmra.mxu0 %v2725
  %v2858 = vpop.f32.mrf.mxu0
  %v2859 = vadd.f32 0.0, %v2858
  %v2860 = vpop.f32.mrf.mxu0
  %2861 = vmatprep.mubr.f32.mxu0 0.0
  %2862 = vmatmul.mubr.f32.gmra.mxu0 %v2728
  %v2863 = vpop.f32.mrf.mxu0
  %v2864 = vadd.f32 0.0, %v2863
  %v2865 = vpop.f32.mrf.mxu0
  %2866 = vmatprep.mubr.f32.mxu0 0.0
  %2867 = vmatmul.mubr.f32.gmra.mxu0 %v2731
  %v2868 = vpop.f32.mrf.mxu0
  %v2869 = vadd.f32 0.0, %v2868
  %v2870 = vpop.f32.mrf.mxu0
  %2871 = vmatprep.mubr.f32.mxu0 0.0
  %2872 = vmatmul.mubr.f32.gmra.mxu0 %v2734
  %v2873 = vpop.f32.mrf.mxu0
  %v2874 = vadd.f32 0.0, %v2873
  %v2875 = vpop.f32.mrf.mxu0
  %2876 = vmatprep.mubr.f32.mxu0 0.0
  %2877 = vmatmul.mubr.f32.gmra.mxu0 %v2737
  %v2878 = vpop.f32.mrf.mxu0
  %v2879 = vadd.f32 0.0, %v2878
  %v2880 = vpop.f32.mrf.mxu0
  %2881 = vmatprep.mubr.f32.mxu0 0.0
  %2882 = vmatmul.mubr.f32.gmra.mxu0 %v2740
  %v2883 = vpop.f32.mrf.mxu0
  %v2884 = vadd.f32 0.0, %v2883
  %v2885 = vpop.f32.mrf.mxu0
  %2886 = vdwg.mxu0
  %v2887 = vxor.u32 %v2809, 2147483648
  %v2888 = vxor.u32 %v2814, 2147483648
  %v2889 = vxor.u32 %v2819, 2147483648
  %v2890 = vxor.u32 %v2824, 2147483648
  %v2891 = vxor.u32 %v2829, 2147483648
  %v2892 = vxor.u32 %v2834, 2147483648
  %v2893 = vxor.u32 %v2839, 2147483648
  %v2894 = vxor.u32 %v2844, 2147483648
  %v2895 = vxor.u32 %v2849, 2147483648
  %v2896 = vxor.u32 %v2854, 2147483648
  %v2897 = vxor.u32 %v2859, 2147483648
  %v2898 = vxor.u32 %v2864, 2147483648
  %v2899 = vxor.u32 %v2869, 2147483648
  %v2900 = vxor.u32 %v2874, 2147483648
  %v2901 = vxor.u32 %v2879, 2147483648
  %v2902 = vxor.u32 %v2884, 2147483648
  %v2903 = vmul.f32 %v2887, 1.442695
  %v2904 = vpow.pop %v2903
  %v2905 = vmul.f32 %v2888, 1.442695
  %v2906 = vpow.pop %v2905
  %v2907 = vmul.f32 %v2889, 1.442695
  %v2908 = vpow.pop %v2907
  %v2909 = vmul.f32 %v2890, 1.442695
  %v2910 = vpow.pop %v2909
  %v2911 = vmul.f32 %v2891, 1.442695
  %v2912 = vpow.pop %v2911
  %v2913 = vmul.f32 %v2892, 1.442695
  %v2914 = vpow.pop %v2913
  %v2915 = vmul.f32 %v2893, 1.442695
  %v2916 = vpow.pop %v2915
  %v2917 = vmul.f32 %v2894, 1.442695
  %v2918 = vpow.pop %v2917
  %v2919 = vmul.f32 %v2895, 1.442695
  %v2920 = vpow.pop %v2919
  %v2921 = vmul.f32 %v2896, 1.442695
  %v2922 = vpow.pop %v2921
  %v2923 = vmul.f32 %v2897, 1.442695
  %v2924 = vpow.pop %v2923
  %v2925 = vmul.f32 %v2898, 1.442695
  %v2926 = vpow.pop %v2925
  %v2927 = vmul.f32 %v2899, 1.442695
  %v2928 = vpow.pop %v2927
  %v2929 = vmul.f32 %v2900, 1.442695
  %v2930 = vpow.pop %v2929
  %v2931 = vmul.f32 %v2901, 1.442695
  %v2932 = vpow.pop %v2931
  %v2933 = vmul.f32 %v2902, 1.442695
  %v2934 = vpow.pop %v2933
  %v2935 = vadd.f32 %v2904, 1.0
  %v2936 = vadd.f32 %v2906, 1.0
  %v2937 = vadd.f32 %v2908, 1.0
  %v2938 = vadd.f32 %v2910, 1.0
  %v2939 = vadd.f32 %v2912, 1.0
  %v2940 = vadd.f32 %v2914, 1.0
  %v2941 = vadd.f32 %v2916, 1.0
  %v2942 = vadd.f32 %v2918, 1.0
  %v2943 = vadd.f32 %v2920, 1.0
  %v2944 = vadd.f32 %v2922, 1.0
  %v2945 = vadd.f32 %v2924, 1.0
  %v2946 = vadd.f32 %v2926, 1.0
  %v2947 = vadd.f32 %v2928, 1.0
  %v2948 = vadd.f32 %v2930, 1.0
  %v2949 = vadd.f32 %v2932, 1.0
  %v2950 = vadd.f32 %v2934, 1.0
  %v2951 = vrcp.pop %v2935
  %v2952 = vmul.f32 1.0, %v2951
  %v2953 = vrcp.pop %v2936
  %v2954 = vmul.f32 1.0, %v2953
  %v2955 = vrcp.pop %v2937
  %v2956 = vmul.f32 1.0, %v2955
  %v2957 = vrcp.pop %v2938
  %v2958 = vmul.f32 1.0, %v2957
  %v2959 = vrcp.pop %v2939
  %v2960 = vmul.f32 1.0, %v2959
  %v2961 = vrcp.pop %v2940
  %v2962 = vmul.f32 1.0, %v2961
  %v2963 = vrcp.pop %v2941
  %v2964 = vmul.f32 1.0, %v2963
  %v2965 = vrcp.pop %v2942
  %v2966 = vmul.f32 1.0, %v2965
  %v2967 = vrcp.pop %v2943
  %v2968 = vmul.f32 1.0, %v2967
  %v2969 = vrcp.pop %v2944
  %v2970 = vmul.f32 1.0, %v2969
  %v2971 = vrcp.pop %v2945
  %v2972 = vmul.f32 1.0, %v2971
  %v2973 = vrcp.pop %v2946
  %v2974 = vmul.f32 1.0, %v2973
  %v2975 = vrcp.pop %v2947
  %v2976 = vmul.f32 1.0, %v2975
  %v2977 = vrcp.pop %v2948
  %v2978 = vmul.f32 1.0, %v2977
  %v2979 = vrcp.pop %v2949
  %v2980 = vmul.f32 1.0, %v2979
  %v2981 = vrcp.pop %v2950
  %v2982 = vmul.f32 1.0, %v2981
  %v2983 = vmax.f32 %v2809, 0.0
  %v2984 = vmax.f32 %v2814, 0.0
  %v2985 = vmax.f32 %v2819, 0.0
  %v2986 = vmax.f32 %v2824, 0.0
  %v2987 = vmax.f32 %v2829, 0.0
  %v2988 = vmax.f32 %v2834, 0.0
  %v2989 = vmax.f32 %v2839, 0.0
  %v2990 = vmax.f32 %v2844, 0.0
  %v2991 = vmax.f32 %v2849, 0.0
  %v2992 = vmax.f32 %v2854, 0.0
  %v2993 = vmax.f32 %v2859, 0.0
  %v2994 = vmax.f32 %v2864, 0.0
  %v2995 = vmax.f32 %v2869, 0.0
  %v2996 = vmax.f32 %v2874, 0.0
  %v2997 = vmax.f32 %v2879, 0.0
  %v2998 = vmax.f32 %v2884, 0.0
  %3015 = vrot.lane.b32.xlu0 %v1138, 16
  %v3016 = vpop.permute.xlu0 %3015
  %3017 = vrot.lane.b32.xlu0 %v1139, 16
  %v3018 = vpop.permute.xlu0 %3017
  %3019 = vrot.lane.b32.xlu0 %v1140, 16
  %v3020 = vpop.permute.xlu0 %3019
  %3021 = vrot.lane.b32.xlu0 %v1141, 16
  %v3022 = vpop.permute.xlu0 %3021
  %3023 = vrot.lane.b32.xlu0 %v1142, 16
  %v3024 = vpop.permute.xlu0 %3023
  %3025 = vrot.lane.b32.xlu0 %v1143, 16
  %v3026 = vpop.permute.xlu0 %3025
  %3027 = vrot.lane.b32.xlu0 %v1144, 16
  %v3028 = vpop.permute.xlu0 %3027
  %3029 = vrot.lane.b32.xlu0 %v1145, 16
  %v3030 = vpop.permute.xlu0 %3029
  %3031 = vrot.lane.b32.xlu0 %v1146, 16
  %v3032 = vpop.permute.xlu0 %3031
  %3033 = vrot.lane.b32.xlu0 %v1147, 16
  %v3034 = vpop.permute.xlu0 %3033
  %3035 = vrot.lane.b32.xlu0 %v1148, 16
  %v3036 = vpop.permute.xlu0 %3035
  %3037 = vrot.lane.b32.xlu0 %v1149, 16
  %v3038 = vpop.permute.xlu0 %3037
  %3039 = vrot.lane.b32.xlu0 %v1150, 16
  %v3040 = vpop.permute.xlu0 %3039
  %3041 = vrot.lane.b32.xlu0 %v1151, 16
  %v3042 = vpop.permute.xlu0 %3041
  %3043 = vrot.lane.b32.xlu0 %v1152, 16
  %v3044 = vpop.permute.xlu0 %3043
  %3045 = vrot.lane.b32.xlu0 %v1153, 16
  %v3046 = vpop.permute.xlu0 %3045
  %v3063 = vmul.f32 %v2952, %v3016
  %v3064 = vmul.f32 %v2954, %v3018
  %v3065 = vmul.f32 %v2956, %v3020
  %v3066 = vmul.f32 %v2958, %v3022
  %v3067 = vmul.f32 %v2960, %v3024
  %v3068 = vmul.f32 %v2962, %v3026
  %v3069 = vmul.f32 %v2964, %v3028
  %v3070 = vmul.f32 %v2966, %v3030
  %v3071 = vmul.f32 %v2968, %v3032
  %v3072 = vmul.f32 %v2970, %v3034
  %v3073 = vmul.f32 %v2972, %v3036
  %v3074 = vmul.f32 %v2974, %v3038
  %v3075 = vmul.f32 %v2976, %v3040
  %v3076 = vmul.f32 %v2978, %v3042
  %v3077 = vmul.f32 %v2980, %v3044
  %v3078 = vmul.f32 %v2982, %v3046
  %3095 = vrot.lane.b32.xlu0 %v2983, 80
  %v3096 = vpop.permute.xlu0 %3095
  %3097 = vrot.lane.b32.xlu0 %v2984, 80
  %v3098 = vpop.permute.xlu0 %3097
  %3099 = vrot.lane.b32.xlu0 %v2985, 80
  %v3100 = vpop.permute.xlu0 %3099
  %3101 = vrot.lane.b32.xlu0 %v2986, 80
  %v3102 = vpop.permute.xlu0 %3101
  %3103 = vrot.lane.b32.xlu0 %v2987, 80
  %v3104 = vpop.permute.xlu0 %3103
  %3105 = vrot.lane.b32.xlu0 %v2988, 80
  %v3106 = vpop.permute.xlu0 %3105
  %3107 = vrot.lane.b32.xlu0 %v2989, 80
  %v3108 = vpop.permute.xlu0 %3107
  %3109 = vrot.lane.b32.xlu0 %v2990, 80
  %v3110 = vpop.permute.xlu0 %3109
  %3111 = vrot.lane.b32.xlu0 %v2991, 80
  %v3112 = vpop.permute.xlu0 %3111
  %3113 = vrot.lane.b32.xlu0 %v2992, 80
  %v3114 = vpop.permute.xlu0 %3113
  %3115 = vrot.lane.b32.xlu0 %v2993, 80
  %v3116 = vpop.permute.xlu0 %3115
  %3117 = vrot.lane.b32.xlu0 %v2994, 80
  %v3118 = vpop.permute.xlu0 %3117
  %3119 = vrot.lane.b32.xlu0 %v2995, 80
  %v3120 = vpop.permute.xlu0 %3119
  %3121 = vrot.lane.b32.xlu0 %v2996, 80
  %v3122 = vpop.permute.xlu0 %3121
  %3123 = vrot.lane.b32.xlu0 %v2997, 80
  %v3124 = vpop.permute.xlu0 %3123
  %3125 = vrot.lane.b32.xlu0 %v2998, 80
  %v3126 = vpop.permute.xlu0 %3125
  %v3143 = vmul.f32 %v2952, %v3096
  %v3144 = vmul.f32 %v2954, %v3098
  %v3145 = vmul.f32 %v2956, %v3100
  %v3146 = vmul.f32 %v2958, %v3102
  %v3147 = vmul.f32 %v2960, %v3104
  %v3148 = vmul.f32 %v2962, %v3106
  %v3149 = vmul.f32 %v2964, %v3108
  %v3150 = vmul.f32 %v2966, %v3110
  %v3151 = vmul.f32 %v2968, %v3112
  %v3152 = vmul.f32 %v2970, %v3114
  %v3153 = vmul.f32 %v2972, %v3116
  %v3154 = vmul.f32 %v2974, %v3118
  %v3155 = vmul.f32 %v2976, %v3120
  %v3156 = vmul.f32 %v2978, %v3122
  %v3157 = vmul.f32 %v2980, %v3124
  %v3158 = vmul.f32 %v2982, %v3126
  %3175 = vrot.lane.b32.xlu0 %v3143, 16
  %v3176 = vpop.permute.xlu0 %3175
  %3177 = vrot.lane.b32.xlu0 %v3144, 16
  %v3178 = vpop.permute.xlu0 %3177
  %3179 = vrot.lane.b32.xlu0 %v3145, 16
  %v3180 = vpop.permute.xlu0 %3179
  %3181 = vrot.lane.b32.xlu0 %v3146, 16
  %v3182 = vpop.permute.xlu0 %3181
  %3183 = vrot.lane.b32.xlu0 %v3147, 16
  %v3184 = vpop.permute.xlu0 %3183
  %3185 = vrot.lane.b32.xlu0 %v3148, 16
  %v3186 = vpop.permute.xlu0 %3185
  %3187 = vrot.lane.b32.xlu0 %v3149, 16
  %v3188 = vpop.permute.xlu0 %3187
  %3189 = vrot.lane.b32.xlu0 %v3150, 16
  %v3190 = vpop.permute.xlu0 %3189
  %3191 = vrot.lane.b32.xlu0 %v3151, 16
  %v3192 = vpop.permute.xlu0 %3191
  %3193 = vrot.lane.b32.xlu0 %v3152, 16
  %v3194 = vpop.permute.xlu0 %3193
  %3195 = vrot.lane.b32.xlu0 %v3153, 16
  %v3196 = vpop.permute.xlu0 %3195
  %3197 = vrot.lane.b32.xlu0 %v3154, 16
  %v3198 = vpop.permute.xlu0 %3197
  %3199 = vrot.lane.b32.xlu0 %v3155, 16
  %v3200 = vpop.permute.xlu0 %3199
  %3201 = vrot.lane.b32.xlu0 %v3156, 16
  %v3202 = vpop.permute.xlu0 %3201
  %3203 = vrot.lane.b32.xlu0 %v3157, 16
  %v3204 = vpop.permute.xlu0 %3203
  %3205 = vrot.lane.b32.xlu0 %v3158, 16
  %v3206 = vpop.permute.xlu0 %3205
  %v3223 = vadd.f32 %v3063, %v3176
  %v3224 = vadd.f32 %v3064, %v3178
  %v3225 = vadd.f32 %v3065, %v3180
  %v3226 = vadd.f32 %v3066, %v3182
  %v3227 = vadd.f32 %v3067, %v3184
  %v3228 = vadd.f32 %v3068, %v3186
  %v3229 = vadd.f32 %v3069, %v3188
  %v3230 = vadd.f32 %v3070, %v3190
  %v3231 = vadd.f32 %v3071, %v3192
  %v3232 = vadd.f32 %v3072, %v3194
  %v3233 = vadd.f32 %v3073, %v3196
  %v3234 = vadd.f32 %v3074, %v3198
  %v3235 = vadd.f32 %v3075, %v3200
  %v3236 = vadd.f32 %v3076, %v3202
  %v3237 = vadd.f32 %v3077, %v3204
  %v3238 = vadd.f32 %v3078, %v3206
  %v3239 = vmax.f32 %v3223, 0.0
  %v3240 = vmax.f32 %v3224, 0.0
  %v3241 = vmax.f32 %v3225, 0.0
  %v3242 = vmax.f32 %v3226, 0.0
  %v3243 = vmax.f32 %v3227, 0.0
  %v3244 = vmax.f32 %v3228, 0.0
  %v3245 = vmax.f32 %v3229, 0.0
  %v3246 = vmax.f32 %v3230, 0.0
  %v3247 = vmax.f32 %v3231, 0.0
  %v3248 = vmax.f32 %v3232, 0.0
  %v3249 = vmax.f32 %v3233, 0.0
  %v3250 = vmax.f32 %v3234, 0.0
  %v3251 = vmax.f32 %v3235, 0.0
  %v3252 = vmax.f32 %v3236, 0.0
  %v3253 = vmax.f32 %v3237, 0.0
  %v3254 = vmax.f32 %v3238, 0.0
  %3271 = vrot.lane.b32.xlu0 %v3239, 16
  %v3272 = vpop.permute.xlu0 %3271
  %3273 = vrot.lane.b32.xlu0 %v3240, 16
  %v3274 = vpop.permute.xlu0 %3273
  %3275 = vrot.lane.b32.xlu0 %v3241, 16
  %v3276 = vpop.permute.xlu0 %3275
  %3277 = vrot.lane.b32.xlu0 %v3242, 16
  %v3278 = vpop.permute.xlu0 %3277
  %3279 = vrot.lane.b32.xlu0 %v3243, 16
  %v3280 = vpop.permute.xlu0 %3279
  %3281 = vrot.lane.b32.xlu0 %v3244, 16
  %v3282 = vpop.permute.xlu0 %3281
  %3283 = vrot.lane.b32.xlu0 %v3245, 16
  %v3284 = vpop.permute.xlu0 %3283
  %3285 = vrot.lane.b32.xlu0 %v3246, 16
  %v3286 = vpop.permute.xlu0 %3285
  %3287 = vrot.lane.b32.xlu0 %v3247, 16
  %v3288 = vpop.permute.xlu0 %3287
  %3289 = vrot.lane.b32.xlu0 %v3248, 16
  %v3290 = vpop.permute.xlu0 %3289
  %3291 = vrot.lane.b32.xlu0 %v3249, 16
  %v3292 = vpop.permute.xlu0 %3291
  %3293 = vrot.lane.b32.xlu0 %v3250, 16
  %v3294 = vpop.permute.xlu0 %3293
  %3295 = vrot.lane.b32.xlu0 %v3251, 16
  %v3296 = vpop.permute.xlu0 %3295
  %3297 = vrot.lane.b32.xlu0 %v3252, 16
  %v3298 = vpop.permute.xlu0 %3297
  %3299 = vrot.lane.b32.xlu0 %v3253, 16
  %v3300 = vpop.permute.xlu0 %3299
  %3301 = vrot.lane.b32.xlu0 %v3254, 16
  %v3302 = vpop.permute.xlu0 %3301
  %v3319 = vmul.f32 %v2952, %v3272
  %v3320 = vmul.f32 %v2954, %v3274
  %v3321 = vmul.f32 %v2956, %v3276
  %v3322 = vmul.f32 %v2958, %v3278
  %v3323 = vmul.f32 %v2960, %v3280
  %v3324 = vmul.f32 %v2962, %v3282
  %v3325 = vmul.f32 %v2964, %v3284
  %v3326 = vmul.f32 %v2966, %v3286
  %v3327 = vmul.f32 %v2968, %v3288
  %v3328 = vmul.f32 %v2970, %v3290
  %v3329 = vmul.f32 %v2972, %v3292
  %v3330 = vmul.f32 %v2974, %v3294
  %v3331 = vmul.f32 %v2976, %v3296
  %v3332 = vmul.f32 %v2978, %v3298
  %v3333 = vmul.f32 %v2980, %v3300
  %v3334 = vmul.f32 %v2982, %v3302
  %3351 = vrot.lane.b32.xlu0 %v3319, 96
  %v3352 = vpop.permute.xlu0 %3351
  %3353 = vrot.lane.b32.xlu0 %v3320, 96
  %v3354 = vpop.permute.xlu0 %3353
  %3355 = vrot.lane.b32.xlu0 %v3321, 96
  %v3356 = vpop.permute.xlu0 %3355
  %3357 = vrot.lane.b32.xlu0 %v3322, 96
  %v3358 = vpop.permute.xlu0 %3357
  %3359 = vrot.lane.b32.xlu0 %v3323, 96
  %v3360 = vpop.permute.xlu0 %3359
  %3361 = vrot.lane.b32.xlu0 %v3324, 96
  %v3362 = vpop.permute.xlu0 %3361
  %3363 = vrot.lane.b32.xlu0 %v3325, 96
  %v3364 = vpop.permute.xlu0 %3363
  %3365 = vrot.lane.b32.xlu0 %v3326, 96
  %v3366 = vpop.permute.xlu0 %3365
  %3367 = vrot.lane.b32.xlu0 %v3327, 96
  %v3368 = vpop.permute.xlu0 %3367
  %3369 = vrot.lane.b32.xlu0 %v3328, 96
  %v3370 = vpop.permute.xlu0 %3369
  %3371 = vrot.lane.b32.xlu0 %v3329, 96
  %v3372 = vpop.permute.xlu0 %3371
  %3373 = vrot.lane.b32.xlu0 %v3330, 96
  %v3374 = vpop.permute.xlu0 %3373
  %3375 = vrot.lane.b32.xlu0 %v3331, 96
  %v3376 = vpop.permute.xlu0 %3375
  %3377 = vrot.lane.b32.xlu0 %v3332, 96
  %v3378 = vpop.permute.xlu0 %3377
  %3379 = vrot.lane.b32.xlu0 %v3333, 96
  %v3380 = vpop.permute.xlu0 %3379
  %3381 = vrot.lane.b32.xlu0 %v3334, 96
  %v3382 = vpop.permute.xlu0 %3381
  %3399 = vst.msk [vmem:[%s315] sm:$0xff] %vm316, %v3352
  %3400 = vst.msk [vmem:[%s315 + $0x8] sm:$0xff] %vm316, %v3354
  %3401 = vst.msk [vmem:[%s315 + $0x10] sm:$0xff] %vm316, %v3356
  %3402 = vst.msk [vmem:[%s315 + $0x18] sm:$0xff] %vm316, %v3358
  %3403 = vst.msk [vmem:[%s315 + $0x20] sm:$0xff] %vm316, %v3360
  %3404 = vst.msk [vmem:[%s315 + $0x28] sm:$0xff] %vm316, %v3362
  %3405 = vst.msk [vmem:[%s315 + $0x30] sm:$0xff] %vm316, %v3364
  %3406 = vst.msk [vmem:[%s315 + $0x38] sm:$0xff] %vm316, %v3366
  %3407 = vst.msk [vmem:[%s315 + $0x50] sm:$0xff] %vm316, %v3368
  %3408 = vst.msk [vmem:[%s315 + $0x58] sm:$0xff] %vm316, %v3370
  %3409 = vst.msk [vmem:[%s315 + $0x60] sm:$0xff] %vm316, %v3372
  %3410 = vst.msk [vmem:[%s315 + $0x68] sm:$0xff] %vm316, %v3374
  %3411 = vst.msk [vmem:[%s315 + $0x70] sm:$0xff] %vm316, %v3376
  %3412 = vst.msk [vmem:[%s315 + $0x78] sm:$0xff] %vm316, %v3378
  %3413 = vst.msk [vmem:[%s315 + $0x80] sm:$0xff] %vm316, %v3380
  %3414 = vst.msk [vmem:[%s315 + $0x88] sm:$0xff] %vm316, %v3382
  %3415 = vrot.lane.b32.xlu0 %v3319, 112
  %v3416 = vpop.permute.xlu0 %3415
  %3417 = vrot.lane.b32.xlu0 %v3320, 112
  %v3418 = vpop.permute.xlu0 %3417
  %3419 = vrot.lane.b32.xlu0 %v3321, 112
  %v3420 = vpop.permute.xlu0 %3419
  %3421 = vrot.lane.b32.xlu0 %v3322, 112
  %v3422 = vpop.permute.xlu0 %3421
  %3423 = vrot.lane.b32.xlu0 %v3323, 112
  %v3424 = vpop.permute.xlu0 %3423
  %3425 = vrot.lane.b32.xlu0 %v3324, 112
  %v3426 = vpop.permute.xlu0 %3425
  %3427 = vrot.lane.b32.xlu0 %v3325, 112
  %v3428 = vpop.permute.xlu0 %3427
  %3429 = vrot.lane.b32.xlu0 %v3326, 112
  %v3430 = vpop.permute.xlu0 %3429
  %3431 = vrot.lane.b32.xlu0 %v3327, 112
  %v3432 = vpop.permute.xlu0 %3431
  %3433 = vrot.lane.b32.xlu0 %v3328, 112
  %v3434 = vpop.permute.xlu0 %3433
  %3435 = vrot.lane.b32.xlu0 %v3329, 112
  %v3436 = vpop.permute.xlu0 %3435
  %3437 = vrot.lane.b32.xlu0 %v3330, 112
  %v3438 = vpop.permute.xlu0 %3437
  %3439 = vrot.lane.b32.xlu0 %v3331, 112
  %v3440 = vpop.permute.xlu0 %3439
  %3441 = vrot.lane.b32.xlu0 %v3332, 112
  %v3442 = vpop.permute.xlu0 %3441
  %3443 = vrot.lane.b32.xlu0 %v3333, 112
  %v3444 = vpop.permute.xlu0 %3443
  %3445 = vrot.lane.b32.xlu0 %v3334, 112
  %v3446 = vpop.permute.xlu0 %3445
  %vm3463 = vcmask 261248
  %3464 = vst.msk [vmem:[%s315] sm:$0xff] %vm3463, %v3416
  %3465 = vst.msk [vmem:[%s315 + $0x8] sm:$0xff] %vm3463, %v3418
  %3466 = vst.msk [vmem:[%s315 + $0x10] sm:$0xff] %vm3463, %v3420
  %3467 = vst.msk [vmem:[%s315 + $0x18] sm:$0xff] %vm3463, %v3422
  %3468 = vst.msk [vmem:[%s315 + $0x20] sm:$0xff] %vm3463, %v3424
  %3469 = vst.msk [vmem:[%s315 + $0x28] sm:$0xff] %vm3463, %v3426
  %3470 = vst.msk [vmem:[%s315 + $0x30] sm:$0xff] %vm3463, %v3428
  %3471 = vst.msk [vmem:[%s315 + $0x38] sm:$0xff] %vm3463, %v3430
  %3472 = vst.msk [vmem:[%s315 + $0x50] sm:$0xff] %vm3463, %v3432
  %3473 = vst.msk [vmem:[%s315 + $0x58] sm:$0xff] %vm3463, %v3434
  %3474 = vst.msk [vmem:[%s315 + $0x60] sm:$0xff] %vm3463, %v3436
  %3475 = vst.msk [vmem:[%s315 + $0x68] sm:$0xff] %vm3463, %v3438
  %3476 = vst.msk [vmem:[%s315 + $0x70] sm:$0xff] %vm3463, %v3440
  %3477 = vst.msk [vmem:[%s315 + $0x78] sm:$0xff] %vm3463, %v3442
  %3478 = vst.msk [vmem:[%s315 + $0x80] sm:$0xff] %vm3463, %v3444
  %3479 = vst.msk [vmem:[%s315 + $0x88] sm:$0xff] %vm3463, %v3446
  %v3480 = vld [vmem:[%s17] sm:$0xff]
  %v3481 = vld [vmem:[#allocation2] sm:$0xff]
  %v3482 = vld [vmem:[#allocation2 + $0x8] sm:$0xff]
  %v3483 = vld [vmem:[#allocation2 + $0x10] sm:$0xff]
  %v3484 = vld [vmem:[#allocation2 + $0x18] sm:$0xff]
  %v3485 = vld [vmem:[#allocation2 + $0x20] sm:$0xff]
  %v3486 = vld [vmem:[#allocation2 + $0x28] sm:$0xff]
  %v3487 = vld [vmem:[#allocation2 + $0x30] sm:$0xff]
  %v3488 = vld [vmem:[#allocation2 + $0x38] sm:$0xff]
  %v3489 = vld [vmem:[#allocation2 + $0x50] sm:$0xff]
  %v3490 = vld [vmem:[#allocation2 + $0x58] sm:$0xff]
  %v3491 = vld [vmem:[#allocation2 + $0x60] sm:$0xff]
  %v3492 = vld [vmem:[#allocation2 + $0x68] sm:$0xff]
  %v3493 = vld [vmem:[#allocation2 + $0x70] sm:$0xff]
  %v3494 = vld [vmem:[#allocation2 + $0x78] sm:$0xff]
  %v3495 = vld [vmem:[#allocation2 + $0x80] sm:$0xff]
  %v3496 = vld [vmem:[#allocation2 + $0x88] sm:$0xff]
  %v3497 = vld [vmem:[%s16] sm:$0xff]
  %v3498 = vrot.slane %v3481, 7
  %v3499 = vrot.slane %v3482, 7
  %v3500 = vrot.slane %v3483, 7
  %v3501 = vrot.slane %v3484, 7
  %v3502 = vrot.slane %v3485, 7
  %v3503 = vrot.slane %v3486, 7
  %v3504 = vrot.slane %v3487, 7
  %v3505 = vrot.slane %v3488, 7
  %v3506 = vrot.slane %v3489, 7
  %v3507 = vrot.slane %v3490, 7
  %v3508 = vrot.slane %v3491, 7
  %v3509 = vrot.slane %v3492, 7
  %v3510 = vrot.slane %v3493, 7
  %v3511 = vrot.slane %v3494, 7
  %v3512 = vrot.slane %v3495, 7
  %v3513 = vrot.slane %v3496, 7
  %v3514 = vsel %vm372, %v3498, 0.0
  %v3515 = vsel %vm372, %v3499, 0.0
  %v3516 = vsel %vm372, %v3500, 0.0
  %v3517 = vsel %vm372, %v3501, 0.0
  %v3518 = vsel %vm372, %v3502, 0.0
  %v3519 = vsel %vm372, %v3503, 0.0
  %v3520 = vsel %vm372, %v3504, 0.0
  %v3521 = vsel %vm372, %v3505, 0.0
  %v3522 = vsel %vm372, %v3506, 0.0
  %v3523 = vsel %vm372, %v3507, 0.0
  %v3524 = vsel %vm372, %v3508, 0.0
  %v3525 = vsel %vm372, %v3509, 0.0
  %v3526 = vsel %vm372, %v3510, 0.0
  %v3527 = vsel %vm372, %v3511, 0.0
  %v3528 = vsel %vm372, %v3512, 0.0
  %v3529 = vsel %vm372, %v3513, 0.0
  %v3530 = vmul.f32 %v3514, %v3497
  %v3531 = vmul.f32 %v3515, %v3497
  %v3532 = vmul.f32 %v3516, %v3497
  %v3533 = vmul.f32 %v3517, %v3497
  %v3534 = vmul.f32 %v3518, %v3497
  %v3535 = vmul.f32 %v3519, %v3497
  %v3536 = vmul.f32 %v3520, %v3497
  %v3537 = vmul.f32 %v3521, %v3497
  %v3538 = vmul.f32 %v3522, %v3497
  %v3539 = vmul.f32 %v3523, %v3497
  %v3540 = vmul.f32 %v3524, %v3497
  %v3541 = vmul.f32 %v3525, %v3497
  %v3542 = vmul.f32 %v3526, %v3497
  %v3543 = vmul.f32 %v3527, %v3497
  %v3544 = vmul.f32 %v3528, %v3497
  %v3545 = vmul.f32 %v3529, %v3497
  %v3546 = vadd.f32 %v3480, %v3530
  %v3547 = vadd.f32 %v3480, %v3531
  %v3548 = vadd.f32 %v3480, %v3532
  %v3549 = vadd.f32 %v3480, %v3533
  %v3550 = vadd.f32 %v3480, %v3534
  %v3551 = vadd.f32 %v3480, %v3535
  %v3552 = vadd.f32 %v3480, %v3536
  %v3553 = vadd.f32 %v3480, %v3537
  %v3554 = vadd.f32 %v3480, %v3538
  %v3555 = vadd.f32 %v3480, %v3539
  %v3556 = vadd.f32 %v3480, %v3540
  %v3557 = vadd.f32 %v3480, %v3541
  %v3558 = vadd.f32 %v3480, %v3542
  %v3559 = vadd.f32 %v3480, %v3543
  %v3560 = vadd.f32 %v3480, %v3544
  %v3561 = vadd.f32 %v3480, %v3545
  %s3562 = scalar_lea.vmem %s16, 8
  %v3563 = vld [vmem:[%s3562] sm:$0xff]
  %v3564 = vmul.f32 %v3481, %v3563
  %v3565 = vmul.f32 %v3482, %v3563
  %v3566 = vmul.f32 %v3483, %v3563
  %v3567 = vmul.f32 %v3484, %v3563
  %v3568 = vmul.f32 %v3485, %v3563
  %v3569 = vmul.f32 %v3486, %v3563
  %v3570 = vmul.f32 %v3487, %v3563
  %v3571 = vmul.f32 %v3488, %v3563
  %v3572 = vmul.f32 %v3489, %v3563
  %v3573 = vmul.f32 %v3490, %v3563
  %v3574 = vmul.f32 %v3491, %v3563
  %v3575 = vmul.f32 %v3492, %v3563
  %v3576 = vmul.f32 %v3493, %v3563
  %v3577 = vmul.f32 %v3494, %v3563
  %v3578 = vmul.f32 %v3495, %v3563
  %v3579 = vmul.f32 %v3496, %v3563
  %v3580 = vadd.f32 %v3546, %v3564
  %v3581 = vadd.f32 %v3547, %v3565
  %v3582 = vadd.f32 %v3548, %v3566
  %v3583 = vadd.f32 %v3549, %v3567
  %v3584 = vadd.f32 %v3550, %v3568
  %v3585 = vadd.f32 %v3551, %v3569
  %v3586 = vadd.f32 %v3552, %v3570
  %v3587 = vadd.f32 %v3553, %v3571
  %v3588 = vadd.f32 %v3554, %v3572
  %v3589 = vadd.f32 %v3555, %v3573
  %v3590 = vadd.f32 %v3556, %v3574
  %v3591 = vadd.f32 %v3557, %v3575
  %v3592 = vadd.f32 %v3558, %v3576
  %v3593 = vadd.f32 %v3559, %v3577
  %v3594 = vadd.f32 %v3560, %v3578
  %v3595 = vadd.f32 %v3561, %v3579
  %s3596 = scalar_lea.vmem %s16, 16
  %v3597 = vld [vmem:[%s3596] sm:$0xff]
  %v3598 = vrot.slane %v3481, 1
  %v3599 = vrot.slane %v3482, 1
  %v3600 = vrot.slane %v3483, 1
  %v3601 = vrot.slane %v3484, 1
  %v3602 = vrot.slane %v3485, 1
  %v3603 = vrot.slane %v3486, 1
  %v3604 = vrot.slane %v3487, 1
  %v3605 = vrot.slane %v3488, 1
  %v3606 = vrot.slane %v3489, 1
  %v3607 = vrot.slane %v3490, 1
  %v3608 = vrot.slane %v3491, 1
  %v3609 = vrot.slane %v3492, 1
  %v3610 = vrot.slane %v3493, 1
  %v3611 = vrot.slane %v3494, 1
  %v3612 = vrot.slane %v3495, 1
  %v3613 = vrot.slane %v3496, 1
  %v3614 = vsel %vm474, %v3598, 0.0
  %v3615 = vsel %vm474, %v3599, 0.0
  %v3616 = vsel %vm474, %v3600, 0.0
  %v3617 = vsel %vm474, %v3601, 0.0
  %v3618 = vsel %vm474, %v3602, 0.0
  %v3619 = vsel %vm474, %v3603, 0.0
  %v3620 = vsel %vm474, %v3604, 0.0
  %v3621 = vsel %vm474, %v3605, 0.0
  %v3622 = vsel %vm474, %v3606, 0.0
  %v3623 = vsel %vm474, %v3607, 0.0
  %v3624 = vsel %vm474, %v3608, 0.0
  %v3625 = vsel %vm474, %v3609, 0.0
  %v3626 = vsel %vm474, %v3610, 0.0
  %v3627 = vsel %vm474, %v3611, 0.0
  %v3628 = vsel %vm474, %v3612, 0.0
  %v3629 = vsel %vm474, %v3613, 0.0
  %v3630 = vmul.f32 %v3614, %v3597
  %v3631 = vmul.f32 %v3615, %v3597
  %v3632 = vmul.f32 %v3616, %v3597
  %v3633 = vmul.f32 %v3617, %v3597
  %v3634 = vmul.f32 %v3618, %v3597
  %v3635 = vmul.f32 %v3619, %v3597
  %v3636 = vmul.f32 %v3620, %v3597
  %v3637 = vmul.f32 %v3621, %v3597
  %v3638 = vmul.f32 %v3622, %v3597
  %v3639 = vmul.f32 %v3623, %v3597
  %v3640 = vmul.f32 %v3624, %v3597
  %v3641 = vmul.f32 %v3625, %v3597
  %v3642 = vmul.f32 %v3626, %v3597
  %v3643 = vmul.f32 %v3627, %v3597
  %v3644 = vmul.f32 %v3628, %v3597
  %v3645 = vmul.f32 %v3629, %v3597
  %v3646 = vadd.f32 %v3580, %v3630
  %v3647 = vadd.f32 %v3581, %v3631
  %v3648 = vadd.f32 %v3582, %v3632
  %v3649 = vadd.f32 %v3583, %v3633
  %v3650 = vadd.f32 %v3584, %v3634
  %v3651 = vadd.f32 %v3585, %v3635
  %v3652 = vadd.f32 %v3586, %v3636
  %v3653 = vadd.f32 %v3587, %v3637
  %v3654 = vadd.f32 %v3588, %v3638
  %v3655 = vadd.f32 %v3589, %v3639
  %v3656 = vadd.f32 %v3590, %v3640
  %v3657 = vadd.f32 %v3591, %v3641
  %v3658 = vadd.f32 %v3592, %v3642
  %v3659 = vadd.f32 %v3593, %v3643
  %v3660 = vadd.f32 %v3594, %v3644
  %v3661 = vadd.f32 %v3595, %v3645
  %v3662 = vld [vmem:[%s315] sm:$0xff]
  %v3663 = vld [vmem:[%s315 + $0x8] sm:$0xff]
  %v3664 = vld [vmem:[%s315 + $0x10] sm:$0xff]
  %v3665 = vld [vmem:[%s315 + $0x18] sm:$0xff]
  %v3666 = vld [vmem:[%s315 + $0x20] sm:$0xff]
  %v3667 = vld [vmem:[%s315 + $0x28] sm:$0xff]
  %v3668 = vld [vmem:[%s315 + $0x30] sm:$0xff]
  %v3669 = vld [vmem:[%s315 + $0x38] sm:$0xff]
  %v3670 = vld [vmem:[%s315 + $0x50] sm:$0xff]
  %v3671 = vld [vmem:[%s315 + $0x58] sm:$0xff]
  %v3672 = vld [vmem:[%s315 + $0x60] sm:$0xff]
  %v3673 = vld [vmem:[%s315 + $0x68] sm:$0xff]
  %v3674 = vld [vmem:[%s315 + $0x70] sm:$0xff]
  %v3675 = vld [vmem:[%s315 + $0x78] sm:$0xff]
  %v3676 = vld [vmem:[%s315 + $0x80] sm:$0xff]
  %v3677 = vld [vmem:[%s315 + $0x88] sm:$0xff]
  %s3678 = scalar_lea.vmem %s16, 24
  %v3679 = vld [vmem:[%s3678] sm:$0xff]
  %v3680 = vrot.slane %v3662, 7
  %v3681 = vrot.slane %v3663, 7
  %v3682 = vrot.slane %v3664, 7
  %v3683 = vrot.slane %v3665, 7
  %v3684 = vrot.slane %v3666, 7
  %v3685 = vrot.slane %v3667, 7
  %v3686 = vrot.slane %v3668, 7
  %v3687 = vrot.slane %v3669, 7
  %v3688 = vrot.slane %v3670, 7
  %v3689 = vrot.slane %v3671, 7
  %v3690 = vrot.slane %v3672, 7
  %v3691 = vrot.slane %v3673, 7
  %v3692 = vrot.slane %v3674, 7
  %v3693 = vrot.slane %v3675, 7
  %v3694 = vrot.slane %v3676, 7
  %v3695 = vrot.slane %v3677, 7
  %v3696 = vsel %vm372, %v3680, 0.0
  %v3697 = vsel %vm372, %v3681, 0.0
  %v3698 = vsel %vm372, %v3682, 0.0
  %v3699 = vsel %vm372, %v3683, 0.0
  %v3700 = vsel %vm372, %v3684, 0.0
  %v3701 = vsel %vm372, %v3685, 0.0
  %v3702 = vsel %vm372, %v3686, 0.0
  %v3703 = vsel %vm372, %v3687, 0.0
  %v3704 = vsel %vm372, %v3688, 0.0
  %v3705 = vsel %vm372, %v3689, 0.0
  %v3706 = vsel %vm372, %v3690, 0.0
  %v3707 = vsel %vm372, %v3691, 0.0
  %v3708 = vsel %vm372, %v3692, 0.0
  %v3709 = vsel %vm372, %v3693, 0.0
  %v3710 = vsel %vm372, %v3694, 0.0
  %v3711 = vsel %vm372, %v3695, 0.0
  %v3712 = vmul.f32 %v3696, %v3679
  %v3713 = vmul.f32 %v3697, %v3679
  %v3714 = vmul.f32 %v3698, %v3679
  %v3715 = vmul.f32 %v3699, %v3679
  %v3716 = vmul.f32 %v3700, %v3679
  %v3717 = vmul.f32 %v3701, %v3679
  %v3718 = vmul.f32 %v3702, %v3679
  %v3719 = vmul.f32 %v3703, %v3679
  %v3720 = vmul.f32 %v3704, %v3679
  %v3721 = vmul.f32 %v3705, %v3679
  %v3722 = vmul.f32 %v3706, %v3679
  %v3723 = vmul.f32 %v3707, %v3679
  %v3724 = vmul.f32 %v3708, %v3679
  %v3725 = vmul.f32 %v3709, %v3679
  %v3726 = vmul.f32 %v3710, %v3679
  %v3727 = vmul.f32 %v3711, %v3679
  %v3728 = vadd.f32 %v3646, %v3712
  %v3729 = vadd.f32 %v3647, %v3713
  %v3730 = vadd.f32 %v3648, %v3714
  %v3731 = vadd.f32 %v3649, %v3715
  %v3732 = vadd.f32 %v3650, %v3716
  %v3733 = vadd.f32 %v3651, %v3717
  %v3734 = vadd.f32 %v3652, %v3718
  %v3735 = vadd.f32 %v3653, %v3719
  %v3736 = vadd.f32 %v3654, %v3720
  %v3737 = vadd.f32 %v3655, %v3721
  %v3738 = vadd.f32 %v3656, %v3722
  %v3739 = vadd.f32 %v3657, %v3723
  %v3740 = vadd.f32 %v3658, %v3724
  %v3741 = vadd.f32 %v3659, %v3725
  %v3742 = vadd.f32 %v3660, %v3726
  %v3743 = vadd.f32 %v3661, %v3727
  %s3744 = scalar_lea.vmem %s16, 32
  %v3745 = vld [vmem:[%s3744] sm:$0xff]
  %v3746 = vmul.f32 %v3662, %v3745
  %v3747 = vmul.f32 %v3663, %v3745
  %v3748 = vmul.f32 %v3664, %v3745
  %v3749 = vmul.f32 %v3665, %v3745
  %v3750 = vmul.f32 %v3666, %v3745
  %v3751 = vmul.f32 %v3667, %v3745
  %v3752 = vmul.f32 %v3668, %v3745
  %v3753 = vmul.f32 %v3669, %v3745
  %v3754 = vmul.f32 %v3670, %v3745
  %v3755 = vmul.f32 %v3671, %v3745
  %v3756 = vmul.f32 %v3672, %v3745
  %v3757 = vmul.f32 %v3673, %v3745
  %v3758 = vmul.f32 %v3674, %v3745
  %v3759 = vmul.f32 %v3675, %v3745
  %v3760 = vmul.f32 %v3676, %v3745
  %v3761 = vmul.f32 %v3677, %v3745
  %v3762 = vadd.f32 %v3728, %v3746
  %v3763 = vadd.f32 %v3729, %v3747
  %v3764 = vadd.f32 %v3730, %v3748
  %v3765 = vadd.f32 %v3731, %v3749
  %v3766 = vadd.f32 %v3732, %v3750
  %v3767 = vadd.f32 %v3733, %v3751
  %v3768 = vadd.f32 %v3734, %v3752
  %v3769 = vadd.f32 %v3735, %v3753
  %v3770 = vadd.f32 %v3736, %v3754
  %v3771 = vadd.f32 %v3737, %v3755
  %v3772 = vadd.f32 %v3738, %v3756
  %v3773 = vadd.f32 %v3739, %v3757
  %v3774 = vadd.f32 %v3740, %v3758
  %v3775 = vadd.f32 %v3741, %v3759
  %v3776 = vadd.f32 %v3742, %v3760
  %v3777 = vadd.f32 %v3743, %v3761
  %s3778 = scalar_lea.vmem %s16, 40
  %v3779 = vld [vmem:[%s3778] sm:$0xff]
  %v3780 = vrot.slane %v3662, 1
  %v3781 = vrot.slane %v3663, 1
  %v3782 = vrot.slane %v3664, 1
  %v3783 = vrot.slane %v3665, 1
  %v3784 = vrot.slane %v3666, 1
  %v3785 = vrot.slane %v3667, 1
  %v3786 = vrot.slane %v3668, 1
  %v3787 = vrot.slane %v3669, 1
  %v3788 = vrot.slane %v3670, 1
  %v3789 = vrot.slane %v3671, 1
  %v3790 = vrot.slane %v3672, 1
  %v3791 = vrot.slane %v3673, 1
  %v3792 = vrot.slane %v3674, 1
  %v3793 = vrot.slane %v3675, 1
  %v3794 = vrot.slane %v3676, 1
  %v3795 = vrot.slane %v3677, 1
  %v3796 = vsel %vm474, %v3780, 0.0
  %v3797 = vsel %vm474, %v3781, 0.0
  %v3798 = vsel %vm474, %v3782, 0.0
  %v3799 = vsel %vm474, %v3783, 0.0
  %v3800 = vsel %vm474, %v3784, 0.0
  %v3801 = vsel %vm474, %v3785, 0.0
  %v3802 = vsel %vm474, %v3786, 0.0
  %v3803 = vsel %vm474, %v3787, 0.0
  %v3804 = vsel %vm474, %v3788, 0.0
  %v3805 = vsel %vm474, %v3789, 0.0
  %v3806 = vsel %vm474, %v3790, 0.0
  %v3807 = vsel %vm474, %v3791, 0.0
  %v3808 = vsel %vm474, %v3792, 0.0
  %v3809 = vsel %vm474, %v3793, 0.0
  %v3810 = vsel %vm474, %v3794, 0.0
  %v3811 = vsel %vm474, %v3795, 0.0
  %v3812 = vmul.f32 %v3796, %v3779
  %v3813 = vmul.f32 %v3797, %v3779
  %v3814 = vmul.f32 %v3798, %v3779
  %v3815 = vmul.f32 %v3799, %v3779
  %v3816 = vmul.f32 %v3800, %v3779
  %v3817 = vmul.f32 %v3801, %v3779
  %v3818 = vmul.f32 %v3802, %v3779
  %v3819 = vmul.f32 %v3803, %v3779
  %v3820 = vmul.f32 %v3804, %v3779
  %v3821 = vmul.f32 %v3805, %v3779
  %v3822 = vmul.f32 %v3806, %v3779
  %v3823 = vmul.f32 %v3807, %v3779
  %v3824 = vmul.f32 %v3808, %v3779
  %v3825 = vmul.f32 %v3809, %v3779
  %v3826 = vmul.f32 %v3810, %v3779
  %v3827 = vmul.f32 %v3811, %v3779
  %v3828 = vadd.f32 %v3762, %v3812
  %v3829 = vadd.f32 %v3763, %v3813
  %v3830 = vadd.f32 %v3764, %v3814
  %v3831 = vadd.f32 %v3765, %v3815
  %v3832 = vadd.f32 %v3766, %v3816
  %v3833 = vadd.f32 %v3767, %v3817
  %v3834 = vadd.f32 %v3768, %v3818
  %v3835 = vadd.f32 %v3769, %v3819
  %v3836 = vadd.f32 %v3770, %v3820
  %v3837 = vadd.f32 %v3771, %v3821
  %v3838 = vadd.f32 %v3772, %v3822
  %v3839 = vadd.f32 %v3773, %v3823
  %v3840 = vadd.f32 %v3774, %v3824
  %v3841 = vadd.f32 %v3775, %v3825
  %v3842 = vadd.f32 %v3776, %v3826
  %v3843 = vadd.f32 %v3777, %v3827
  %v3844 = vld [vmem:[%s705] sm:$0xff]
  %v3845 = vld [vmem:[%s705 + $0x8] sm:$0xff]
  %v3846 = vld [vmem:[%s705 + $0x10] sm:$0xff]
  %v3847 = vld [vmem:[%s705 + $0x18] sm:$0xff]
  %v3848 = vld [vmem:[%s705 + $0x20] sm:$0xff]
  %v3849 = vld [vmem:[%s705 + $0x28] sm:$0xff]
  %v3850 = vld [vmem:[%s705 + $0x30] sm:$0xff]
  %v3851 = vld [vmem:[%s705 + $0x38] sm:$0xff]
  %v3852 = vld [vmem:[%s705 + $0x50] sm:$0xff]
  %v3853 = vld [vmem:[%s705 + $0x58] sm:$0xff]
  %v3854 = vld [vmem:[%s705 + $0x60] sm:$0xff]
  %v3855 = vld [vmem:[%s705 + $0x68] sm:$0xff]
  %v3856 = vld [vmem:[%s705 + $0x70] sm:$0xff]
  %v3857 = vld [vmem:[%s705 + $0x78] sm:$0xff]
  %v3858 = vld [vmem:[%s705 + $0x80] sm:$0xff]
  %v3859 = vld [vmem:[%s705 + $0x88] sm:$0xff]
  %s3860 = scalar_lea.vmem %s16, 48
  %v3861 = vld [vmem:[%s3860] sm:$0xff]
  %v3862 = vrot.slane %v3844, 7
  %v3863 = vrot.slane %v3845, 7
  %v3864 = vrot.slane %v3846, 7
  %v3865 = vrot.slane %v3847, 7
  %v3866 = vrot.slane %v3848, 7
  %v3867 = vrot.slane %v3849, 7
  %v3868 = vrot.slane %v3850, 7
  %v3869 = vrot.slane %v3851, 7
  %v3870 = vrot.slane %v3852, 7
  %v3871 = vrot.slane %v3853, 7
  %v3872 = vrot.slane %v3854, 7
  %v3873 = vrot.slane %v3855, 7
  %v3874 = vrot.slane %v3856, 7
  %v3875 = vrot.slane %v3857, 7
  %v3876 = vrot.slane %v3858, 7
  %v3877 = vrot.slane %v3859, 7
  %v3878 = vsel %vm372, %v3862, 0.0
  %v3879 = vsel %vm372, %v3863, 0.0
  %v3880 = vsel %vm372, %v3864, 0.0
  %v3881 = vsel %vm372, %v3865, 0.0
  %v3882 = vsel %vm372, %v3866, 0.0
  %v3883 = vsel %vm372, %v3867, 0.0
  %v3884 = vsel %vm372, %v3868, 0.0
  %v3885 = vsel %vm372, %v3869, 0.0
  %v3886 = vsel %vm372, %v3870, 0.0
  %v3887 = vsel %vm372, %v3871, 0.0
  %v3888 = vsel %vm372, %v3872, 0.0
  %v3889 = vsel %vm372, %v3873, 0.0
  %v3890 = vsel %vm372, %v3874, 0.0
  %v3891 = vsel %vm372, %v3875, 0.0
  %v3892 = vsel %vm372, %v3876, 0.0
  %v3893 = vsel %vm372, %v3877, 0.0
  %v3894 = vmul.f32 %v3878, %v3861
  %v3895 = vmul.f32 %v3879, %v3861
  %v3896 = vmul.f32 %v3880, %v3861
  %v3897 = vmul.f32 %v3881, %v3861
  %v3898 = vmul.f32 %v3882, %v3861
  %v3899 = vmul.f32 %v3883, %v3861
  %v3900 = vmul.f32 %v3884, %v3861
  %v3901 = vmul.f32 %v3885, %v3861
  %v3902 = vmul.f32 %v3886, %v3861
  %v3903 = vmul.f32 %v3887, %v3861
  %v3904 = vmul.f32 %v3888, %v3861
  %v3905 = vmul.f32 %v3889, %v3861
  %v3906 = vmul.f32 %v3890, %v3861
  %v3907 = vmul.f32 %v3891, %v3861
  %v3908 = vmul.f32 %v3892, %v3861
  %v3909 = vmul.f32 %v3893, %v3861
  %v3910 = vadd.f32 %v3828, %v3894
  %v3911 = vadd.f32 %v3829, %v3895
  %v3912 = vadd.f32 %v3830, %v3896
  %v3913 = vadd.f32 %v3831, %v3897
  %v3914 = vadd.f32 %v3832, %v3898
  %v3915 = vadd.f32 %v3833, %v3899
  %v3916 = vadd.f32 %v3834, %v3900
  %v3917 = vadd.f32 %v3835, %v3901
  %v3918 = vadd.f32 %v3836, %v3902
  %v3919 = vadd.f32 %v3837, %v3903
  %v3920 = vadd.f32 %v3838, %v3904
  %v3921 = vadd.f32 %v3839, %v3905
  %v3922 = vadd.f32 %v3840, %v3906
  %v3923 = vadd.f32 %v3841, %v3907
  %v3924 = vadd.f32 %v3842, %v3908
  %v3925 = vadd.f32 %v3843, %v3909
  %s3926 = scalar_lea.vmem %s16, 56
  %v3927 = vld [vmem:[%s3926] sm:$0xff]
  %v3928 = vmul.f32 %v3844, %v3927
  %v3929 = vmul.f32 %v3845, %v3927
  %v3930 = vmul.f32 %v3846, %v3927
  %v3931 = vmul.f32 %v3847, %v3927
  %v3932 = vmul.f32 %v3848, %v3927
  %v3933 = vmul.f32 %v3849, %v3927
  %v3934 = vmul.f32 %v3850, %v3927
  %v3935 = vmul.f32 %v3851, %v3927
  %v3936 = vmul.f32 %v3852, %v3927
  %v3937 = vmul.f32 %v3853, %v3927
  %v3938 = vmul.f32 %v3854, %v3927
  %v3939 = vmul.f32 %v3855, %v3927
  %v3940 = vmul.f32 %v3856, %v3927
  %v3941 = vmul.f32 %v3857, %v3927
  %v3942 = vmul.f32 %v3858, %v3927
  %v3943 = vmul.f32 %v3859, %v3927
  %v3944 = vadd.f32 %v3910, %v3928
  %v3945 = vadd.f32 %v3911, %v3929
  %v3946 = vadd.f32 %v3912, %v3930
  %v3947 = vadd.f32 %v3913, %v3931
  %v3948 = vadd.f32 %v3914, %v3932
  %v3949 = vadd.f32 %v3915, %v3933
  %v3950 = vadd.f32 %v3916, %v3934
  %v3951 = vadd.f32 %v3917, %v3935
  %v3952 = vadd.f32 %v3918, %v3936
  %v3953 = vadd.f32 %v3919, %v3937
  %v3954 = vadd.f32 %v3920, %v3938
  %v3955 = vadd.f32 %v3921, %v3939
  %v3956 = vadd.f32 %v3922, %v3940
  %v3957 = vadd.f32 %v3923, %v3941
  %v3958 = vadd.f32 %v3924, %v3942
  %v3959 = vadd.f32 %v3925, %v3943
  %s3960 = scalar_lea.vmem %s16, 64
  %v3961 = vld [vmem:[%s3960] sm:$0xff]
  %v3962 = vrot.slane %v3844, 1
  %v3963 = vrot.slane %v3845, 1
  %v3964 = vrot.slane %v3846, 1
  %v3965 = vrot.slane %v3847, 1
  %v3966 = vrot.slane %v3848, 1
  %v3967 = vrot.slane %v3849, 1
  %v3968 = vrot.slane %v3850, 1
  %v3969 = vrot.slane %v3851, 1
  %v3970 = vrot.slane %v3852, 1
  %v3971 = vrot.slane %v3853, 1
  %v3972 = vrot.slane %v3854, 1
  %v3973 = vrot.slane %v3855, 1
  %v3974 = vrot.slane %v3856, 1
  %v3975 = vrot.slane %v3857, 1
  %v3976 = vrot.slane %v3858, 1
  %v3977 = vrot.slane %v3859, 1
  %v3978 = vsel %vm474, %v3962, 0.0
  %v3979 = vsel %vm474, %v3963, 0.0
  %v3980 = vsel %vm474, %v3964, 0.0
  %v3981 = vsel %vm474, %v3965, 0.0
  %v3982 = vsel %vm474, %v3966, 0.0
  %v3983 = vsel %vm474, %v3967, 0.0
  %v3984 = vsel %vm474, %v3968, 0.0
  %v3985 = vsel %vm474, %v3969, 0.0
  %v3986 = vsel %vm474, %v3970, 0.0
  %v3987 = vsel %vm474, %v3971, 0.0
  %v3988 = vsel %vm474, %v3972, 0.0
  %v3989 = vsel %vm474, %v3973, 0.0
  %v3990 = vsel %vm474, %v3974, 0.0
  %v3991 = vsel %vm474, %v3975, 0.0
  %v3992 = vsel %vm474, %v3976, 0.0
  %v3993 = vsel %vm474, %v3977, 0.0
  %v3994 = vmul.f32 %v3978, %v3961
  %v3995 = vmul.f32 %v3979, %v3961
  %v3996 = vmul.f32 %v3980, %v3961
  %v3997 = vmul.f32 %v3981, %v3961
  %v3998 = vmul.f32 %v3982, %v3961
  %v3999 = vmul.f32 %v3983, %v3961
  %v4000 = vmul.f32 %v3984, %v3961
  %v4001 = vmul.f32 %v3985, %v3961
  %v4002 = vmul.f32 %v3986, %v3961
  %v4003 = vmul.f32 %v3987, %v3961
  %v4004 = vmul.f32 %v3988, %v3961
  %v4005 = vmul.f32 %v3989, %v3961
  %v4006 = vmul.f32 %v3990, %v3961
  %v4007 = vmul.f32 %v3991, %v3961
  %v4008 = vmul.f32 %v3992, %v3961
  %v4009 = vmul.f32 %v3993, %v3961
  %v4010 = vadd.f32 %v3944, %v3994
  %v4011 = vadd.f32 %v3945, %v3995
  %v4012 = vadd.f32 %v3946, %v3996
  %v4013 = vadd.f32 %v3947, %v3997
  %v4014 = vadd.f32 %v3948, %v3998
  %v4015 = vadd.f32 %v3949, %v3999
  %v4016 = vadd.f32 %v3950, %v4000
  %v4017 = vadd.f32 %v3951, %v4001
  %v4018 = vadd.f32 %v3952, %v4002
  %v4019 = vadd.f32 %v3953, %v4003
  %v4020 = vadd.f32 %v3954, %v4004
  %v4021 = vadd.f32 %v3955, %v4005
  %v4022 = vadd.f32 %v3956, %v4006
  %v4023 = vadd.f32 %v3957, %v4007
  %v4024 = vadd.f32 %v3958, %v4008
  %v4025 = vadd.f32 %v3959, %v4009
  %v4026 = vmax.f32 %v4010, 0.0
  %v4027 = vmax.f32 %v4011, 0.0
  %v4028 = vmax.f32 %v4012, 0.0
  %v4029 = vmax.f32 %v4013, 0.0
  %v4030 = vmax.f32 %v4014, 0.0
  %v4031 = vmax.f32 %v4015, 0.0
  %v4032 = vmax.f32 %v4016, 0.0
  %v4033 = vmax.f32 %v4017, 0.0
  %v4034 = vmax.f32 %v4018, 0.0
  %v4035 = vmax.f32 %v4019, 0.0
  %v4036 = vmax.f32 %v4020, 0.0
  %v4037 = vmax.f32 %v4021, 0.0
  %v4038 = vmax.f32 %v4022, 0.0
  %v4039 = vmax.f32 %v4023, 0.0
  %v4040 = vmax.f32 %v4024, 0.0
  %v4041 = vmax.f32 %v4025, 0.0
  %v4042 = vld [vmem:[%s18] sm:$0xff]
  %v4043 = vld [vmem:[%s18 + $0x8] sm:$0xff]
  %v4044 = vld [vmem:[%s18 + $0x10] sm:$0xff]
  %v4045 = vld [vmem:[%s18 + $0x18] sm:$0xff]
  %v4046 = vld [vmem:[%s19] sm:$0x1]
  %v4048 = vlaneseq
  %v4049 = vshrl.u32 %v4048, 7
  %v4050 = vsub.s32 0, %v4049
  %v4051 = vrot.slane %v4046, %v4050
  %v4054 = vsel %vm68, %v4026, 0
  %v4057 = vsel %vm68, %v4027, 0
  %v4060 = vsel %vm68, %v4028, 0
  %v4063 = vsel %vm68, %v4029, 0
  %v4066 = vsel %vm68, %v4030, 0
  %v4069 = vsel %vm68, %v4031, 0
  %v4072 = vsel %vm68, %v4032, 0
  %v4075 = vsel %vm68, %v4033, 0
  %v4078 = vsel %vm68, %v4034, 0
  %v4081 = vsel %vm68, %v4035, 0
  %v4084 = vsel %vm68, %v4036, 0
  %v4087 = vsel %vm68, %v4037, 0
  %v4090 = vsel %vm68, %v4038, 0
  %v4093 = vsel %vm68, %v4039, 0
  %v4096 = vsel %vm68, %v4040, 0
  %v4099 = vsel %vm68, %v4041, 0
  %4101 = vmatprep.subr.mxu0 0.0
  %4102 = vmatpush1.msra.mxu0 0.0
  %4103 = vmatprep.subr.mxu0 0.0
  %4104 = vmatpush1.msra.mxu0 0.0
  %4105 = vmatprep.subr.mxu0 0.0
  %4106 = vmatpush1.msra.mxu0 0.0
  %4107 = vmatprep.subr.mxu0 0.0
  %4108 = vmatpush1.msra.mxu0 0.0
  %4109 = vmatprep.subr.mxu0 0.0
  %4110 = vmatpush1.msra.mxu0 0.0
  %4111 = vmatprep.subr.mxu0 0.0
  %4112 = vmatpush1.msra.mxu0 0.0
  %4113 = vmatprep.subr.mxu0 0.0
  %4114 = vmatpush1.msra.mxu0 0.0
  %4115 = vmatprep.subr.mxu0 0.0
  %4116 = vmatpush1.msra.mxu0 0.0
  %4117 = vmatprep.subr.mxu0 0.0
  %4118 = vmatpush1.msra.mxu0 0.0
  %4119 = vmatprep.subr.mxu0 0.0
  %4120 = vmatpush1.msra.mxu0 0.0
  %4121 = vmatprep.subr.mxu0 0.0
  %4122 = vmatpush1.msra.mxu0 0.0
  %4123 = vmatprep.subr.mxu0 0.0
  %4124 = vmatpush1.msra.mxu0 0.0
  %4125 = vmatprep.subr.mxu0 0.0
  %4126 = vmatpush1.msra.mxu0 %v4045
  %4127 = vmatprep.subr.mxu0 0.0
  %4128 = vmatpush1.msra.mxu0 %v4044
  %4129 = vmatprep.subr.mxu0 0.0
  %4130 = vmatpush1.msra.mxu0 %v4043
  %4131 = vmatprep.subr.mxu0 0.0
  %4132 = vmatpush1.msra.mxu0 %v4042
  %4133 = vmatprep.subr.mxu0 0.0
  %4134 = vmatpush2.msra.mxu0 0.0
  %4135 = vmatprep.subr.mxu0 0.0
  %4136 = vmatpush2.msra.mxu0 0.0
  %4137 = vmatprep.subr.mxu0 0.0
  %4138 = vmatpush2.msra.mxu0 0.0
  %4139 = vmatprep.subr.mxu0 0.0
  %4140 = vmatpush2.msra.mxu0 0.0
  %4141 = vmatprep.subr.mxu0 0.0
  %4142 = vmatpush2.msra.mxu0 0.0
  %4143 = vmatprep.subr.mxu0 0.0
  %4144 = vmatpush2.msra.mxu0 0.0
  %4145 = vmatprep.subr.mxu0 0.0
  %4146 = vmatpush2.msra.mxu0 0.0
  %4147 = vmatprep.subr.mxu0 0.0
  %4148 = vmatpush2.msra.mxu0 0.0
  %4149 = vmatprep.subr.mxu0 0.0
  %4150 = vmatpush2.msra.mxu0 0.0
  %4151 = vmatprep.subr.mxu0 0.0
  %4152 = vmatpush2.msra.mxu0 0.0
  %4153 = vmatprep.subr.mxu0 0.0
  %4154 = vmatpush2.msra.mxu0 0.0
  %4155 = vmatprep.subr.mxu0 0.0
  %4156 = vmatpush2.msra.mxu0 0.0
  %4157 = vmatprep.subr.mxu0 0.0
  %4158 = vmatpush2.msra.mxu0 0.0
  %4159 = vmatprep.subr.mxu0 0.0
  %4160 = vmatpush2.msra.mxu0 0.0
  %4161 = vmatprep.subr.mxu0 0.0
  %4162 = vmatpush2.msra.mxu0 0.0
  %4163 = vmatprep.subr.mxu0 0.0
  %4164 = vmatpush2.msra.mxu0 0.0
  %4165 = vmatprep.mubr.f32.mxu0 0.0
  %4166 = vmatmul.mubr.f32.gmra.mxu0 %v4054
  %v4167 = vpop.f32.mrf.mxu0
  %v4168 = vadd.f32 %v4051, %v4167
  %v4169 = vpop.f32.mrf.mxu0
  %4170 = vmatprep.mubr.f32.mxu0 0.0
  %4171 = vmatmul.mubr.f32.gmra.mxu0 %v4057
  %v4172 = vpop.f32.mrf.mxu0
  %v4173 = vadd.f32 %v4051, %v4172
  %v4174 = vpop.f32.mrf.mxu0
  %4175 = vmatprep.mubr.f32.mxu0 0.0
  %4176 = vmatmul.mubr.f32.gmra.mxu0 %v4060
  %v4177 = vpop.f32.mrf.mxu0
  %v4178 = vadd.f32 %v4051, %v4177
  %v4179 = vpop.f32.mrf.mxu0
  %4180 = vmatprep.mubr.f32.mxu0 0.0
  %4181 = vmatmul.mubr.f32.gmra.mxu0 %v4063
  %v4182 = vpop.f32.mrf.mxu0
  %v4183 = vadd.f32 %v4051, %v4182
  %v4184 = vpop.f32.mrf.mxu0
  %4185 = vmatprep.mubr.f32.mxu0 0.0
  %4186 = vmatmul.mubr.f32.gmra.mxu0 %v4066
  %v4187 = vpop.f32.mrf.mxu0
  %v4188 = vadd.f32 %v4051, %v4187
  %v4189 = vpop.f32.mrf.mxu0
  %4190 = vmatprep.mubr.f32.mxu0 0.0
  %4191 = vmatmul.mubr.f32.gmra.mxu0 %v4069
  %v4192 = vpop.f32.mrf.mxu0
  %v4193 = vadd.f32 %v4051, %v4192
  %v4194 = vpop.f32.mrf.mxu0
  %4195 = vmatprep.mubr.f32.mxu0 0.0
  %4196 = vmatmul.mubr.f32.gmra.mxu0 %v4072
  %v4197 = vpop.f32.mrf.mxu0
  %v4198 = vadd.f32 %v4051, %v4197
  %v4199 = vpop.f32.mrf.mxu0
  %4200 = vmatprep.mubr.f32.mxu0 0.0
  %4201 = vmatmul.mubr.f32.gmra.mxu0 %v4075
  %v4202 = vpop.f32.mrf.mxu0
  %v4203 = vadd.f32 %v4051, %v4202
  %v4204 = vpop.f32.mrf.mxu0
  %4205 = vmatprep.mubr.f32.mxu0 0.0
  %4206 = vmatmul.mubr.f32.gmra.mxu0 %v4078
  %v4207 = vpop.f32.mrf.mxu0
  %v4208 = vadd.f32 %v4051, %v4207
  %v4209 = vpop.f32.mrf.mxu0
  %4210 = vmatprep.mubr.f32.mxu0 0.0
  %4211 = vmatmul.mubr.f32.gmra.mxu0 %v4081
  %v4212 = vpop.f32.mrf.mxu0
  %v4213 = vadd.f32 %v4051, %v4212
  %v4214 = vpop.f32.mrf.mxu0
  %4215 = vmatprep.mubr.f32.mxu0 0.0
  %4216 = vmatmul.mubr.f32.gmra.mxu0 %v4084
  %v4217 = vpop.f32.mrf.mxu0
  %v4218 = vadd.f32 %v4051, %v4217
  %v4219 = vpop.f32.mrf.mxu0
  %4220 = vmatprep.mubr.f32.mxu0 0.0
  %4221 = vmatmul.mubr.f32.gmra.mxu0 %v4087
  %v4222 = vpop.f32.mrf.mxu0
  %v4223 = vadd.f32 %v4051, %v4222
  %v4224 = vpop.f32.mrf.mxu0
  %4225 = vmatprep.mubr.f32.mxu0 0.0
  %4226 = vmatmul.mubr.f32.gmra.mxu0 %v4090
  %v4227 = vpop.f32.mrf.mxu0
  %v4228 = vadd.f32 %v4051, %v4227
  %v4229 = vpop.f32.mrf.mxu0
  %4230 = vmatprep.mubr.f32.mxu0 0.0
  %4231 = vmatmul.mubr.f32.gmra.mxu0 %v4093
  %v4232 = vpop.f32.mrf.mxu0
  %v4233 = vadd.f32 %v4051, %v4232
  %v4234 = vpop.f32.mrf.mxu0
  %4235 = vmatprep.mubr.f32.mxu0 0.0
  %4236 = vmatmul.mubr.f32.gmra.mxu0 %v4096
  %v4237 = vpop.f32.mrf.mxu0
  %v4238 = vadd.f32 %v4051, %v4237
  %v4239 = vpop.f32.mrf.mxu0
  %4240 = vmatprep.mubr.f32.mxu0 0.0
  %4241 = vmatmul.mubr.f32.gmra.mxu0 %v4099
  %v4242 = vpop.f32.mrf.mxu0
  %v4243 = vadd.f32 %v4051, %v4242
  %v4244 = vpop.f32.mrf.mxu0
  %4245 = vdwg.mxu0
  %4246 = vst [vmem:[%s20] sm:$0xff] %v4168
  %4247 = vst [vmem:[%s20 + $0x8] sm:$0xff] %v4173
  %4248 = vst [vmem:[%s20 + $0x10] sm:$0xff] %v4178
  %4249 = vst [vmem:[%s20 + $0x18] sm:$0xff] %v4183
  %4250 = vst [vmem:[%s20 + $0x20] sm:$0xff] %v4188
  %4251 = vst [vmem:[%s20 + $0x28] sm:$0xff] %v4193
  %4252 = vst [vmem:[%s20 + $0x30] sm:$0xff] %v4198
  %4253 = vst [vmem:[%s20 + $0x38] sm:$0xff] %v4203
  %4254 = vst [vmem:[%s20 + $0x40] sm:$0xff] %v4208
  %4255 = vst [vmem:[%s20 + $0x48] sm:$0xff] %v4213
  %4256 = vst [vmem:[%s20 + $0x50] sm:$0xff] %v4218
  %4257 = vst [vmem:[%s20 + $0x58] sm:$0xff] %v4223
  %4258 = vst [vmem:[%s20 + $0x60] sm:$0xff] %v4228
  %4259 = vst [vmem:[%s20 + $0x68] sm:$0xff] %v4233
  %4260 = vst [vmem:[%s20 + $0x70] sm:$0xff] %v4238
  %4261 = vst [vmem:[%s20 + $0x78] sm:$0xff] %v4243
  %4262 = vst.msk [vmem:[%s21] sm:$0xff] %vm316, %v3352
  %4263 = vst.msk [vmem:[%s21 + $0x8] sm:$0xff] %vm316, %v3354
  %4264 = vst.msk [vmem:[%s21 + $0x10] sm:$0xff] %vm316, %v3356
  %4265 = vst.msk [vmem:[%s21 + $0x18] sm:$0xff] %vm316, %v3358
  %4266 = vst.msk [vmem:[%s21 + $0x20] sm:$0xff] %vm316, %v3360
  %4267 = vst.msk [vmem:[%s21 + $0x28] sm:$0xff] %vm316, %v3362
  %4268 = vst.msk [vmem:[%s21 + $0x30] sm:$0xff] %vm316, %v3364
  %4269 = vst.msk [vmem:[%s21 + $0x38] sm:$0xff] %vm316, %v3366
  %4270 = vst.msk [vmem:[%s21 + $0x40] sm:$0xff] %vm316, %v3368
  %4271 = vst.msk [vmem:[%s21 + $0x48] sm:$0xff] %vm316, %v3370
  %4272 = vst.msk [vmem:[%s21 + $0x50] sm:$0xff] %vm316, %v3372
  %4273 = vst.msk [vmem:[%s21 + $0x58] sm:$0xff] %vm316, %v3374
  %4274 = vst.msk [vmem:[%s21 + $0x60] sm:$0xff] %vm316, %v3376
  %4275 = vst.msk [vmem:[%s21 + $0x68] sm:$0xff] %vm316, %v3378
  %4276 = vst.msk [vmem:[%s21 + $0x70] sm:$0xff] %vm316, %v3380
  %4277 = vst.msk [vmem:[%s21 + $0x78] sm:$0xff] %vm316, %v3382
  %4294 = vrot.lane.b32.xlu0 %v3223, 112
  %v4295 = vpop.permute.xlu0 %4294
  %4296 = vrot.lane.b32.xlu0 %v3224, 112
  %v4297 = vpop.permute.xlu0 %4296
  %4298 = vrot.lane.b32.xlu0 %v3225, 112
  %v4299 = vpop.permute.xlu0 %4298
  %4300 = vrot.lane.b32.xlu0 %v3226, 112
  %v4301 = vpop.permute.xlu0 %4300
  %4302 = vrot.lane.b32.xlu0 %v3227, 112
  %v4303 = vpop.permute.xlu0 %4302
  %4304 = vrot.lane.b32.xlu0 %v3228, 112
  %v4305 = vpop.permute.xlu0 %4304
  %4306 = vrot.lane.b32.xlu0 %v3229, 112
  %v4307 = vpop.permute.xlu0 %4306
  %4308 = vrot.lane.b32.xlu0 %v3230, 112
  %v4309 = vpop.permute.xlu0 %4308
  %4310 = vrot.lane.b32.xlu0 %v3231, 112
  %v4311 = vpop.permute.xlu0 %4310
  %4312 = vrot.lane.b32.xlu0 %v3232, 112
  %v4313 = vpop.permute.xlu0 %4312
  %4314 = vrot.lane.b32.xlu0 %v3233, 112
  %v4315 = vpop.permute.xlu0 %4314
  %4316 = vrot.lane.b32.xlu0 %v3234, 112
  %v4317 = vpop.permute.xlu0 %4316
  %4318 = vrot.lane.b32.xlu0 %v3235, 112
  %v4319 = vpop.permute.xlu0 %4318
  %4320 = vrot.lane.b32.xlu0 %v3236, 112
  %v4321 = vpop.permute.xlu0 %4320
  %4322 = vrot.lane.b32.xlu0 %v3237, 112
  %v4323 = vpop.permute.xlu0 %4322
  %4324 = vrot.lane.b32.xlu0 %v3238, 112
  %v4325 = vpop.permute.xlu0 %4324
  %4342 = vst.msk [vmem:[%s22] sm:$0xff] %vm316, %v4295
  %4343 = vst.msk [vmem:[%s22 + $0x8] sm:$0xff] %vm316, %v4297
  %4344 = vst.msk [vmem:[%s22 + $0x10] sm:$0xff] %vm316, %v4299
  %4345 = vst.msk [vmem:[%s22 + $0x18] sm:$0xff] %vm316, %v4301
  %4346 = vst.msk [vmem:[%s22 + $0x20] sm:$0xff] %vm316, %v4303
  %4347 = vst.msk [vmem:[%s22 + $0x28] sm:$0xff] %vm316, %v4305
  %4348 = vst.msk [vmem:[%s22 + $0x30] sm:$0xff] %vm316, %v4307
  %4349 = vst.msk [vmem:[%s22 + $0x38] sm:$0xff] %vm316, %v4309
  %4350 = vst.msk [vmem:[%s22 + $0x40] sm:$0xff] %vm316, %v4311
  %4351 = vst.msk [vmem:[%s22 + $0x48] sm:$0xff] %vm316, %v4313
  %4352 = vst.msk [vmem:[%s22 + $0x50] sm:$0xff] %vm316, %v4315
  %4353 = vst.msk [vmem:[%s22 + $0x58] sm:$0xff] %vm316, %v4317
  %4354 = vst.msk [vmem:[%s22 + $0x60] sm:$0xff] %vm316, %v4319
  %4355 = vst.msk [vmem:[%s22 + $0x68] sm:$0xff] %vm316, %v4321
  %4356 = vst.msk [vmem:[%s22 + $0x70] sm:$0xff] %vm316, %v4323
  %4357 = vst.msk [vmem:[%s22 + $0x78] sm:$0xff] %vm316, %v4325
  // Predicated region
  $region82: #{mobile_vod_forward.1} parent=0 // pred_check
    _
  $region83: #{mobile_vod_forward.1} parent=0 // pred_check_branch
    %4359 = sbr.rel (0) target = $region85
  $region84: #{mobile_vod_forward.1} parent=0 // pred_region
    _
  $region85: #{mobile_vod_forward.1} parent=0 // pred_fallthru
    _
  // Predicated region
  $region86: #{mobile_vod_forward.1} parent=0 // pred_check
    _
  $region87: #{mobile_vod_forward.1} parent=0 // pred_check_branch
    %4361 = sbr.rel (0) target = $region89
  $region88: #{mobile_vod_forward.1} parent=0 // pred_region
    _
  $region89: #{mobile_vod_forward.1} parent=0 // pred_fallthru
    _
  // Predicated region
  $region90: #{mobile_vod_forward.1} parent=0 // pred_check
    _
  $region91: #{mobile_vod_forward.1} parent=0 // pred_check_branch
    %4363 = sbr.rel (0) target = $region93
  $region92: #{mobile_vod_forward.1} parent=0 // pred_region
    _
  $region93: #{mobile_vod_forward.1} parent=0 // pred_fallthru
    _
  // Predicated region
  $region94: #{mobile_vod_forward.1} parent=0 // pred_check
    _
  $region95: #{mobile_vod_forward.1} parent=0 // pred_check_branch
    %4365 = sbr.rel (0) target = $region97
  $region96: #{mobile_vod_forward.1} parent=0 // pred_region
    _
  $region97: #{mobile_vod_forward.1} parent=0 // pred_fallthru
    _
  // Predicated region
  $region98: #{mobile_vod_forward.1} parent=0 // pred_check
    _
  $region99: #{mobile_vod_forward.1} parent=0 // pred_check_branch
    %4367 = sbr.rel (0) target = $region101
  $region100: #{mobile_vod_forward.1} parent=0 // pred_region
    _
  $region101: #{mobile_vod_forward.1} parent=0 // pred_fallthru
    _
  // Predicated region
  $region102: #{mobile_vod_forward.1} parent=0 // pred_check
    _
  $region103: #{mobile_vod_forward.1} parent=0 // pred_check_branch
    %4369 = sbr.rel (0) target = $region105
  $region104: #{mobile_vod_forward.1} parent=0 // pred_region
    _
  $region105: #{mobile_vod_forward.1} parent=0 // pred_fallthru
    _

</llo_original>
